<compile_context>
chip_gen: v5e
topology: v5e:2x2
jax: 0.10.0
libtpu: 0.0.40
codegen_flags: <defaults>
</compile_context>

<pallas_src>
import jax
import jax.numpy as jnp
from jax.experimental import pallas as pl
from jax.experimental.pallas import tpu as pltpu

_EPS = 1e-5


def bottleneck_kernel(x_ref, w1_ref, b1_ref, w2_ref, b2_ref, w3_ref, b3_ref,
                      o_ref, pad_ref):
    # x_ref: (B, H, W, Cin) bf16 — B images per grid step.
    B, H, W, c_in = x_ref.shape
    P = w1_ref.shape[1]
    c_out = w3_ref.shape[1]
    M = B * H * W

    xv = x_ref[...]                              # (B, H, W, Cin) bf16
    x2 = xv.reshape(M, c_in)                     # (M, Cin) bf16, lane-dense

    # --- conv1 (1x1) + folded BN1 + ReLU -----------------------------------
    y = jnp.dot(x2, w1_ref[...], preferred_element_type=jnp.float32)
    y = jnp.maximum(y + b1_ref[...], 0.0)        # (M, P) f32
    y16 = y.astype(jnp.bfloat16)                 # cast once before scratch

    # --- conv2 (3x3, stride 1, pad 1) as ONE im2col matmul (K = 9*P) -------
    # bf16 zero-halo-ring scratch; ring re-zeroed + interior fully rewritten
    # every step, so the persistent scratch is safe under a "parallel" grid.
    pad_ref[:, 0:1, :, :] = jnp.zeros((B, 1, W + 2, P), jnp.bfloat16)
    pad_ref[:, H + 1:H + 2, :, :] = jnp.zeros((B, 1, W + 2, P), jnp.bfloat16)
    pad_ref[:, :, 0:1, :] = jnp.zeros((B, H + 2, 1, P), jnp.bfloat16)
    pad_ref[:, :, W + 1:W + 2, :] = jnp.zeros((B, H + 2, 1, P), jnp.bfloat16)
    pad_ref[:, 1:H + 1, 1:W + 1, :] = y16.reshape(B, H, W, P)

    # 9 shifted reads straight off the halo ring; (kh, kw, Pin) ordering
    # matches the w2 fold layout below.
    taps = [pad_ref[:, kh:kh + H, kw:kw + W, :]
            for kh in range(3) for kw in range(3)]      # 9 x (B,H,W,P) bf16
    tap = jnp.concatenate(taps, axis=-1).reshape(M, 9 * P)

    z = jnp.dot(tap, w2_ref[...], preferred_element_type=jnp.float32)
    z = jnp.maximum(z + b2_ref[...], 0.0)        # (M, P) f32
    z16 = z.astype(jnp.bfloat16)

    # --- conv3 (1x1, expansion=4) + folded BN3 + residual + ReLU -----------
    out = jnp.dot(z16, w3_ref[...], preferred_element_type=jnp.float32)
    out = out + b3_ref[...] + x2.astype(jnp.float32)
    out = jnp.maximum(out, 0.0).astype(jnp.bfloat16)     # single cast, bf16 store
    o_ref[...] = out.reshape(B, H, W, c_out)             # 128-lane unmasked vst


def bottleneck_forward(x_nchw, kp, b_blk=2):
    """kp: folded/pre-transposed kernel params (bf16 weights, f32 biases)."""
    # Cast first so the NCHW -> NHWC transpose moves bf16 (half the HBM bytes).
    x = jnp.transpose(x_nchw.astype(jnp.bfloat16), (0, 2, 3, 1))
    N, H, W, c_in = x.shape
    P = kp["w1"].shape[1]
    c_out = kp["w3"].shape[1]
    assert N % b_blk == 0, (N, b_blk)

    out_nhwc = pl.pallas_call(
        bottleneck_kernel,
        out_shape=jax.ShapeDtypeStruct((N, H, W, c_out), jnp.bfloat16),
        grid_spec=pltpu.PrefetchScalarGridSpec(
            num_scalar_prefetch=0,
            grid=(N // b_blk,),
            in_specs=[
                pl.BlockSpec((b_blk, H, W, c_in), lambda n: (n, 0, 0, 0)),
                pl.BlockSpec((c_in, P), lambda n: (0, 0)),
                pl.BlockSpec((1, P), lambda n: (0, 0)),
                pl.BlockSpec((9 * P, P), lambda n: (0, 0)),
                pl.BlockSpec((1, P), lambda n: (0, 0)),
                pl.BlockSpec((P, c_out), lambda n: (0, 0)),
                pl.BlockSpec((1, c_out), lambda n: (0, 0)),
            ],
            out_specs=pl.BlockSpec((b_blk, H, W, c_out),
                                   lambda n: (n, 0, 0, 0)),
            scratch_shapes=[
                pltpu.VMEM((b_blk, H + 2, W + 2, P), jnp.bfloat16)],
        ),
        compiler_params=pltpu.CompilerParams(
            dimension_semantics=("parallel",)),   # megacore on v7x
    )(x, kp["w1"], kp["b1"], kp["w2"], kp["b2"], kp["w3"], kp["b3"])

    # NHWC -> NCHW still in bf16; downstream consumers keep bf16.
    return jnp.transpose(out_nhwc, (0, 3, 1, 2))


def init_params(key, inplanes, planes, expansion=4):
    """Deterministic synthetic parameters: PyTorch layout + folded kernel layout."""
    ks = jax.random.split(key, 15)

    # PyTorch-format conv weights (OIHW), bias=False
    w1 = jax.random.normal(ks[0], (planes, inplanes, 1, 1), jnp.float32) * 0.05
    w2 = jax.random.normal(ks[1], (planes, planes, 3, 3), jnp.float32) * 0.05
    w3 = jax.random.normal(ks[2], (planes * expansion, planes, 1, 1),
                           jnp.float32) * 0.05

    def bn_params(kg, kb, km, kv, c):
        gamma = jax.random.uniform(kg, (c,), jnp.float32, 0.8, 1.2)
        beta = jax.random.uniform(kb, (c,), jnp.float32, -0.2, 0.2)
        mean = jax.random.uniform(km, (c,), jnp.float32, -0.2, 0.2)
        var = jax.random.uniform(kv, (c,), jnp.float32, 0.9, 1.1)
        return gamma, beta, mean, var

    bn1 = bn_params(*ks[3:7], planes)
    bn2 = bn_params(*ks[7:11], planes)
    bn3 = bn_params(*ks[11:15], planes * expansion)

    raw = {"w1": w1, "w2": w2, "w3": w3, "bn1": bn1, "bn2": bn2, "bn3": bn3}

    def fold(bn):
        gamma, beta, mean, var = bn
        scale = gamma / jnp.sqrt(var + _EPS)
        return scale, beta - mean * scale

    s1, c1 = fold(bn1)
    s2, c2 = fold(bn2)
    s3, c3 = fold(bn3)

    # Fold BN scales into conv weight output-columns; only bias-add stays in
    # the kernel.  Weights bf16 (MXU), biases f32.
    w1_mat = w1.reshape(planes, inplanes).T * s1[None, :]                # (Cin, P)
    w2_mat = (jnp.transpose(w2, (2, 3, 1, 0))                            # (3,3,Pin,Pout)
              .reshape(9 * planes, planes) * s2[None, :])                # (9P, P)
    w3_mat = w3.reshape(planes * expansion, planes).T * s3[None, :]      # (P, 4P)

    kernel_params = {
        "w1": w1_mat.astype(jnp.bfloat16),
        "w2": w2_mat.astype(jnp.bfloat16),
        "w3": w3_mat.astype(jnp.bfloat16),
        "b1": c1.reshape(1, planes).astype(jnp.float32),
        "b2": c2.reshape(1, planes).astype(jnp.float32),
        "b3": c3.reshape(1, planes * expansion).astype(jnp.float32),
    }
    return kernel_params, raw


def reference_forward(x_nchw, raw):
    """Pure-JAX f32 reference matching the PyTorch forward (eval-mode BN)."""
    def conv(x, w, pad):
        return jax.lax.conv_general_dilated(
            x, w, (1, 1), pad, dimension_numbers=("NCHW", "OIHW", "NCHW"))

    def bn(x, params):
        g, b, m, v = params
        g = g[None, :, None, None]
        b = b[None, :, None, None]
        m = m[None, :, None, None]
        v = v[None, :, None, None]
        return (x - m) / jnp.sqrt(v + _EPS) * g + b

    out = jax.nn.relu(bn(conv(x_nchw, raw["w1"], "VALID"), raw["bn1"]))
    out = jax.nn.relu(bn(conv(out, raw["w2"], [(1, 1), (1, 1)]), raw["bn2"]))
    out = bn(conv(out, raw["w3"], "VALID"), raw["bn3"])
    return jax.nn.relu(out + x_nchw)


if __name__ == "__main__":
    key = jax.random.PRNGKey(0)
    kx, kparam = jax.random.split(key)

    # Lane-dense channels (planes=32 -> in/out = 128); N=8 with 2 images per
    # grid step -> 4 grid steps (>= 2 per TensorCore on v7x megacore).
    N, planes, H, W = 8, 32, 16, 16
    inplanes = planes * 4     # residual requires inplanes == planes * expansion

    x = jax.random.normal(kx, (N, inplanes, H, W), jnp.float32)
    kernel_params, raw = init_params(kparam, inplanes, planes)

    out = jax.jit(bottleneck_forward)(x, kernel_params)
    out = jax.block_until_ready(out)

    ref = reference_forward(x, raw)
    assert out.shape == (N, planes * 4, H, W), out.shape
    assert out.dtype == jnp.bfloat16, out.dtype
    # bf16 matmul inputs + bf16 output vs f32 reference -> moderate tolerance.
    out_f32 = out.astype(jnp.float32)
    if not jnp.allclose(out_f32, ref, atol=1e-1, rtol=5e-2):
        max_err = jnp.max(jnp.abs(out_f32 - ref))
        raise AssertionError(
            f"Pallas kernel output does not match reference (max err {max_err})")

    print("KERNEL_OK")
</pallas_src>

<mosaic_0001>
module attributes {stable_mosaic.version = 11 : i64} {
  func.func @bottleneck_kernel(%arg0: i32, %arg1: memref<2x16x16x128xbf16, #tpu.memory_space<vmem>>, %arg2: memref<128x32xbf16, #tpu.memory_space<vmem>>, %arg3: memref<1x32xf32, #tpu.memory_space<vmem>>, %arg4: memref<288x32xbf16, #tpu.memory_space<vmem>>, %arg5: memref<1x32xf32, #tpu.memory_space<vmem>>, %arg6: memref<32x128xbf16, #tpu.memory_space<vmem>>, %arg7: memref<1x128xf32, #tpu.memory_space<vmem>>, %arg8: memref<2x16x16x128xbf16, #tpu.memory_space<vmem>>, %arg9: memref<2x18x18x32xbf16, #tpu.memory_space<vmem>>) attributes {dimension_semantics = [#tpu.dimension_semantics<parallel>], iteration_bounds = array<i64: 4>, scalar_prefetch = 0 : i64, scratch_operands = 1 : i64, tpu.core_type = #tpu.core_type<tc>, window_params = [{transform_indices = @transform_0, window_bounds = array<i64: 2, 16, 16, 128>}, {pipeline_mode = #tpu.pipeline_mode<synchronous>, transform_indices = @transform_1, window_bounds = array<i64: 128, 32>}, {pipeline_mode = #tpu.pipeline_mode<synchronous>, transform_indices = @transform_2, window_bounds = array<i64: 1, 32>}, {pipeline_mode = #tpu.pipeline_mode<synchronous>, transform_indices = @transform_3, window_bounds = array<i64: 288, 32>}, {pipeline_mode = #tpu.pipeline_mode<synchronous>, transform_indices = @transform_4, window_bounds = array<i64: 1, 32>}, {pipeline_mode = #tpu.pipeline_mode<synchronous>, transform_indices = @transform_5, window_bounds = array<i64: 32, 128>}, {pipeline_mode = #tpu.pipeline_mode<synchronous>, transform_indices = @transform_6, window_bounds = array<i64: 1, 128>}, {transform_indices = @transform_7, window_bounds = array<i64: 2, 16, 16, 128>}]} {
    %c0 = arith.constant 0 : index
    %c0_0 = arith.constant 0 : index
    %c0_1 = arith.constant 0 : index
    %c0_2 = arith.constant 0 : index
    %0 = vector.load %arg1[%c0, %c0_0, %c0_1, %c0_2] : memref<2x16x16x128xbf16, #tpu.memory_space<vmem>>, vector<2x16x16x128xbf16>
    %1 = vector.shape_cast %0 : vector<2x16x16x128xbf16> to vector<512x128xbf16>
    %c0_3 = arith.constant 0 : index
    %c0_4 = arith.constant 0 : index
    %2 = vector.load %arg2[%c0_3, %c0_4] : memref<128x32xbf16, #tpu.memory_space<vmem>>, vector<128x32xbf16>
    %cst = arith.constant dense<0.000000e+00> : vector<512x32xf32>
    %3 = tpu.matmul %1, %2, %cst {dimension_numbers = #tpu.dot_dimension_numbers<[1], [0], [0], [1], [0, 0, 1, 1], [], []>} : vector<512x128xbf16>, vector<128x32xbf16>, vector<512x32xf32> -> vector<512x32xf32>
    %c0_5 = arith.constant 0 : index
    %c0_6 = arith.constant 0 : index
    %4 = vector.load %arg3[%c0_5, %c0_6] : memref<1x32xf32, #tpu.memory_space<vmem>>, vector<1x32xf32>
    %5 = vector.broadcast %4 : vector<1x32xf32> to vector<512x32xf32>
    %6 = arith.addf %3, %5 : vector<512x32xf32>
    %cst_7 = arith.constant 0.000000e+00 : f32
    %7 = vector.broadcast %cst_7 : f32 to vector<512x32xf32>
    %8 = arith.maximumf %6, %7 : vector<512x32xf32>
    %9 = arith.truncf %8 : vector<512x32xf32> to vector<512x32xbf16>
    %cst_8 = arith.constant 0.000000e+00 : bf16
    %10 = vector.broadcast %cst_8 : bf16 to vector<2x1x18x32xbf16>
    %c0_9 = arith.constant 0 : index
    %c0_10 = arith.constant 0 : index
    %c0_11 = arith.constant 0 : index
    %c0_12 = arith.constant 0 : index
    %11 = vector.load %arg9[%c0_9, %c0_10, %c0_11, %c0_12] : memref<2x18x18x32xbf16, #tpu.memory_space<vmem>>, vector<2x1x18x32xbf16>
    tpu.vector_store %arg9[%c0_9, %c0_10, %c0_11, %c0_12], %10 {strides = array<i32>} : memref<2x18x18x32xbf16, #tpu.memory_space<vmem>>, vector<2x1x18x32xbf16>,
    %cst_13 = arith.constant 0.000000e+00 : bf16
    %12 = vector.broadcast %cst_13 : bf16 to vector<2x1x18x32xbf16>
    %c0_14 = arith.constant 0 : index
    %c17 = arith.constant 17 : index
    %c0_15 = arith.constant 0 : index
    %c0_16 = arith.constant 0 : index
    %13 = vector.load %arg9[%c0_14, %c17, %c0_15, %c0_16] : memref<2x18x18x32xbf16, #tpu.memory_space<vmem>>, vector<2x1x18x32xbf16>
    tpu.vector_store %arg9[%c0_14, %c17, %c0_15, %c0_16], %12 {strides = array<i32>} : memref<2x18x18x32xbf16, #tpu.memory_space<vmem>>, vector<2x1x18x32xbf16>,
    %cst_17 = arith.constant 0.000000e+00 : bf16
    %14 = vector.broadcast %cst_17 : bf16 to vector<2x18x1x32xbf16>
    %c0_18 = arith.constant 0 : index
    %c0_19 = arith.constant 0 : index
    %c0_20 = arith.constant 0 : index
    %c0_21 = arith.constant 0 : index
    %15 = vector.load %arg9[%c0_18, %c0_19, %c0_20, %c0_21] : memref<2x18x18x32xbf16, #tpu.memory_space<vmem>>, vector<2x18x1x32xbf16>
    tpu.vector_store %arg9[%c0_18, %c0_19, %c0_20, %c0_21], %14 {strides = array<i32>} : memref<2x18x18x32xbf16, #tpu.memory_space<vmem>>, vector<2x18x1x32xbf16>,
    %cst_22 = arith.constant 0.000000e+00 : bf16
    %16 = vector.broadcast %cst_22 : bf16 to vector<2x18x1x32xbf16>
    %c0_23 = arith.constant 0 : index
    %c0_24 = arith.constant 0 : index
    %c17_25 = arith.constant 17 : index
    %c0_26 = arith.constant 0 : index
    %17 = vector.load %arg9[%c0_23, %c0_24, %c17_25, %c0_26] : memref<2x18x18x32xbf16, #tpu.memory_space<vmem>>, vector<2x18x1x32xbf16>
    tpu.vector_store %arg9[%c0_23, %c0_24, %c17_25, %c0_26], %16 {strides = array<i32>} : memref<2x18x18x32xbf16, #tpu.memory_space<vmem>>, vector<2x18x1x32xbf16>,
    %18 = vector.shape_cast %9 : vector<512x32xbf16> to vector<2x16x16x32xbf16>
    %c0_27 = arith.constant 0 : index
    %c1 = arith.constant 1 : index
    %c1_28 = arith.constant 1 : index
    %c0_29 = arith.constant 0 : index
    %19 = vector.load %arg9[%c0_27, %c1, %c1_28, %c0_29] : memref<2x18x18x32xbf16, #tpu.memory_space<vmem>>, vector<2x16x16x32xbf16>
    tpu.vector_store %arg9[%c0_27, %c1, %c1_28, %c0_29], %18 {strides = array<i32>} : memref<2x18x18x32xbf16, #tpu.memory_space<vmem>>, vector<2x16x16x32xbf16>,
    %c0_30 = arith.constant 0 : index
    %c0_31 = arith.constant 0 : index
    %c0_32 = arith.constant 0 : index
    %c0_33 = arith.constant 0 : index
    %20 = vector.load %arg9[%c0_30, %c0_31, %c0_32, %c0_33] : memref<2x18x18x32xbf16, #tpu.memory_space<vmem>>, vector<2x16x16x32xbf16>
    %c0_34 = arith.constant 0 : index
    %c0_35 = arith.constant 0 : index
    %c1_36 = arith.constant 1 : index
    %c0_37 = arith.constant 0 : index
    %21 = vector.load %arg9[%c0_34, %c0_35, %c1_36, %c0_37] : memref<2x18x18x32xbf16, #tpu.memory_space<vmem>>, vector<2x16x16x32xbf16>
    %c0_38 = arith.constant 0 : index
    %c0_39 = arith.constant 0 : index
    %c2 = arith.constant 2 : index
    %c0_40 = arith.constant 0 : index
    %22 = vector.load %arg9[%c0_38, %c0_39, %c2, %c0_40] : memref<2x18x18x32xbf16, #tpu.memory_space<vmem>>, vector<2x16x16x32xbf16>
    %c0_41 = arith.constant 0 : index
    %c1_42 = arith.constant 1 : index
    %c0_43 = arith.constant 0 : index
    %c0_44 = arith.constant 0 : index
    %23 = vector.load %arg9[%c0_41, %c1_42, %c0_43, %c0_44] : memref<2x18x18x32xbf16, #tpu.memory_space<vmem>>, vector<2x16x16x32xbf16>
    %c0_45 = arith.constant 0 : index
    %c1_46 = arith.constant 1 : index
    %c1_47 = arith.constant 1 : index
    %c0_48 = arith.constant 0 : index
    %24 = vector.load %arg9[%c0_45, %c1_46, %c1_47, %c0_48] : memref<2x18x18x32xbf16, #tpu.memory_space<vmem>>, vector<2x16x16x32xbf16>
    %c0_49 = arith.constant 0 : index
    %c1_50 = arith.constant 1 : index
    %c2_51 = arith.constant 2 : index
    %c0_52 = arith.constant 0 : index
    %25 = vector.load %arg9[%c0_49, %c1_50, %c2_51, %c0_52] : memref<2x18x18x32xbf16, #tpu.memory_space<vmem>>, vector<2x16x16x32xbf16>
    %c0_53 = arith.constant 0 : index
    %c2_54 = arith.constant 2 : index
    %c0_55 = arith.constant 0 : index
    %c0_56 = arith.constant 0 : index
    %26 = vector.load %arg9[%c0_53, %c2_54, %c0_55, %c0_56] : memref<2x18x18x32xbf16, #tpu.memory_space<vmem>>, vector<2x16x16x32xbf16>
    %c0_57 = arith.constant 0 : index
    %c2_58 = arith.constant 2 : index
    %c1_59 = arith.constant 1 : index
    %c0_60 = arith.constant 0 : index
    %27 = vector.load %arg9[%c0_57, %c2_58, %c1_59, %c0_60] : memref<2x18x18x32xbf16, #tpu.memory_space<vmem>>, vector<2x16x16x32xbf16>
    %c0_61 = arith.constant 0 : index
    %c2_62 = arith.constant 2 : index
    %c2_63 = arith.constant 2 : index
    %c0_64 = arith.constant 0 : index
    %28 = vector.load %arg9[%c0_61, %c2_62, %c2_63, %c0_64] : memref<2x18x18x32xbf16, #tpu.memory_space<vmem>>, vector<2x16x16x32xbf16>
    %29 = tpu.concatenate %20, %21, %22, %23, %24, %25, %26, %27, %28 in 3 : vector<2x16x16x32xbf16>, vector<2x16x16x32xbf16>, vector<2x16x16x32xbf16>, vector<2x16x16x32xbf16>, vector<2x16x16x32xbf16>, vector<2x16x16x32xbf16>, vector<2x16x16x32xbf16>, vector<2x16x16x32xbf16>, vector<2x16x16x32xbf16> -> vector<2x16x16x288xbf16>
    %30 = vector.shape_cast %29 : vector<2x16x16x288xbf16> to vector<512x288xbf16>
    %c0_65 = arith.constant 0 : index
    %c0_66 = arith.constant 0 : index
    %31 = vector.load %arg4[%c0_65, %c0_66] : memref<288x32xbf16, #tpu.memory_space<vmem>>, vector<288x32xbf16>
    %cst_67 = arith.constant dense<0.000000e+00> : vector<512x32xf32>
    %32 = tpu.matmul %30, %31, %cst_67 {dimension_numbers = #tpu.dot_dimension_numbers<[1], [0], [0], [1], [0, 0, 1, 1], [], []>} : vector<512x288xbf16>, vector<288x32xbf16>, vector<512x32xf32> -> vector<512x32xf32>
    %c0_68 = arith.constant 0 : index
    %c0_69 = arith.constant 0 : index
    %33 = vector.load %arg5[%c0_68, %c0_69] : memref<1x32xf32, #tpu.memory_space<vmem>>, vector<1x32xf32>
    %34 = vector.broadcast %33 : vector<1x32xf32> to vector<512x32xf32>
    %35 = arith.addf %32, %34 : vector<512x32xf32>
    %cst_70 = arith.constant 0.000000e+00 : f32
    %36 = vector.broadcast %cst_70 : f32 to vector<512x32xf32>
    %37 = arith.maximumf %35, %36 : vector<512x32xf32>
    %38 = arith.truncf %37 : vector<512x32xf32> to vector<512x32xbf16>
    %c0_71 = arith.constant 0 : index
    %c0_72 = arith.constant 0 : index
    %39 = vector.load %arg6[%c0_71, %c0_72] : memref<32x128xbf16, #tpu.memory_space<vmem>>, vector<32x128xbf16>
    %cst_73 = arith.constant dense<0.000000e+00> : vector<512x128xf32>
    %40 = tpu.matmul %38, %39, %cst_73 {dimension_numbers = #tpu.dot_dimension_numbers<[1], [0], [0], [1], [0, 0, 1, 1], [], []>} : vector<512x32xbf16>, vector<32x128xbf16>, vector<512x128xf32> -> vector<512x128xf32>
    %c0_74 = arith.constant 0 : index
    %c0_75 = arith.constant 0 : index
    %41 = vector.load %arg7[%c0_74, %c0_75] : memref<1x128xf32, #tpu.memory_space<vmem>>, vector<1x128xf32>
    %42 = vector.broadcast %41 : vector<1x128xf32> to vector<512x128xf32>
    %43 = arith.addf %40, %42 : vector<512x128xf32>
    %44 = arith.extf %1 : vector<512x128xbf16> to vector<512x128xf32>
    %45 = arith.addf %43, %44 : vector<512x128xf32>
    %cst_76 = arith.constant 0.000000e+00 : f32
    %46 = vector.broadcast %cst_76 : f32 to vector<512x128xf32>
    %47 = arith.maximumf %45, %46 : vector<512x128xf32>
    %48 = arith.truncf %47 : vector<512x128xf32> to vector<512x128xbf16>
    %49 = vector.shape_cast %48 : vector<512x128xbf16> to vector<2x16x16x128xbf16>
    %c0_77 = arith.constant 0 : index
    %c0_78 = arith.constant 0 : index
    %c0_79 = arith.constant 0 : index
    %c0_80 = arith.constant 0 : index
    %50 = vector.load %arg8[%c0_77, %c0_78, %c0_79, %c0_80] : memref<2x16x16x128xbf16, #tpu.memory_space<vmem>>, vector<2x16x16x128xbf16>
    tpu.vector_store %arg8[%c0_77, %c0_78, %c0_79, %c0_80], %49 {strides = array<i32>} : memref<2x16x16x128xbf16, #tpu.memory_space<vmem>>, vector<2x16x16x128xbf16>,
    return
  }
  func.func @transform_0(%arg0: i32) -> (i32, i32, i32, i32) {
    %c0_i32 = arith.constant 0 : i32
    %c0_i32_0 = arith.constant 0 : i32
    %c0_i32_1 = arith.constant 0 : i32
    %c0_i32_2 = arith.constant 0 : i32
    return %arg0, %c0_i32, %c0_i32_0, %c0_i32_1 : i32, i32, i32, i32
  }
  func.func @transform_1(%arg0: i32) -> (i32, i32) {
    %c0_i32 = arith.constant 0 : i32
    %c0_i32_0 = arith.constant 0 : i32
    %c0_i32_1 = arith.constant 0 : i32
    return %c0_i32, %c0_i32_0 : i32, i32
  }
  func.func @transform_2(%arg0: i32) -> (i32, i32) {
    %c0_i32 = arith.constant 0 : i32
    %c0_i32_0 = arith.constant 0 : i32
    %c0_i32_1 = arith.constant 0 : i32
    return %c0_i32, %c0_i32_0 : i32, i32
  }
  func.func @transform_3(%arg0: i32) -> (i32, i32) {
    %c0_i32 = arith.constant 0 : i32
    %c0_i32_0 = arith.constant 0 : i32
    %c0_i32_1 = arith.constant 0 : i32
    return %c0_i32, %c0_i32_0 : i32, i32
  }
  func.func @transform_4(%arg0: i32) -> (i32, i32) {
    %c0_i32 = arith.constant 0 : i32
    %c0_i32_0 = arith.constant 0 : i32
    %c0_i32_1 = arith.constant 0 : i32
    return %c0_i32, %c0_i32_0 : i32, i32
  }
  func.func @transform_5(%arg0: i32) -> (i32, i32) {
    %c0_i32 = arith.constant 0 : i32
    %c0_i32_0 = arith.constant 0 : i32
    %c0_i32_1 = arith.constant 0 : i32
    return %c0_i32, %c0_i32_0 : i32, i32
  }
  func.func @transform_6(%arg0: i32) -> (i32, i32) {
    %c0_i32 = arith.constant 0 : i32
    %c0_i32_0 = arith.constant 0 : i32
    %c0_i32_1 = arith.constant 0 : i32
    return %c0_i32, %c0_i32_0 : i32, i32
  }
  func.func @transform_7(%arg0: i32) -> (i32, i32, i32, i32) {
    %c0_i32 = arith.constant 0 : i32
    %c0_i32_0 = arith.constant 0 : i32
    %c0_i32_1 = arith.constant 0 : i32
    %c0_i32_2 = arith.constant 0 : i32
    return %arg0, %c0_i32, %c0_i32_0, %c0_i32_1 : i32, i32, i32, i32
  }
}

</mosaic_0001>

<llo_original>
// kernel: bottleneck_forward.1
$region0: #{bottleneck_forward.1}
  #allocation0 [shape = 'u32[]', space=smem, size = 0x4, offset = 0x4, fixed_abs, tag = 'smem constant byte address 0x4 - core index']
  #allocation1 [shape = 'u32[72,128]{1,0:T(1,128)}', space=vmem, size = 0x9000, scoped, tag = 'internal scratch']
  #allocation2 [shape = 'bf16[2,18,18,32]{3,2,1,0:T(8,128)(2,1)}', space=vmem, size = 0x36000, scoped, tag = 'scratch operand']
  %s0 = inlined_call_operand.vmem [shape: bf16[8,16,16,128], index: 0, kind: input, shape index: {}]
  %s1 = inlined_call_operand.vmem [shape: bf16[128,32], index: 1, kind: input, shape index: {}]
  %s2 = inlined_call_operand.vmem [shape: f32[1,32], index: 2, kind: input, shape index: {}]
  %s3 = inlined_call_operand.vmem [shape: bf16[288,32], index: 3, kind: input, shape index: {}]
  %s4 = inlined_call_operand.vmem [shape: f32[1,32], index: 4, kind: input, shape index: {}]
  %s5 = inlined_call_operand.vmem [shape: bf16[32,128], index: 5, kind: input, shape index: {}]
  %s6 = inlined_call_operand.vmem [shape: f32[1,128], index: 6, kind: input, shape index: {}]
  %s7 = inlined_call_operand.hbm [shape: bf16[8,16,16,128], index: 7, kind: output, shape index: {}]
  %s8 = sld [smem:[#allocation0]]
  $region61: #{bottleneck_forward.1} parent=0
    _
  %s10 = ssub.s32 1, %s8
  %s11 = scalar_select 0, %s10, %s8
  $region1: #{bottleneck_forward.1} parent=0
    #allocation3 [shape = 'u8[262144]{0}', space=vmem, size = 0x40000, scoped, tag = 'output window, operand 0']
    #allocation4 [shape = 's32[2]{0}', space=sflag, size = 0x8, scoped, tag = 'scoped memory for bottleneck_forward.1']
    %12 = vsyncpa [#allocation4], 0
    %s13 = scalar_lea.sflag [#allocation4], 1
    %14 = vsyncpa %s13, 0
    loop: start=0, step=1, limit=6
    $region2: #{bottleneck_forward.1} parent=1 // loop_pre_header
      _
    $region3: #{bottleneck_forward.1} parent=1 // loop_header
      %s16 = sphi 0, %s20
      %p17 = scmp.ge.s32.totalorder %s16, 6
      %s26 = sphi 0, %s28
      %s29 = sphi 0, %s26
      %s30 = sphi 0, %s29
      %s46 = sphi 0, %s30
      %s50 = sphi 0, %s50
      %s52 = sphi 0, %s50
      %s53 = sphi 0, %s52
      %s67 = sphi 0, %s53
      %s71 = sphi 0, %s71
      %s73 = sphi 0, %s71
      %s74 = sphi 0, %s73
      %s88 = sphi 0, %s74
      %s92 = sphi 0, %s92
      %s94 = sphi 0, %s92
      %s95 = sphi 0, %s94
      %s109 = sphi 0, %s95
      %s113 = sphi 0, %s113
      %s115 = sphi 0, %s113
      %s116 = sphi 0, %s115
      %s130 = sphi 0, %s116
      %s134 = sphi 0, %s134
      %s136 = sphi 0, %s134
      %s137 = sphi 0, %s136
      %s151 = sphi 0, %s137
      %s155 = sphi 0, %s155
      %s157 = sphi 0, %s155
      %s158 = sphi 0, %s157
      %s172 = sphi 0, %s158
      %s178 = sphi 0, %s180
      %s181 = sphi 0, %s178
      %s182 = sphi 0, %s181
      %s198 = sphi 0, %s182
    $region4: #{bottleneck_forward.1} parent=1 // loop_header_branch
      %19 = sbr.rel (%p17) target = $region8
    $region5: #{bottleneck_forward.1} parent=1 // loop_body
      %s21 = ssub.s32 %s16, 1
      %s22 = ssub.s32 %s16, 2
      %s23 = sadd.s32 %s16, 1
      %s24 = ssub.s32 %s16, %s23
      %p25 = scmp.eq.s32.totalorder %s24, 0
      %s27 = sadd.s32 %s26, 1
      %s28 = scalar_select %p25, %s26, %s27
      %p31 = pneg %p25
      %p32 = scmp.eq.s32.totalorder %s16, 3
      %p33 = por %p31, %p32
      %p34 = scmp.ne.s32.totalorder %s26, %s29
      %p35 = scmp.eq.s32.totalorder %s16, 0
      %p36 = por %p34, %p35
      %p37 = scmp.ne.s32.totalorder %s26, %s29
      %p38 = scmp.eq.s32.totalorder %s21, 3
      %p39 = por %p37, %p38
      %p40 = scmp.ne.s32.totalorder %s29, %s30
      %p41 = scmp.eq.s32.totalorder %s21, 0
      %p42 = por %p40, %p41
      %p43 = scmp.ne.s32.totalorder %s29, %s30
      %p44 = scmp.eq.s32.totalorder %s22, 3
      %p45 = por %p43, %p44
      %p47 = scmp.ne.s32.totalorder %s30, %s46
      %p48 = scmp.eq.s32.totalorder %s22, 0
      %p49 = por %p47, %p48
      %s51 = sadd.s32 %s50, 1
      %p54 = scmp.eq.s32.totalorder %s16, 3
      %p55 = scmp.ne.s32.totalorder %s50, %s52
      %p56 = scmp.eq.s32.totalorder %s16, 0
      %p57 = por %p55, %p56
      %p58 = scmp.ne.s32.totalorder %s50, %s52
      %p59 = scmp.eq.s32.totalorder %s21, 3
      %p60 = por %p58, %p59
      %p61 = scmp.ne.s32.totalorder %s52, %s53
      %p62 = scmp.eq.s32.totalorder %s21, 0
      %p63 = por %p61, %p62
      %p64 = scmp.ne.s32.totalorder %s52, %s53
      %p65 = scmp.eq.s32.totalorder %s22, 3
      %p66 = por %p64, %p65
      %p68 = scmp.ne.s32.totalorder %s53, %s67
      %p69 = scmp.eq.s32.totalorder %s22, 0
      %p70 = por %p68, %p69
      %s72 = sadd.s32 %s71, 1
      %p75 = scmp.eq.s32.totalorder %s16, 3
      %p76 = scmp.ne.s32.totalorder %s71, %s73
      %p77 = scmp.eq.s32.totalorder %s16, 0
      %p78 = por %p76, %p77
      %p79 = scmp.ne.s32.totalorder %s71, %s73
      %p80 = scmp.eq.s32.totalorder %s21, 3
      %p81 = por %p79, %p80
      %p82 = scmp.ne.s32.totalorder %s73, %s74
      %p83 = scmp.eq.s32.totalorder %s21, 0
      %p84 = por %p82, %p83
      %p85 = scmp.ne.s32.totalorder %s73, %s74
      %p86 = scmp.eq.s32.totalorder %s22, 3
      %p87 = por %p85, %p86
      %p89 = scmp.ne.s32.totalorder %s74, %s88
      %p90 = scmp.eq.s32.totalorder %s22, 0
      %p91 = por %p89, %p90
      %s93 = sadd.s32 %s92, 1
      %p96 = scmp.eq.s32.totalorder %s16, 3
      %p97 = scmp.ne.s32.totalorder %s92, %s94
      %p98 = scmp.eq.s32.totalorder %s16, 0
      %p99 = por %p97, %p98
      %p100 = scmp.ne.s32.totalorder %s92, %s94
      %p101 = scmp.eq.s32.totalorder %s21, 3
      %p102 = por %p100, %p101
      %p103 = scmp.ne.s32.totalorder %s94, %s95
      %p104 = scmp.eq.s32.totalorder %s21, 0
      %p105 = por %p103, %p104
      %p106 = scmp.ne.s32.totalorder %s94, %s95
      %p107 = scmp.eq.s32.totalorder %s22, 3
      %p108 = por %p106, %p107
      %p110 = scmp.ne.s32.totalorder %s95, %s109
      %p111 = scmp.eq.s32.totalorder %s22, 0
      %p112 = por %p110, %p111
      %s114 = sadd.s32 %s113, 1
      %p117 = scmp.eq.s32.totalorder %s16, 3
      %p118 = scmp.ne.s32.totalorder %s113, %s115
      %p119 = scmp.eq.s32.totalorder %s16, 0
      %p120 = por %p118, %p119
      %p121 = scmp.ne.s32.totalorder %s113, %s115
      %p122 = scmp.eq.s32.totalorder %s21, 3
      %p123 = por %p121, %p122
      %p124 = scmp.ne.s32.totalorder %s115, %s116
      %p125 = scmp.eq.s32.totalorder %s21, 0
      %p126 = por %p124, %p125
      %p127 = scmp.ne.s32.totalorder %s115, %s116
      %p128 = scmp.eq.s32.totalorder %s22, 3
      %p129 = por %p127, %p128
      %p131 = scmp.ne.s32.totalorder %s116, %s130
      %p132 = scmp.eq.s32.totalorder %s22, 0
      %p133 = por %p131, %p132
      %s135 = sadd.s32 %s134, 1
      %p138 = scmp.eq.s32.totalorder %s16, 3
      %p139 = scmp.ne.s32.totalorder %s134, %s136
      %p140 = scmp.eq.s32.totalorder %s16, 0
      %p141 = por %p139, %p140
      %p142 = scmp.ne.s32.totalorder %s134, %s136
      %p143 = scmp.eq.s32.totalorder %s21, 3
      %p144 = por %p142, %p143
      %p145 = scmp.ne.s32.totalorder %s136, %s137
      %p146 = scmp.eq.s32.totalorder %s21, 0
      %p147 = por %p145, %p146
      %p148 = scmp.ne.s32.totalorder %s136, %s137
      %p149 = scmp.eq.s32.totalorder %s22, 3
      %p150 = por %p148, %p149
      %p152 = scmp.ne.s32.totalorder %s137, %s151
      %p153 = scmp.eq.s32.totalorder %s22, 0
      %p154 = por %p152, %p153
      %s156 = sadd.s32 %s155, 1
      %p159 = scmp.eq.s32.totalorder %s16, 3
      %p160 = scmp.ne.s32.totalorder %s155, %s157
      %p161 = scmp.eq.s32.totalorder %s16, 0
      %p162 = por %p160, %p161
      %p163 = scmp.ne.s32.totalorder %s155, %s157
      %p164 = scmp.eq.s32.totalorder %s21, 3
      %p165 = por %p163, %p164
      %p166 = scmp.ne.s32.totalorder %s157, %s158
      %p167 = scmp.eq.s32.totalorder %s21, 0
      %p168 = por %p166, %p167
      %p169 = scmp.ne.s32.totalorder %s157, %s158
      %p170 = scmp.eq.s32.totalorder %s22, 3
      %p171 = por %p169, %p170
      %p173 = scmp.ne.s32.totalorder %s158, %s172
      %p174 = scmp.eq.s32.totalorder %s22, 0
      %p175 = por %p173, %p174
      %s176 = ssub.s32 %s16, %s23
      %p177 = scmp.eq.s32.totalorder %s176, 0
      %s179 = sadd.s32 %s178, 1
      %s180 = scalar_select %p177, %s178, %s179
      %p183 = pneg %p177
      %p184 = scmp.eq.s32.totalorder %s16, 3
      %p185 = por %p183, %p184
      %p186 = scmp.ne.s32.totalorder %s178, %s181
      %p187 = scmp.eq.s32.totalorder %s16, 0
      %p188 = por %p186, %p187
      %p189 = scmp.ne.s32.totalorder %s178, %s181
      %p190 = scmp.eq.s32.totalorder %s21, 3
      %p191 = por %p189, %p190
      %p192 = scmp.ne.s32.totalorder %s181, %s182
      %p193 = scmp.eq.s32.totalorder %s21, 0
      %p194 = por %p192, %p193
      %p195 = scmp.ne.s32.totalorder %s181, %s182
      %p196 = scmp.eq.s32.totalorder %s22, 3
      %p197 = por %p195, %p196
      %p199 = scmp.ne.s32.totalorder %s182, %s198
      %p200 = scmp.eq.s32.totalorder %s22, 0
      %p201 = por %p199, %p200
      %p202 = scmp.le.s32.totalorder 1, %s16
      %p203 = scmp.lt.s32.totalorder %s16, 5
      %p204 = pnand %p202, %p203
      %p205 = pneg %p204
      // Predicated region
      $region9: #{bottleneck_forward.1} parent=5 // pred_check
        _
      $region10: #{bottleneck_forward.1} parent=5 // pred_check_branch
        %207 = sbr.rel (%p204) target = $region12
      $region11: #{bottleneck_forward.1} parent=5 // pred_region
        %s208 = ssub.s32 %s16, 1
        // Predicated region
        $region13: #{bottleneck_forward.1} parent=11 // pred_check
          %p209 = pneg %p63
        $region14: #{bottleneck_forward.1} parent=11 // pred_check_branch
          %211 = sbr.rel (%p209) target = $region16
        $region15: #{bottleneck_forward.1} parent=11 // pred_region
          _
        $region16: #{bottleneck_forward.1} parent=11 // pred_fallthru
          _
        // Predicated region
        $region17: #{bottleneck_forward.1} parent=11 // pred_check
          %p212 = pneg %p84
        $region18: #{bottleneck_forward.1} parent=11 // pred_check_branch
          %214 = sbr.rel (%p212) target = $region20
        $region19: #{bottleneck_forward.1} parent=11 // pred_region
          _
        $region20: #{bottleneck_forward.1} parent=11 // pred_fallthru
          _
        // Predicated region
        $region21: #{bottleneck_forward.1} parent=11 // pred_check
          %p215 = pneg %p105
        $region22: #{bottleneck_forward.1} parent=11 // pred_check_branch
          %217 = sbr.rel (%p215) target = $region24
        $region23: #{bottleneck_forward.1} parent=11 // pred_region
          _
        $region24: #{bottleneck_forward.1} parent=11 // pred_fallthru
          _
        // Predicated region
        $region25: #{bottleneck_forward.1} parent=11 // pred_check
          %p218 = pneg %p126
        $region26: #{bottleneck_forward.1} parent=11 // pred_check_branch
          %220 = sbr.rel (%p218) target = $region28
        $region27: #{bottleneck_forward.1} parent=11 // pred_region
          _
        $region28: #{bottleneck_forward.1} parent=11 // pred_fallthru
          _
        // Predicated region
        $region29: #{bottleneck_forward.1} parent=11 // pred_check
          %p221 = pneg %p147
        $region30: #{bottleneck_forward.1} parent=11 // pred_check_branch
          %223 = sbr.rel (%p221) target = $region32
        $region31: #{bottleneck_forward.1} parent=11 // pred_region
          _
        $region32: #{bottleneck_forward.1} parent=11 // pred_fallthru
          _
        // Predicated region
        $region33: #{bottleneck_forward.1} parent=11 // pred_check
          %p224 = pneg %p168
        $region34: #{bottleneck_forward.1} parent=11 // pred_check_branch
          %226 = sbr.rel (%p224) target = $region36
        $region35: #{bottleneck_forward.1} parent=11 // pred_region
          _
        $region36: #{bottleneck_forward.1} parent=11 // pred_fallthru
          _
      $region12: #{bottleneck_forward.1} parent=5 // pred_fallthru
        _
      %p227 = scmp.lt.s32.totalorder %s16, 4
      // Predicated region
      $region37: #{bottleneck_forward.1} parent=5 // pred_check
        %p228 = pneg %p227
      $region38: #{bottleneck_forward.1} parent=5 // pred_check_branch
        %230 = sbr.rel (%p228) target = $region40
      $region39: #{bottleneck_forward.1} parent=5 // pred_region
        // Predicated region
        $region41: #{bottleneck_forward.1} parent=39 // pred_check
          %p231 = pneg %p36
        $region42: #{bottleneck_forward.1} parent=39 // pred_check_branch
          %233 = sbr.rel (%p231) target = $region44
        $region43: #{bottleneck_forward.1} parent=39 // pred_region
          %s234 = smul.u32 2, %s16
          %p235 = scmp.lt.s32.totalorder %s234, 7
          %s236 = scalar_select %p235, %s234, 7
          %s237 = smul.addr %s236, 32
          %s238 = smul.addr %s237, 4
          %s239 = scalar_lea.vmem %s0, %s238
          %s240 = smul.u32 2, %s16
        $region44: #{bottleneck_forward.1} parent=39 // pred_fallthru
          _
      $region40: #{bottleneck_forward.1} parent=5 // pred_fallthru
        _
      %p241 = scmp.le.s32.totalorder 1, %s16
      %p242 = scmp.lt.s32.totalorder %s16, 5
      %p243 = pnand %p241, %p242
      %p244 = pneg %p243
      // Predicated region
      $region45: #{bottleneck_forward.1} parent=5 // pred_check
        _
      $region46: #{bottleneck_forward.1} parent=5 // pred_check_branch
        %246 = sbr.rel (%p243) target = $region48
      $region47: #{bottleneck_forward.1} parent=5 // pred_region
        %s247 = ssub.s32 %s16, 1
        %s248 = smul.u32 2, %s21
        %p249 = scmp.lt.s32.totalorder %s248, 7
        %s250 = scalar_select %p249, %s248, 7
        %s251 = smul.addr %s250, 32
        %s252 = smul.addr %s251, 4
        %s253 = scalar_lea.vmem %s0, %s252
        %p254 = pneg %p42
        %p255 = pneg %p39
        %p256 = pneg %p63
        %p257 = pneg %p60
        %p258 = pneg %p84
        %p259 = pneg %p81
        %p260 = pneg %p105
        %p261 = pneg %p102
        %p262 = pneg %p126
        %p263 = pneg %p123
        %p264 = pneg %p147
        %p265 = pneg %p144
        %p266 = pneg %p168
        %p267 = pneg %p165
        %p268 = pneg %p194
        %p269 = pneg %p191
        %s270 = sand.u32 %s181, 1
        %s271 = scalar_lea.sflag [#allocation4], %s270
        %s272 = sand.u32 %s181, 1
        %s273 = smul.addr %s272, 256
        %s274 = scalar_lea.vmem [#allocation3], %s273
        %s275 = smul.u32 2, %s21
        %p276 = scmp.lt.s32.totalorder %s275, 7
        %s277 = scalar_select %p276, %s275, 7
        %s278 = smul.addr %s277, 32
        %s279 = smul.addr %s278, 4
        %s280 = scalar_lea.vmem %s0, %s279
        %s281 = smul.u32 2, %s21
        %s282 = smul.u32 2, %s21
        %v284 = vld [vmem:[%s280] sm:$0xf]
        %v285 = vld [vmem:[%s280 + $0x4] sm:$0xf]
        %v286 = vld [vmem:[%s280 + $0x8] sm:$0xf]
        %v287 = vld [vmem:[%s280 + $0xc] sm:$0xf]
        %v288 = vld [vmem:[%s280 + $0x10] sm:$0xf]
        %v289 = vld [vmem:[%s280 + $0x14] sm:$0xf]
        %v290 = vld [vmem:[%s280 + $0x18] sm:$0xf]
        %v291 = vld [vmem:[%s280 + $0x1c] sm:$0xf]
        %v292 = vld [vmem:[%s280 + $0x20] sm:$0xf]
        %v293 = vld [vmem:[%s280 + $0x24] sm:$0xf]
        %v294 = vld [vmem:[%s280 + $0x28] sm:$0xf]
        %v295 = vld [vmem:[%s280 + $0x2c] sm:$0xf]
        %v296 = vld [vmem:[%s280 + $0x30] sm:$0xf]
        %v297 = vld [vmem:[%s280 + $0x34] sm:$0xf]
        %v298 = vld [vmem:[%s280 + $0x38] sm:$0xf]
        %v299 = vld [vmem:[%s280 + $0x3c] sm:$0xf]
        %v300 = vld [vmem:[%s280 + $0x40] sm:$0xf]
        %v301 = vld [vmem:[%s280 + $0x44] sm:$0xf]
        %v302 = vld [vmem:[%s280 + $0x48] sm:$0xf]
        %v303 = vld [vmem:[%s280 + $0x4c] sm:$0xf]
        %v304 = vld [vmem:[%s280 + $0x50] sm:$0xf]
        %v305 = vld [vmem:[%s280 + $0x54] sm:$0xf]
        %v306 = vld [vmem:[%s280 + $0x58] sm:$0xf]
        %v307 = vld [vmem:[%s280 + $0x5c] sm:$0xf]
        %v308 = vld [vmem:[%s280 + $0x60] sm:$0xf]
        %v309 = vld [vmem:[%s280 + $0x64] sm:$0xf]
        %v310 = vld [vmem:[%s280 + $0x68] sm:$0xf]
        %v311 = vld [vmem:[%s280 + $0x6c] sm:$0xf]
        %v312 = vld [vmem:[%s280 + $0x70] sm:$0xf]
        %v313 = vld [vmem:[%s280 + $0x74] sm:$0xf]
        %v314 = vld [vmem:[%s280 + $0x78] sm:$0xf]
        %v315 = vld [vmem:[%s280 + $0x7c] sm:$0xf]
        %v316 = vld [vmem:[%s280 + $0x80] sm:$0xf]
        %v317 = vld [vmem:[%s280 + $0x84] sm:$0xf]
        %v318 = vld [vmem:[%s280 + $0x88] sm:$0xf]
        %v319 = vld [vmem:[%s280 + $0x8c] sm:$0xf]
        %v320 = vld [vmem:[%s280 + $0x90] sm:$0xf]
        %v321 = vld [vmem:[%s280 + $0x94] sm:$0xf]
        %v322 = vld [vmem:[%s280 + $0x98] sm:$0xf]
        %v323 = vld [vmem:[%s280 + $0x9c] sm:$0xf]
        %v324 = vld [vmem:[%s280 + $0xa0] sm:$0xf]
        %v325 = vld [vmem:[%s280 + $0xa4] sm:$0xf]
        %v326 = vld [vmem:[%s280 + $0xa8] sm:$0xf]
        %v327 = vld [vmem:[%s280 + $0xac] sm:$0xf]
        %v328 = vld [vmem:[%s280 + $0xb0] sm:$0xf]
        %v329 = vld [vmem:[%s280 + $0xb4] sm:$0xf]
        %v330 = vld [vmem:[%s280 + $0xb8] sm:$0xf]
        %v331 = vld [vmem:[%s280 + $0xbc] sm:$0xf]
        %v332 = vld [vmem:[%s280 + $0xc0] sm:$0xf]
        %v333 = vld [vmem:[%s280 + $0xc4] sm:$0xf]
        %v334 = vld [vmem:[%s280 + $0xc8] sm:$0xf]
        %v335 = vld [vmem:[%s280 + $0xcc] sm:$0xf]
        %v336 = vld [vmem:[%s280 + $0xd0] sm:$0xf]
        %v337 = vld [vmem:[%s280 + $0xd4] sm:$0xf]
        %v338 = vld [vmem:[%s280 + $0xd8] sm:$0xf]
        %v339 = vld [vmem:[%s280 + $0xdc] sm:$0xf]
        %v340 = vld [vmem:[%s280 + $0xe0] sm:$0xf]
        %v341 = vld [vmem:[%s280 + $0xe4] sm:$0xf]
        %v342 = vld [vmem:[%s280 + $0xe8] sm:$0xf]
        %v343 = vld [vmem:[%s280 + $0xec] sm:$0xf]
        %v344 = vld [vmem:[%s280 + $0xf0] sm:$0xf]
        %v345 = vld [vmem:[%s280 + $0xf4] sm:$0xf]
        %v346 = vld [vmem:[%s280 + $0xf8] sm:$0xf]
        %v347 = vld [vmem:[%s280 + $0xfc] sm:$0xf]
        %v348 = vld [vmem:[%s1] sm:$0xf]
        %v349 = vld [vmem:[%s1 + $0x4] sm:$0xf]
        %v350 = vld [vmem:[%s1 + $0x8] sm:$0xf]
        %v351 = vld [vmem:[%s1 + $0xc] sm:$0xf]
        %v352 = vld [vmem:[%s1 + $0x10] sm:$0xf]
        %v353 = vld [vmem:[%s1 + $0x14] sm:$0xf]
        %v354 = vld [vmem:[%s1 + $0x18] sm:$0xf]
        %v355 = vld [vmem:[%s1 + $0x1c] sm:$0xf]
        %v356 = vld [vmem:[%s1 + $0x20] sm:$0xf]
        %v357 = vld [vmem:[%s1 + $0x24] sm:$0xf]
        %v358 = vld [vmem:[%s1 + $0x28] sm:$0xf]
        %v359 = vld [vmem:[%s1 + $0x2c] sm:$0xf]
        %v360 = vld [vmem:[%s1 + $0x30] sm:$0xf]
        %v361 = vld [vmem:[%s1 + $0x34] sm:$0xf]
        %v362 = vld [vmem:[%s1 + $0x38] sm:$0xf]
        %v363 = vld [vmem:[%s1 + $0x3c] sm:$0xf]
        %v364 = vld [vmem:[%s2] sm:$0x1]
        %v366 = vperm.slane %v364, 0
        %v432 = vunpack.c.l.b16 %v284
        %v433 = vunpack.c.l.b16 %v285
        %v434 = vunpack.c.l.b16 %v286
        %v435 = vunpack.c.l.b16 %v287
        %v436 = vunpack.c.l.b16 %v288
        %v437 = vunpack.c.l.b16 %v289
        %v438 = vunpack.c.l.b16 %v290
        %v439 = vunpack.c.l.b16 %v291
        %v440 = vunpack.c.l.b16 %v292
        %v441 = vunpack.c.l.b16 %v293
        %v442 = vunpack.c.l.b16 %v294
        %v443 = vunpack.c.l.b16 %v295
        %v444 = vunpack.c.l.b16 %v296
        %v445 = vunpack.c.l.b16 %v297
        %v446 = vunpack.c.l.b16 %v298
        %v447 = vunpack.c.l.b16 %v299
        %v448 = vunpack.c.l.b16 %v300
        %v449 = vunpack.c.l.b16 %v301
        %v450 = vunpack.c.l.b16 %v302
        %v451 = vunpack.c.l.b16 %v303
        %v452 = vunpack.c.l.b16 %v304
        %v453 = vunpack.c.l.b16 %v305
        %v454 = vunpack.c.l.b16 %v306
        %v455 = vunpack.c.l.b16 %v307
        %v456 = vunpack.c.l.b16 %v308
        %v457 = vunpack.c.l.b16 %v309
        %v458 = vunpack.c.l.b16 %v310
        %v459 = vunpack.c.l.b16 %v311
        %v460 = vunpack.c.l.b16 %v312
        %v461 = vunpack.c.l.b16 %v313
        %v462 = vunpack.c.l.b16 %v314
        %v463 = vunpack.c.l.b16 %v315
        %v464 = vunpack.c.l.b16 %v316
        %v465 = vunpack.c.l.b16 %v317
        %v466 = vunpack.c.l.b16 %v318
        %v467 = vunpack.c.l.b16 %v319
        %v468 = vunpack.c.l.b16 %v320
        %v469 = vunpack.c.l.b16 %v321
        %v470 = vunpack.c.l.b16 %v322
        %v471 = vunpack.c.l.b16 %v323
        %v472 = vunpack.c.l.b16 %v324
        %v473 = vunpack.c.l.b16 %v325
        %v474 = vunpack.c.l.b16 %v326
        %v475 = vunpack.c.l.b16 %v327
        %v476 = vunpack.c.l.b16 %v328
        %v477 = vunpack.c.l.b16 %v329
        %v478 = vunpack.c.l.b16 %v330
        %v479 = vunpack.c.l.b16 %v331
        %v480 = vunpack.c.l.b16 %v332
        %v481 = vunpack.c.l.b16 %v333
        %v482 = vunpack.c.l.b16 %v334
        %v483 = vunpack.c.l.b16 %v335
        %v484 = vunpack.c.l.b16 %v336
        %v485 = vunpack.c.l.b16 %v337
        %v486 = vunpack.c.l.b16 %v338
        %v487 = vunpack.c.l.b16 %v339
        %v488 = vunpack.c.l.b16 %v340
        %v489 = vunpack.c.l.b16 %v341
        %v490 = vunpack.c.l.b16 %v342
        %v491 = vunpack.c.l.b16 %v343
        %v492 = vunpack.c.l.b16 %v344
        %v493 = vunpack.c.l.b16 %v345
        %v494 = vunpack.c.l.b16 %v346
        %v495 = vunpack.c.l.b16 %v347
        %v496 = vpack.c.b16 %v433, %v432
        %v497 = vpack.c.b16 %v435, %v434
        %v498 = vpack.c.b16 %v437, %v436
        %v499 = vpack.c.b16 %v439, %v438
        %v500 = vpack.c.b16 %v441, %v440
        %v501 = vpack.c.b16 %v443, %v442
        %v502 = vpack.c.b16 %v445, %v444
        %v503 = vpack.c.b16 %v447, %v446
        %v504 = vpack.c.b16 %v449, %v448
        %v505 = vpack.c.b16 %v451, %v450
        %v506 = vpack.c.b16 %v453, %v452
        %v507 = vpack.c.b16 %v455, %v454
        %v508 = vpack.c.b16 %v457, %v456
        %v509 = vpack.c.b16 %v459, %v458
        %v510 = vpack.c.b16 %v461, %v460
        %v511 = vpack.c.b16 %v463, %v462
        %v512 = vpack.c.b16 %v465, %v464
        %v513 = vpack.c.b16 %v467, %v466
        %v514 = vpack.c.b16 %v469, %v468
        %v515 = vpack.c.b16 %v471, %v470
        %v516 = vpack.c.b16 %v473, %v472
        %v517 = vpack.c.b16 %v475, %v474
        %v518 = vpack.c.b16 %v477, %v476
        %v519 = vpack.c.b16 %v479, %v478
        %v520 = vpack.c.b16 %v481, %v480
        %v521 = vpack.c.b16 %v483, %v482
        %v522 = vpack.c.b16 %v485, %v484
        %v523 = vpack.c.b16 %v487, %v486
        %v524 = vpack.c.b16 %v489, %v488
        %v525 = vpack.c.b16 %v491, %v490
        %v526 = vpack.c.b16 %v493, %v492
        %v527 = vpack.c.b16 %v495, %v494
        %v576 = vunpack.c.l.b16 %v348
        %v577 = vunpack.c.l.b16 %v349
        %v578 = vunpack.c.l.b16 %v350
        %v579 = vunpack.c.l.b16 %v351
        %v580 = vunpack.c.l.b16 %v352
        %v581 = vunpack.c.l.b16 %v353
        %v582 = vunpack.c.l.b16 %v354
        %v583 = vunpack.c.l.b16 %v355
        %v584 = vunpack.c.l.b16 %v356
        %v585 = vunpack.c.l.b16 %v357
        %v586 = vunpack.c.l.b16 %v358
        %v587 = vunpack.c.l.b16 %v359
        %v588 = vunpack.c.l.b16 %v360
        %v589 = vunpack.c.l.b16 %v361
        %v590 = vunpack.c.l.b16 %v362
        %v591 = vunpack.c.l.b16 %v363
        %v592 = vpack.c.b16 %v577, %v576
        %v593 = vpack.c.b16 %v579, %v578
        %v594 = vpack.c.b16 %v581, %v580
        %v595 = vpack.c.b16 %v583, %v582
        %v596 = vpack.c.b16 %v585, %v584
        %v597 = vpack.c.b16 %v587, %v586
        %v598 = vpack.c.b16 %v589, %v588
        %v599 = vpack.c.b16 %v591, %v590
        %608 = vmatpush.bf16.msra.mxu0 %v599
        %609 = vmatpush.bf16.msra.mxu0 %v598
        %610 = vmatpush.bf16.msra.mxu0 %v597
        %611 = vmatpush.bf16.msra.mxu0 %v596
        %612 = vmatpush.bf16.msra.mxu0 %v595
        %613 = vmatpush.bf16.msra.mxu0 %v594
        %614 = vmatpush.bf16.msra.mxu0 %v593
        %615 = vmatpush.bf16.msra.mxu0 %v592
        %616 = vmatmul.bf16.gmra.mxu0 %v496
        %v617 = vpop.f32.mrf.mxu0
        %v618 = vadd.f32 %v366, %v617
        %v619 = vpop.f32.mrf.mxu0
        %v620 = vadd.f32 %v366, %v619
        %621 = vmatmul.bf16.gmra.mxu0 %v497
        %v622 = vpop.f32.mrf.mxu0
        %v623 = vadd.f32 %v366, %v622
        %v624 = vpop.f32.mrf.mxu0
        %v625 = vadd.f32 %v366, %v624
        %626 = vmatmul.bf16.gmra.mxu0 %v498
        %v627 = vpop.f32.mrf.mxu0
        %v628 = vadd.f32 %v366, %v627
        %v629 = vpop.f32.mrf.mxu0
        %v630 = vadd.f32 %v366, %v629
        %631 = vmatmul.bf16.gmra.mxu0 %v499
        %v632 = vpop.f32.mrf.mxu0
        %v633 = vadd.f32 %v366, %v632
        %v634 = vpop.f32.mrf.mxu0
        %v635 = vadd.f32 %v366, %v634
        %636 = vmatmul.bf16.gmra.mxu0 %v500
        %v637 = vpop.f32.mrf.mxu0
        %v638 = vadd.f32 %v366, %v637
        %v639 = vpop.f32.mrf.mxu0
        %v640 = vadd.f32 %v366, %v639
        %641 = vmatmul.bf16.gmra.mxu0 %v501
        %v642 = vpop.f32.mrf.mxu0
        %v643 = vadd.f32 %v366, %v642
        %v644 = vpop.f32.mrf.mxu0
        %v645 = vadd.f32 %v366, %v644
        %646 = vmatmul.bf16.gmra.mxu0 %v502
        %v647 = vpop.f32.mrf.mxu0
        %v648 = vadd.f32 %v366, %v647
        %v649 = vpop.f32.mrf.mxu0
        %v650 = vadd.f32 %v366, %v649
        %651 = vmatmul.bf16.gmra.mxu0 %v503
        %v652 = vpop.f32.mrf.mxu0
        %v653 = vadd.f32 %v366, %v652
        %v654 = vpop.f32.mrf.mxu0
        %v655 = vadd.f32 %v366, %v654
        %656 = vmatmul.bf16.gmra.mxu0 %v504
        %v657 = vpop.f32.mrf.mxu0
        %v658 = vadd.f32 %v366, %v657
        %v659 = vpop.f32.mrf.mxu0
        %v660 = vadd.f32 %v366, %v659
        %661 = vmatmul.bf16.gmra.mxu0 %v505
        %v662 = vpop.f32.mrf.mxu0
        %v663 = vadd.f32 %v366, %v662
        %v664 = vpop.f32.mrf.mxu0
        %v665 = vadd.f32 %v366, %v664
        %666 = vmatmul.bf16.gmra.mxu0 %v506
        %v667 = vpop.f32.mrf.mxu0
        %v668 = vadd.f32 %v366, %v667
        %v669 = vpop.f32.mrf.mxu0
        %v670 = vadd.f32 %v366, %v669
        %671 = vmatmul.bf16.gmra.mxu0 %v507
        %v672 = vpop.f32.mrf.mxu0
        %v673 = vadd.f32 %v366, %v672
        %v674 = vpop.f32.mrf.mxu0
        %v675 = vadd.f32 %v366, %v674
        %676 = vmatmul.bf16.gmra.mxu0 %v508
        %v677 = vpop.f32.mrf.mxu0
        %v678 = vadd.f32 %v366, %v677
        %v679 = vpop.f32.mrf.mxu0
        %v680 = vadd.f32 %v366, %v679
        %681 = vmatmul.bf16.gmra.mxu0 %v509
        %v682 = vpop.f32.mrf.mxu0
        %v683 = vadd.f32 %v366, %v682
        %v684 = vpop.f32.mrf.mxu0
        %v685 = vadd.f32 %v366, %v684
        %686 = vmatmul.bf16.gmra.mxu0 %v510
        %v687 = vpop.f32.mrf.mxu0
        %v688 = vadd.f32 %v366, %v687
        %v689 = vpop.f32.mrf.mxu0
        %v690 = vadd.f32 %v366, %v689
        %691 = vmatmul.bf16.gmra.mxu0 %v511
        %v692 = vpop.f32.mrf.mxu0
        %v693 = vadd.f32 %v366, %v692
        %v694 = vpop.f32.mrf.mxu0
        %v695 = vadd.f32 %v366, %v694
        %696 = vmatmul.bf16.gmra.mxu0 %v512
        %v697 = vpop.f32.mrf.mxu0
        %v698 = vadd.f32 %v366, %v697
        %v699 = vpop.f32.mrf.mxu0
        %v700 = vadd.f32 %v366, %v699
        %701 = vmatmul.bf16.gmra.mxu0 %v513
        %v702 = vpop.f32.mrf.mxu0
        %v703 = vadd.f32 %v366, %v702
        %v704 = vpop.f32.mrf.mxu0
        %v705 = vadd.f32 %v366, %v704
        %706 = vmatmul.bf16.gmra.mxu0 %v514
        %v707 = vpop.f32.mrf.mxu0
        %v708 = vadd.f32 %v366, %v707
        %v709 = vpop.f32.mrf.mxu0
        %v710 = vadd.f32 %v366, %v709
        %711 = vmatmul.bf16.gmra.mxu0 %v515
        %v712 = vpop.f32.mrf.mxu0
        %v713 = vadd.f32 %v366, %v712
        %v714 = vpop.f32.mrf.mxu0
        %v715 = vadd.f32 %v366, %v714
        %716 = vmatmul.bf16.gmra.mxu0 %v516
        %v717 = vpop.f32.mrf.mxu0
        %v718 = vadd.f32 %v366, %v717
        %v719 = vpop.f32.mrf.mxu0
        %v720 = vadd.f32 %v366, %v719
        %721 = vmatmul.bf16.gmra.mxu0 %v517
        %v722 = vpop.f32.mrf.mxu0
        %v723 = vadd.f32 %v366, %v722
        %v724 = vpop.f32.mrf.mxu0
        %v725 = vadd.f32 %v366, %v724
        %726 = vmatmul.bf16.gmra.mxu0 %v518
        %v727 = vpop.f32.mrf.mxu0
        %v728 = vadd.f32 %v366, %v727
        %v729 = vpop.f32.mrf.mxu0
        %v730 = vadd.f32 %v366, %v729
        %731 = vmatmul.bf16.gmra.mxu0 %v519
        %v732 = vpop.f32.mrf.mxu0
        %v733 = vadd.f32 %v366, %v732
        %v734 = vpop.f32.mrf.mxu0
        %v735 = vadd.f32 %v366, %v734
        %736 = vmatmul.bf16.gmra.mxu0 %v520
        %v737 = vpop.f32.mrf.mxu0
        %v738 = vadd.f32 %v366, %v737
        %v739 = vpop.f32.mrf.mxu0
        %v740 = vadd.f32 %v366, %v739
        %741 = vmatmul.bf16.gmra.mxu0 %v521
        %v742 = vpop.f32.mrf.mxu0
        %v743 = vadd.f32 %v366, %v742
        %v744 = vpop.f32.mrf.mxu0
        %v745 = vadd.f32 %v366, %v744
        %746 = vmatmul.bf16.gmra.mxu0 %v522
        %v747 = vpop.f32.mrf.mxu0
        %v748 = vadd.f32 %v366, %v747
        %v749 = vpop.f32.mrf.mxu0
        %v750 = vadd.f32 %v366, %v749
        %751 = vmatmul.bf16.gmra.mxu0 %v523
        %v752 = vpop.f32.mrf.mxu0
        %v753 = vadd.f32 %v366, %v752
        %v754 = vpop.f32.mrf.mxu0
        %v755 = vadd.f32 %v366, %v754
        %756 = vmatmul.bf16.gmra.mxu0 %v524
        %v757 = vpop.f32.mrf.mxu0
        %v758 = vadd.f32 %v366, %v757
        %v759 = vpop.f32.mrf.mxu0
        %v760 = vadd.f32 %v366, %v759
        %761 = vmatmul.bf16.gmra.mxu0 %v525
        %v762 = vpop.f32.mrf.mxu0
        %v763 = vadd.f32 %v366, %v762
        %v764 = vpop.f32.mrf.mxu0
        %v765 = vadd.f32 %v366, %v764
        %766 = vmatmul.bf16.gmra.mxu0 %v526
        %v767 = vpop.f32.mrf.mxu0
        %v768 = vadd.f32 %v366, %v767
        %v769 = vpop.f32.mrf.mxu0
        %v770 = vadd.f32 %v366, %v769
        %771 = vmatmul.bf16.gmra.mxu0 %v527
        %v772 = vpop.f32.mrf.mxu0
        %v773 = vadd.f32 %v366, %v772
        %v774 = vpop.f32.mrf.mxu0
        %v775 = vadd.f32 %v366, %v774
        %776 = vdwg.mxu0
        %v777 = vmax.f32 %v618, 0.0
        %v778 = vmax.f32 %v620, 0.0
        %v779 = vmax.f32 %v623, 0.0
        %v780 = vmax.f32 %v625, 0.0
        %v781 = vmax.f32 %v628, 0.0
        %v782 = vmax.f32 %v630, 0.0
        %v783 = vmax.f32 %v633, 0.0
        %v784 = vmax.f32 %v635, 0.0
        %v785 = vmax.f32 %v638, 0.0
        %v786 = vmax.f32 %v640, 0.0
        %v787 = vmax.f32 %v643, 0.0
        %v788 = vmax.f32 %v645, 0.0
        %v789 = vmax.f32 %v648, 0.0
        %v790 = vmax.f32 %v650, 0.0
        %v791 = vmax.f32 %v653, 0.0
        %v792 = vmax.f32 %v655, 0.0
        %v793 = vmax.f32 %v658, 0.0
        %v794 = vmax.f32 %v660, 0.0
        %v795 = vmax.f32 %v663, 0.0
        %v796 = vmax.f32 %v665, 0.0
        %v797 = vmax.f32 %v668, 0.0
        %v798 = vmax.f32 %v670, 0.0
        %v799 = vmax.f32 %v673, 0.0
        %v800 = vmax.f32 %v675, 0.0
        %v801 = vmax.f32 %v678, 0.0
        %v802 = vmax.f32 %v680, 0.0
        %v803 = vmax.f32 %v683, 0.0
        %v804 = vmax.f32 %v685, 0.0
        %v805 = vmax.f32 %v688, 0.0
        %v806 = vmax.f32 %v690, 0.0
        %v807 = vmax.f32 %v693, 0.0
        %v808 = vmax.f32 %v695, 0.0
        %v809 = vmax.f32 %v698, 0.0
        %v810 = vmax.f32 %v700, 0.0
        %v811 = vmax.f32 %v703, 0.0
        %v812 = vmax.f32 %v705, 0.0
        %v813 = vmax.f32 %v708, 0.0
        %v814 = vmax.f32 %v710, 0.0
        %v815 = vmax.f32 %v713, 0.0
        %v816 = vmax.f32 %v715, 0.0
        %v817 = vmax.f32 %v718, 0.0
        %v818 = vmax.f32 %v720, 0.0
        %v819 = vmax.f32 %v723, 0.0
        %v820 = vmax.f32 %v725, 0.0
        %v821 = vmax.f32 %v728, 0.0
        %v822 = vmax.f32 %v730, 0.0
        %v823 = vmax.f32 %v733, 0.0
        %v824 = vmax.f32 %v735, 0.0
        %v825 = vmax.f32 %v738, 0.0
        %v826 = vmax.f32 %v740, 0.0
        %v827 = vmax.f32 %v743, 0.0
        %v828 = vmax.f32 %v745, 0.0
        %v829 = vmax.f32 %v748, 0.0
        %v830 = vmax.f32 %v750, 0.0
        %v831 = vmax.f32 %v753, 0.0
        %v832 = vmax.f32 %v755, 0.0
        %v833 = vmax.f32 %v758, 0.0
        %v834 = vmax.f32 %v760, 0.0
        %v835 = vmax.f32 %v763, 0.0
        %v836 = vmax.f32 %v765, 0.0
        %v837 = vmax.f32 %v768, 0.0
        %v838 = vmax.f32 %v770, 0.0
        %v839 = vmax.f32 %v773, 0.0
        %v840 = vmax.f32 %v775, 0.0
        %v841 = vpack.c.bf16 %v777, %v777
        %v842 = vpack.c.bf16 %v778, %v778
        %v843 = vpack.c.bf16 %v779, %v779
        %v844 = vpack.c.bf16 %v780, %v780
        %v845 = vpack.c.bf16 %v781, %v781
        %v846 = vpack.c.bf16 %v782, %v782
        %v847 = vpack.c.bf16 %v783, %v783
        %v848 = vpack.c.bf16 %v784, %v784
        %v849 = vpack.c.bf16 %v785, %v785
        %v850 = vpack.c.bf16 %v786, %v786
        %v851 = vpack.c.bf16 %v787, %v787
        %v852 = vpack.c.bf16 %v788, %v788
        %v853 = vpack.c.bf16 %v789, %v789
        %v854 = vpack.c.bf16 %v790, %v790
        %v855 = vpack.c.bf16 %v791, %v791
        %v856 = vpack.c.bf16 %v792, %v792
        %v857 = vpack.c.bf16 %v793, %v793
        %v858 = vpack.c.bf16 %v794, %v794
        %v859 = vpack.c.bf16 %v795, %v795
        %v860 = vpack.c.bf16 %v796, %v796
        %v861 = vpack.c.bf16 %v797, %v797
        %v862 = vpack.c.bf16 %v798, %v798
        %v863 = vpack.c.bf16 %v799, %v799
        %v864 = vpack.c.bf16 %v800, %v800
        %v865 = vpack.c.bf16 %v801, %v801
        %v866 = vpack.c.bf16 %v802, %v802
        %v867 = vpack.c.bf16 %v803, %v803
        %v868 = vpack.c.bf16 %v804, %v804
        %v869 = vpack.c.bf16 %v805, %v805
        %v870 = vpack.c.bf16 %v806, %v806
        %v871 = vpack.c.bf16 %v807, %v807
        %v872 = vpack.c.bf16 %v808, %v808
        %v873 = vpack.c.bf16 %v809, %v809
        %v874 = vpack.c.bf16 %v810, %v810
        %v875 = vpack.c.bf16 %v811, %v811
        %v876 = vpack.c.bf16 %v812, %v812
        %v877 = vpack.c.bf16 %v813, %v813
        %v878 = vpack.c.bf16 %v814, %v814
        %v879 = vpack.c.bf16 %v815, %v815
        %v880 = vpack.c.bf16 %v816, %v816
        %v881 = vpack.c.bf16 %v817, %v817
        %v882 = vpack.c.bf16 %v818, %v818
        %v883 = vpack.c.bf16 %v819, %v819
        %v884 = vpack.c.bf16 %v820, %v820
        %v885 = vpack.c.bf16 %v821, %v821
        %v886 = vpack.c.bf16 %v822, %v822
        %v887 = vpack.c.bf16 %v823, %v823
        %v888 = vpack.c.bf16 %v824, %v824
        %v889 = vpack.c.bf16 %v825, %v825
        %v890 = vpack.c.bf16 %v826, %v826
        %v891 = vpack.c.bf16 %v827, %v827
        %v892 = vpack.c.bf16 %v828, %v828
        %v893 = vpack.c.bf16 %v829, %v829
        %v894 = vpack.c.bf16 %v830, %v830
        %v895 = vpack.c.bf16 %v831, %v831
        %v896 = vpack.c.bf16 %v832, %v832
        %v897 = vpack.c.bf16 %v833, %v833
        %v898 = vpack.c.bf16 %v834, %v834
        %v899 = vpack.c.bf16 %v835, %v835
        %v900 = vpack.c.bf16 %v836, %v836
        %v901 = vpack.c.bf16 %v837, %v837
        %v902 = vpack.c.bf16 %v838, %v838
        %v903 = vpack.c.bf16 %v839, %v839
        %v904 = vpack.c.bf16 %v840, %v840
        %vm905 = vcmask 257024
        %906 = vst.msk [vmem:[#allocation2] sm:$0xf] %vm905, 0
        %907 = vst.msk [vmem:[#allocation2 + $0x4] sm:$0xf] %vm905, 0
        %vm908 = vcmask 253952
        %909 = vst.msk [vmem:[#allocation2 + $0x8] sm:$0x1] %vm908, 0
        %910 = vst.msk [vmem:[#allocation2 + $0xd8] sm:$0xf] %vm905, 0
        %911 = vst.msk [vmem:[#allocation2 + $0xdc] sm:$0xf] %vm905, 0
        %912 = vst.msk [vmem:[#allocation2 + $0xe0] sm:$0x1] %vm908, 0
        %s913 = scalar_lea.vmem [#allocation2], 204
        %914 = vst.msk [vmem:[%s913] sm:$0xf] %vm905, 0
        %915 = vst.msk [vmem:[%s913 + $0x4] sm:$0xf] %vm905, 0
        %916 = vst.msk [vmem:[%s913 + $0x8] sm:$0x1] %vm908, 0
        %917 = vst.msk [vmem:[%s913 + $0xd8] sm:$0xf] %vm905, 0
        %918 = vst.msk [vmem:[%s913 + $0xdc] sm:$0xf] %vm905, 0
        %919 = vst.msk [vmem:[%s913 + $0xe0] sm:$0x1] %vm908, 0
        %vm920 = vcmask 253952
        %vm921 = vsmask.f32 256
        %vm922 = vmand %vm920, %vm921
        %v923 = vld [vmem:[#allocation2] sm:$0x1]
        %v924 = vsel %vm922, 0, %v923
        %925 = vst [vmem:[#allocation2] sm:$0x1] %v924
        %v926 = vld [vmem:[#allocation2 + $0xc] sm:$0x1]
        %v927 = vsel %vm922, 0, %v926
        %928 = vst [vmem:[#allocation2 + $0xc] sm:$0x1] %v927
        %v929 = vld [vmem:[#allocation2 + $0x18] sm:$0x1]
        %v930 = vsel %vm922, 0, %v929
        %931 = vst [vmem:[#allocation2 + $0x18] sm:$0x1] %v930
        %v932 = vld [vmem:[#allocation2 + $0x24] sm:$0x1]
        %v933 = vsel %vm922, 0, %v932
        %934 = vst [vmem:[#allocation2 + $0x24] sm:$0x1] %v933
        %v935 = vld [vmem:[#allocation2 + $0x30] sm:$0x1]
        %v936 = vsel %vm922, 0, %v935
        %937 = vst [vmem:[#allocation2 + $0x30] sm:$0x1] %v936
        %v938 = vld [vmem:[#allocation2 + $0x3c] sm:$0x1]
        %v939 = vsel %vm922, 0, %v938
        %940 = vst [vmem:[#allocation2 + $0x3c] sm:$0x1] %v939
        %v941 = vld [vmem:[#allocation2 + $0x48] sm:$0x1]
        %v942 = vsel %vm922, 0, %v941
        %943 = vst [vmem:[#allocation2 + $0x48] sm:$0x1] %v942
        %v944 = vld [vmem:[#allocation2 + $0x54] sm:$0x1]
        %v945 = vsel %vm922, 0, %v944
        %946 = vst [vmem:[#allocation2 + $0x54] sm:$0x1] %v945
        %v947 = vld [vmem:[#allocation2 + $0x60] sm:$0x1]
        %v948 = vsel %vm922, 0, %v947
        %949 = vst [vmem:[#allocation2 + $0x60] sm:$0x1] %v948
        %v950 = vld [vmem:[#allocation2 + $0x6c] sm:$0x1]
        %v951 = vsel %vm922, 0, %v950
        %952 = vst [vmem:[#allocation2 + $0x6c] sm:$0x1] %v951
        %v953 = vld [vmem:[#allocation2 + $0x78] sm:$0x1]
        %v954 = vsel %vm922, 0, %v953
        %955 = vst [vmem:[#allocation2 + $0x78] sm:$0x1] %v954
        %v956 = vld [vmem:[#allocation2 + $0x84] sm:$0x1]
        %v957 = vsel %vm922, 0, %v956
        %958 = vst [vmem:[#allocation2 + $0x84] sm:$0x1] %v957
        %v959 = vld [vmem:[#allocation2 + $0x90] sm:$0x1]
        %v960 = vsel %vm922, 0, %v959
        %961 = vst [vmem:[#allocation2 + $0x90] sm:$0x1] %v960
        %v962 = vld [vmem:[#allocation2 + $0x9c] sm:$0x1]
        %v963 = vsel %vm922, 0, %v962
        %964 = vst [vmem:[#allocation2 + $0x9c] sm:$0x1] %v963
        %v965 = vld [vmem:[#allocation2 + $0xa8] sm:$0x1]
        %v966 = vsel %vm922, 0, %v965
        %967 = vst [vmem:[#allocation2 + $0xa8] sm:$0x1] %v966
        %v968 = vld [vmem:[#allocation2 + $0xb4] sm:$0x1]
        %v969 = vsel %vm922, 0, %v968
        %970 = vst [vmem:[#allocation2 + $0xb4] sm:$0x1] %v969
        %v971 = vld [vmem:[#allocation2 + $0xc0] sm:$0x1]
        %v972 = vsel %vm922, 0, %v971
        %973 = vst [vmem:[#allocation2 + $0xc0] sm:$0x1] %v972
        %v974 = vld [vmem:[#allocation2 + $0xcc] sm:$0x1]
        %v975 = vsel %vm922, 0, %v974
        %976 = vst [vmem:[#allocation2 + $0xcc] sm:$0x1] %v975
        %v977 = vld [vmem:[#allocation2 + $0xd8] sm:$0x1]
        %v978 = vsel %vm922, 0, %v977
        %979 = vst [vmem:[#allocation2 + $0xd8] sm:$0x1] %v978
        %v980 = vld [vmem:[#allocation2 + $0xe4] sm:$0x1]
        %v981 = vsel %vm922, 0, %v980
        %982 = vst [vmem:[#allocation2 + $0xe4] sm:$0x1] %v981
        %v983 = vld [vmem:[#allocation2 + $0xf0] sm:$0x1]
        %v984 = vsel %vm922, 0, %v983
        %985 = vst [vmem:[#allocation2 + $0xf0] sm:$0x1] %v984
        %v986 = vld [vmem:[#allocation2 + $0xfc] sm:$0x1]
        %v987 = vsel %vm922, 0, %v986
        %988 = vst [vmem:[#allocation2 + $0xfc] sm:$0x1] %v987
        %v989 = vld [vmem:[#allocation2 + $0x108] sm:$0x1]
        %v990 = vsel %vm922, 0, %v989
        %991 = vst [vmem:[#allocation2 + $0x108] sm:$0x1] %v990
        %v992 = vld [vmem:[#allocation2 + $0x114] sm:$0x1]
        %v993 = vsel %vm922, 0, %v992
        %994 = vst [vmem:[#allocation2 + $0x114] sm:$0x1] %v993
        %v995 = vld [vmem:[#allocation2 + $0x120] sm:$0x1]
        %v996 = vsel %vm922, 0, %v995
        %997 = vst [vmem:[#allocation2 + $0x120] sm:$0x1] %v996
        %v998 = vld [vmem:[#allocation2 + $0x12c] sm:$0x1]
        %v999 = vsel %vm922, 0, %v998
        %1000 = vst [vmem:[#allocation2 + $0x12c] sm:$0x1] %v999
        %v1001 = vld [vmem:[#allocation2 + $0x138] sm:$0x1]
        %v1002 = vsel %vm922, 0, %v1001
        %1003 = vst [vmem:[#allocation2 + $0x138] sm:$0x1] %v1002
        %v1004 = vld [vmem:[#allocation2 + $0x144] sm:$0x1]
        %v1005 = vsel %vm922, 0, %v1004
        %1006 = vst [vmem:[#allocation2 + $0x144] sm:$0x1] %v1005
        %v1007 = vld [vmem:[#allocation2 + $0x150] sm:$0x1]
        %v1008 = vsel %vm922, 0, %v1007
        %1009 = vst [vmem:[#allocation2 + $0x150] sm:$0x1] %v1008
        %v1010 = vld [vmem:[#allocation2 + $0x15c] sm:$0x1]
        %v1011 = vsel %vm922, 0, %v1010
        %1012 = vst [vmem:[#allocation2 + $0x15c] sm:$0x1] %v1011
        %v1013 = vld [vmem:[#allocation2 + $0x168] sm:$0x1]
        %v1014 = vsel %vm922, 0, %v1013
        %1015 = vst [vmem:[#allocation2 + $0x168] sm:$0x1] %v1014
        %v1016 = vld [vmem:[#allocation2 + $0x174] sm:$0x1]
        %v1017 = vsel %vm922, 0, %v1016
        %1018 = vst [vmem:[#allocation2 + $0x174] sm:$0x1] %v1017
        %v1019 = vld [vmem:[#allocation2 + $0x180] sm:$0x1]
        %v1020 = vsel %vm922, 0, %v1019
        %1021 = vst [vmem:[#allocation2 + $0x180] sm:$0x1] %v1020
        %v1022 = vld [vmem:[#allocation2 + $0x18c] sm:$0x1]
        %v1023 = vsel %vm922, 0, %v1022
        %1024 = vst [vmem:[#allocation2 + $0x18c] sm:$0x1] %v1023
        %v1025 = vld [vmem:[#allocation2 + $0x198] sm:$0x1]
        %v1026 = vsel %vm922, 0, %v1025
        %1027 = vst [vmem:[#allocation2 + $0x198] sm:$0x1] %v1026
        %v1028 = vld [vmem:[#allocation2 + $0x1a4] sm:$0x1]
        %v1029 = vsel %vm922, 0, %v1028
        %1030 = vst [vmem:[#allocation2 + $0x1a4] sm:$0x1] %v1029
        %vm1031 = vsmask.f32 7938
        %vm1032 = vmand %vm920, %vm1031
        %v1033 = vld [vmem:[#allocation2 + $0x8] sm:$0x1]
        %v1034 = vsel %vm1032, 0, %v1033
        %1035 = vst [vmem:[#allocation2 + $0x8] sm:$0x1] %v1034
        %v1036 = vld [vmem:[#allocation2 + $0x14] sm:$0x1]
        %v1037 = vsel %vm1032, 0, %v1036
        %1038 = vst [vmem:[#allocation2 + $0x14] sm:$0x1] %v1037
        %v1039 = vld [vmem:[#allocation2 + $0x20] sm:$0x1]
        %v1040 = vsel %vm1032, 0, %v1039
        %1041 = vst [vmem:[#allocation2 + $0x20] sm:$0x1] %v1040
        %v1042 = vld [vmem:[#allocation2 + $0x2c] sm:$0x1]
        %v1043 = vsel %vm1032, 0, %v1042
        %1044 = vst [vmem:[#allocation2 + $0x2c] sm:$0x1] %v1043
        %v1045 = vld [vmem:[#allocation2 + $0x38] sm:$0x1]
        %v1046 = vsel %vm1032, 0, %v1045
        %1047 = vst [vmem:[#allocation2 + $0x38] sm:$0x1] %v1046
        %v1048 = vld [vmem:[#allocation2 + $0x44] sm:$0x1]
        %v1049 = vsel %vm1032, 0, %v1048
        %1050 = vst [vmem:[#allocation2 + $0x44] sm:$0x1] %v1049
        %v1051 = vld [vmem:[#allocation2 + $0x50] sm:$0x1]
        %v1052 = vsel %vm1032, 0, %v1051
        %1053 = vst [vmem:[#allocation2 + $0x50] sm:$0x1] %v1052
        %v1054 = vld [vmem:[#allocation2 + $0x5c] sm:$0x1]
        %v1055 = vsel %vm1032, 0, %v1054
        %1056 = vst [vmem:[#allocation2 + $0x5c] sm:$0x1] %v1055
        %v1057 = vld [vmem:[#allocation2 + $0x68] sm:$0x1]
        %v1058 = vsel %vm1032, 0, %v1057
        %1059 = vst [vmem:[#allocation2 + $0x68] sm:$0x1] %v1058
        %v1060 = vld [vmem:[#allocation2 + $0x74] sm:$0x1]
        %v1061 = vsel %vm1032, 0, %v1060
        %1062 = vst [vmem:[#allocation2 + $0x74] sm:$0x1] %v1061
        %v1063 = vld [vmem:[#allocation2 + $0x80] sm:$0x1]
        %v1064 = vsel %vm1032, 0, %v1063
        %1065 = vst [vmem:[#allocation2 + $0x80] sm:$0x1] %v1064
        %v1066 = vld [vmem:[#allocation2 + $0x8c] sm:$0x1]
        %v1067 = vsel %vm1032, 0, %v1066
        %1068 = vst [vmem:[#allocation2 + $0x8c] sm:$0x1] %v1067
        %v1069 = vld [vmem:[#allocation2 + $0x98] sm:$0x1]
        %v1070 = vsel %vm1032, 0, %v1069
        %1071 = vst [vmem:[#allocation2 + $0x98] sm:$0x1] %v1070
        %v1072 = vld [vmem:[#allocation2 + $0xa4] sm:$0x1]
        %v1073 = vsel %vm1032, 0, %v1072
        %1074 = vst [vmem:[#allocation2 + $0xa4] sm:$0x1] %v1073
        %v1075 = vld [vmem:[#allocation2 + $0xb0] sm:$0x1]
        %v1076 = vsel %vm1032, 0, %v1075
        %1077 = vst [vmem:[#allocation2 + $0xb0] sm:$0x1] %v1076
        %v1078 = vld [vmem:[#allocation2 + $0xbc] sm:$0x1]
        %v1079 = vsel %vm1032, 0, %v1078
        %1080 = vst [vmem:[#allocation2 + $0xbc] sm:$0x1] %v1079
        %v1081 = vld [vmem:[#allocation2 + $0xc8] sm:$0x1]
        %v1082 = vsel %vm1032, 0, %v1081
        %1083 = vst [vmem:[#allocation2 + $0xc8] sm:$0x1] %v1082
        %v1084 = vld [vmem:[#allocation2 + $0xd4] sm:$0x1]
        %v1085 = vsel %vm1032, 0, %v1084
        %1086 = vst [vmem:[#allocation2 + $0xd4] sm:$0x1] %v1085
        %v1087 = vld [vmem:[#allocation2 + $0xe0] sm:$0x1]
        %v1088 = vsel %vm1032, 0, %v1087
        %1089 = vst [vmem:[#allocation2 + $0xe0] sm:$0x1] %v1088
        %v1090 = vld [vmem:[#allocation2 + $0xec] sm:$0x1]
        %v1091 = vsel %vm1032, 0, %v1090
        %1092 = vst [vmem:[#allocation2 + $0xec] sm:$0x1] %v1091
        %v1093 = vld [vmem:[#allocation2 + $0xf8] sm:$0x1]
        %v1094 = vsel %vm1032, 0, %v1093
        %1095 = vst [vmem:[#allocation2 + $0xf8] sm:$0x1] %v1094
        %v1096 = vld [vmem:[#allocation2 + $0x104] sm:$0x1]
        %v1097 = vsel %vm1032, 0, %v1096
        %1098 = vst [vmem:[#allocation2 + $0x104] sm:$0x1] %v1097
        %v1099 = vld [vmem:[#allocation2 + $0x110] sm:$0x1]
        %v1100 = vsel %vm1032, 0, %v1099
        %1101 = vst [vmem:[#allocation2 + $0x110] sm:$0x1] %v1100
        %v1102 = vld [vmem:[#allocation2 + $0x11c] sm:$0x1]
        %v1103 = vsel %vm1032, 0, %v1102
        %1104 = vst [vmem:[#allocation2 + $0x11c] sm:$0x1] %v1103
        %v1105 = vld [vmem:[#allocation2 + $0x128] sm:$0x1]
        %v1106 = vsel %vm1032, 0, %v1105
        %1107 = vst [vmem:[#allocation2 + $0x128] sm:$0x1] %v1106
        %v1108 = vld [vmem:[#allocation2 + $0x134] sm:$0x1]
        %v1109 = vsel %vm1032, 0, %v1108
        %1110 = vst [vmem:[#allocation2 + $0x134] sm:$0x1] %v1109
        %v1111 = vld [vmem:[#allocation2 + $0x140] sm:$0x1]
        %v1112 = vsel %vm1032, 0, %v1111
        %1113 = vst [vmem:[#allocation2 + $0x140] sm:$0x1] %v1112
        %v1114 = vld [vmem:[#allocation2 + $0x14c] sm:$0x1]
        %v1115 = vsel %vm1032, 0, %v1114
        %1116 = vst [vmem:[#allocation2 + $0x14c] sm:$0x1] %v1115
        %v1117 = vld [vmem:[#allocation2 + $0x158] sm:$0x1]
        %v1118 = vsel %vm1032, 0, %v1117
        %1119 = vst [vmem:[#allocation2 + $0x158] sm:$0x1] %v1118
        %v1120 = vld [vmem:[#allocation2 + $0x164] sm:$0x1]
        %v1121 = vsel %vm1032, 0, %v1120
        %1122 = vst [vmem:[#allocation2 + $0x164] sm:$0x1] %v1121
        %v1123 = vld [vmem:[#allocation2 + $0x170] sm:$0x1]
        %v1124 = vsel %vm1032, 0, %v1123
        %1125 = vst [vmem:[#allocation2 + $0x170] sm:$0x1] %v1124
        %v1126 = vld [vmem:[#allocation2 + $0x17c] sm:$0x1]
        %v1127 = vsel %vm1032, 0, %v1126
        %1128 = vst [vmem:[#allocation2 + $0x17c] sm:$0x1] %v1127
        %v1129 = vld [vmem:[#allocation2 + $0x188] sm:$0x1]
        %v1130 = vsel %vm1032, 0, %v1129
        %1131 = vst [vmem:[#allocation2 + $0x188] sm:$0x1] %v1130
        %v1132 = vld [vmem:[#allocation2 + $0x194] sm:$0x1]
        %v1133 = vsel %vm1032, 0, %v1132
        %1134 = vst [vmem:[#allocation2 + $0x194] sm:$0x1] %v1133
        %v1135 = vld [vmem:[#allocation2 + $0x1a0] sm:$0x1]
        %v1136 = vsel %vm1032, 0, %v1135
        %1137 = vst [vmem:[#allocation2 + $0x1a0] sm:$0x1] %v1136
        %v1138 = vld [vmem:[#allocation2 + $0x1ac] sm:$0x1]
        %v1139 = vsel %vm1032, 0, %v1138
        %1140 = vst [vmem:[#allocation2 + $0x1ac] sm:$0x1] %v1139
        %vm1141 = vsmask.f32 4368
        %vm1142 = vmor %vm921, %vm1141
        %v1144 = vshrl.u32 %v841, 16
        %v1146 = vrot.slane %v1144, 7
        %v1147 = vshll.u32 %v841, 16
        %v1149 = vor.u32 %v1146, %v1147
        %v1150 = vrot.slane %v1146, 4
        %v1152 = vshrl.u32 %v842, 16
        %v1154 = vrot.slane %v1152, 7
        %v1155 = vshll.u32 %v842, 16
        %v1157 = vor.u32 %v1154, %v1155
        %v1158 = vsel %vm1142, %v1150, %v1157
        %v1159 = vrot.slane %v1154, 4
        %v1161 = vshrl.u32 %v843, 16
        %v1163 = vrot.slane %v1161, 7
        %v1164 = vshll.u32 %v843, 16
        %v1166 = vor.u32 %v1163, %v1164
        %v1167 = vrot.slane %v1163, 4
        %v1169 = vshrl.u32 %v844, 16
        %v1171 = vrot.slane %v1169, 7
        %v1172 = vshll.u32 %v844, 16
        %v1174 = vor.u32 %v1171, %v1172
        %v1175 = vsel %vm1142, %v1167, %v1174
        %v1176 = vrot.slane %v1171, 4
        %v1178 = vshrl.u32 %v845, 16
        %v1180 = vrot.slane %v1178, 7
        %v1181 = vshll.u32 %v845, 16
        %v1183 = vor.u32 %v1180, %v1181
        %v1184 = vrot.slane %v1180, 4
        %v1186 = vshrl.u32 %v846, 16
        %v1188 = vrot.slane %v1186, 7
        %v1189 = vshll.u32 %v846, 16
        %v1191 = vor.u32 %v1188, %v1189
        %v1192 = vsel %vm1142, %v1184, %v1191
        %v1193 = vrot.slane %v1188, 4
        %v1195 = vshrl.u32 %v847, 16
        %v1197 = vrot.slane %v1195, 7
        %v1198 = vshll.u32 %v847, 16
        %v1200 = vor.u32 %v1197, %v1198
        %v1201 = vrot.slane %v1197, 4
        %v1203 = vshrl.u32 %v848, 16
        %v1205 = vrot.slane %v1203, 7
        %v1206 = vshll.u32 %v848, 16
        %v1208 = vor.u32 %v1205, %v1206
        %v1209 = vsel %vm1142, %v1201, %v1208
        %v1210 = vrot.slane %v1205, 4
        %v1212 = vshrl.u32 %v849, 16
        %v1214 = vrot.slane %v1212, 7
        %v1215 = vshll.u32 %v849, 16
        %v1217 = vor.u32 %v1214, %v1215
        %v1218 = vrot.slane %v1214, 4
        %v1220 = vshrl.u32 %v850, 16
        %v1222 = vrot.slane %v1220, 7
        %v1223 = vshll.u32 %v850, 16
        %v1225 = vor.u32 %v1222, %v1223
        %v1226 = vsel %vm1142, %v1218, %v1225
        %v1227 = vrot.slane %v1222, 4
        %v1229 = vshrl.u32 %v851, 16
        %v1231 = vrot.slane %v1229, 7
        %v1232 = vshll.u32 %v851, 16
        %v1234 = vor.u32 %v1231, %v1232
        %v1235 = vrot.slane %v1231, 4
        %v1237 = vshrl.u32 %v852, 16
        %v1239 = vrot.slane %v1237, 7
        %v1240 = vshll.u32 %v852, 16
        %v1242 = vor.u32 %v1239, %v1240
        %v1243 = vsel %vm1142, %v1235, %v1242
        %v1244 = vrot.slane %v1239, 4
        %v1246 = vshrl.u32 %v853, 16
        %v1248 = vrot.slane %v1246, 7
        %v1249 = vshll.u32 %v853, 16
        %v1251 = vor.u32 %v1248, %v1249
        %v1252 = vrot.slane %v1248, 4
        %v1254 = vshrl.u32 %v854, 16
        %v1256 = vrot.slane %v1254, 7
        %v1257 = vshll.u32 %v854, 16
        %v1259 = vor.u32 %v1256, %v1257
        %v1260 = vsel %vm1142, %v1252, %v1259
        %v1261 = vrot.slane %v1256, 4
        %v1263 = vshrl.u32 %v855, 16
        %v1265 = vrot.slane %v1263, 7
        %v1266 = vshll.u32 %v855, 16
        %v1268 = vor.u32 %v1265, %v1266
        %v1269 = vrot.slane %v1265, 4
        %v1271 = vshrl.u32 %v856, 16
        %v1273 = vrot.slane %v1271, 7
        %v1274 = vshll.u32 %v856, 16
        %v1276 = vor.u32 %v1273, %v1274
        %v1277 = vsel %vm1142, %v1269, %v1276
        %v1278 = vrot.slane %v1273, 4
        %v1280 = vshrl.u32 %v857, 16
        %v1282 = vrot.slane %v1280, 7
        %v1283 = vshll.u32 %v857, 16
        %v1285 = vor.u32 %v1282, %v1283
        %v1286 = vrot.slane %v1282, 4
        %v1288 = vshrl.u32 %v858, 16
        %v1290 = vrot.slane %v1288, 7
        %v1291 = vshll.u32 %v858, 16
        %v1293 = vor.u32 %v1290, %v1291
        %v1294 = vsel %vm1142, %v1286, %v1293
        %v1295 = vrot.slane %v1290, 4
        %v1297 = vshrl.u32 %v859, 16
        %v1299 = vrot.slane %v1297, 7
        %v1300 = vshll.u32 %v859, 16
        %v1302 = vor.u32 %v1299, %v1300
        %v1303 = vrot.slane %v1299, 4
        %v1305 = vshrl.u32 %v860, 16
        %v1307 = vrot.slane %v1305, 7
        %v1308 = vshll.u32 %v860, 16
        %v1310 = vor.u32 %v1307, %v1308
        %v1311 = vsel %vm1142, %v1303, %v1310
        %v1312 = vrot.slane %v1307, 4
        %v1314 = vshrl.u32 %v861, 16
        %v1316 = vrot.slane %v1314, 7
        %v1317 = vshll.u32 %v861, 16
        %v1319 = vor.u32 %v1316, %v1317
        %v1320 = vrot.slane %v1316, 4
        %v1322 = vshrl.u32 %v862, 16
        %v1324 = vrot.slane %v1322, 7
        %v1325 = vshll.u32 %v862, 16
        %v1327 = vor.u32 %v1324, %v1325
        %v1328 = vsel %vm1142, %v1320, %v1327
        %v1329 = vrot.slane %v1324, 4
        %v1331 = vshrl.u32 %v863, 16
        %v1333 = vrot.slane %v1331, 7
        %v1334 = vshll.u32 %v863, 16
        %v1336 = vor.u32 %v1333, %v1334
        %v1337 = vrot.slane %v1333, 4
        %v1339 = vshrl.u32 %v864, 16
        %v1341 = vrot.slane %v1339, 7
        %v1342 = vshll.u32 %v864, 16
        %v1344 = vor.u32 %v1341, %v1342
        %v1345 = vsel %vm1142, %v1337, %v1344
        %v1346 = vrot.slane %v1341, 4
        %v1348 = vshrl.u32 %v865, 16
        %v1350 = vrot.slane %v1348, 7
        %v1351 = vshll.u32 %v865, 16
        %v1353 = vor.u32 %v1350, %v1351
        %v1354 = vrot.slane %v1350, 4
        %v1356 = vshrl.u32 %v866, 16
        %v1358 = vrot.slane %v1356, 7
        %v1359 = vshll.u32 %v866, 16
        %v1361 = vor.u32 %v1358, %v1359
        %v1362 = vsel %vm1142, %v1354, %v1361
        %v1363 = vrot.slane %v1358, 4
        %v1365 = vshrl.u32 %v867, 16
        %v1367 = vrot.slane %v1365, 7
        %v1368 = vshll.u32 %v867, 16
        %v1370 = vor.u32 %v1367, %v1368
        %v1371 = vrot.slane %v1367, 4
        %v1373 = vshrl.u32 %v868, 16
        %v1375 = vrot.slane %v1373, 7
        %v1376 = vshll.u32 %v868, 16
        %v1378 = vor.u32 %v1375, %v1376
        %v1379 = vsel %vm1142, %v1371, %v1378
        %v1380 = vrot.slane %v1375, 4
        %v1382 = vshrl.u32 %v869, 16
        %v1384 = vrot.slane %v1382, 7
        %v1385 = vshll.u32 %v869, 16
        %v1387 = vor.u32 %v1384, %v1385
        %v1388 = vrot.slane %v1384, 4
        %v1390 = vshrl.u32 %v870, 16
        %v1392 = vrot.slane %v1390, 7
        %v1393 = vshll.u32 %v870, 16
        %v1395 = vor.u32 %v1392, %v1393
        %v1396 = vsel %vm1142, %v1388, %v1395
        %v1397 = vrot.slane %v1392, 4
        %v1399 = vshrl.u32 %v871, 16
        %v1401 = vrot.slane %v1399, 7
        %v1402 = vshll.u32 %v871, 16
        %v1404 = vor.u32 %v1401, %v1402
        %v1405 = vrot.slane %v1401, 4
        %v1407 = vshrl.u32 %v872, 16
        %v1409 = vrot.slane %v1407, 7
        %v1410 = vshll.u32 %v872, 16
        %v1412 = vor.u32 %v1409, %v1410
        %v1413 = vsel %vm1142, %v1405, %v1412
        %v1414 = vrot.slane %v1409, 4
        %v1416 = vshrl.u32 %v873, 16
        %v1418 = vrot.slane %v1416, 7
        %v1419 = vshll.u32 %v873, 16
        %v1421 = vor.u32 %v1418, %v1419
        %v1422 = vrot.slane %v1418, 4
        %v1424 = vshrl.u32 %v874, 16
        %v1426 = vrot.slane %v1424, 7
        %v1427 = vshll.u32 %v874, 16
        %v1429 = vor.u32 %v1426, %v1427
        %v1430 = vsel %vm1142, %v1422, %v1429
        %v1431 = vrot.slane %v1426, 4
        %v1433 = vshrl.u32 %v875, 16
        %v1435 = vrot.slane %v1433, 7
        %v1436 = vshll.u32 %v875, 16
        %v1438 = vor.u32 %v1435, %v1436
        %v1439 = vrot.slane %v1435, 4
        %v1441 = vshrl.u32 %v876, 16
        %v1443 = vrot.slane %v1441, 7
        %v1444 = vshll.u32 %v876, 16
        %v1446 = vor.u32 %v1443, %v1444
        %v1447 = vsel %vm1142, %v1439, %v1446
        %v1448 = vrot.slane %v1443, 4
        %v1450 = vshrl.u32 %v877, 16
        %v1452 = vrot.slane %v1450, 7
        %v1453 = vshll.u32 %v877, 16
        %v1455 = vor.u32 %v1452, %v1453
        %v1456 = vrot.slane %v1452, 4
        %v1458 = vshrl.u32 %v878, 16
        %v1460 = vrot.slane %v1458, 7
        %v1461 = vshll.u32 %v878, 16
        %v1463 = vor.u32 %v1460, %v1461
        %v1464 = vsel %vm1142, %v1456, %v1463
        %v1465 = vrot.slane %v1460, 4
        %v1467 = vshrl.u32 %v879, 16
        %v1469 = vrot.slane %v1467, 7
        %v1470 = vshll.u32 %v879, 16
        %v1472 = vor.u32 %v1469, %v1470
        %v1473 = vrot.slane %v1469, 4
        %v1475 = vshrl.u32 %v880, 16
        %v1477 = vrot.slane %v1475, 7
        %v1478 = vshll.u32 %v880, 16
        %v1480 = vor.u32 %v1477, %v1478
        %v1481 = vsel %vm1142, %v1473, %v1480
        %v1482 = vrot.slane %v1477, 4
        %v1484 = vshrl.u32 %v881, 16
        %v1486 = vrot.slane %v1484, 7
        %v1487 = vshll.u32 %v881, 16
        %v1489 = vor.u32 %v1486, %v1487
        %v1490 = vrot.slane %v1486, 4
        %v1492 = vshrl.u32 %v882, 16
        %v1494 = vrot.slane %v1492, 7
        %v1495 = vshll.u32 %v882, 16
        %v1497 = vor.u32 %v1494, %v1495
        %v1498 = vsel %vm1142, %v1490, %v1497
        %v1499 = vrot.slane %v1494, 4
        %v1501 = vshrl.u32 %v883, 16
        %v1503 = vrot.slane %v1501, 7
        %v1504 = vshll.u32 %v883, 16
        %v1506 = vor.u32 %v1503, %v1504
        %v1507 = vrot.slane %v1503, 4
        %v1509 = vshrl.u32 %v884, 16
        %v1511 = vrot.slane %v1509, 7
        %v1512 = vshll.u32 %v884, 16
        %v1514 = vor.u32 %v1511, %v1512
        %v1515 = vsel %vm1142, %v1507, %v1514
        %v1516 = vrot.slane %v1511, 4
        %v1518 = vshrl.u32 %v885, 16
        %v1520 = vrot.slane %v1518, 7
        %v1521 = vshll.u32 %v885, 16
        %v1523 = vor.u32 %v1520, %v1521
        %v1524 = vrot.slane %v1520, 4
        %v1526 = vshrl.u32 %v886, 16
        %v1528 = vrot.slane %v1526, 7
        %v1529 = vshll.u32 %v886, 16
        %v1531 = vor.u32 %v1528, %v1529
        %v1532 = vsel %vm1142, %v1524, %v1531
        %v1533 = vrot.slane %v1528, 4
        %v1535 = vshrl.u32 %v887, 16
        %v1537 = vrot.slane %v1535, 7
        %v1538 = vshll.u32 %v887, 16
        %v1540 = vor.u32 %v1537, %v1538
        %v1541 = vrot.slane %v1537, 4
        %v1543 = vshrl.u32 %v888, 16
        %v1545 = vrot.slane %v1543, 7
        %v1546 = vshll.u32 %v888, 16
        %v1548 = vor.u32 %v1545, %v1546
        %v1549 = vsel %vm1142, %v1541, %v1548
        %v1550 = vrot.slane %v1545, 4
        %v1552 = vshrl.u32 %v889, 16
        %v1554 = vrot.slane %v1552, 7
        %v1555 = vshll.u32 %v889, 16
        %v1557 = vor.u32 %v1554, %v1555
        %v1558 = vrot.slane %v1554, 4
        %v1560 = vshrl.u32 %v890, 16
        %v1562 = vrot.slane %v1560, 7
        %v1563 = vshll.u32 %v890, 16
        %v1565 = vor.u32 %v1562, %v1563
        %v1566 = vsel %vm1142, %v1558, %v1565
        %v1567 = vrot.slane %v1562, 4
        %v1569 = vshrl.u32 %v891, 16
        %v1571 = vrot.slane %v1569, 7
        %v1572 = vshll.u32 %v891, 16
        %v1574 = vor.u32 %v1571, %v1572
        %v1575 = vrot.slane %v1571, 4
        %v1577 = vshrl.u32 %v892, 16
        %v1579 = vrot.slane %v1577, 7
        %v1580 = vshll.u32 %v892, 16
        %v1582 = vor.u32 %v1579, %v1580
        %v1583 = vsel %vm1142, %v1575, %v1582
        %v1584 = vrot.slane %v1579, 4
        %v1586 = vshrl.u32 %v893, 16
        %v1588 = vrot.slane %v1586, 7
        %v1589 = vshll.u32 %v893, 16
        %v1591 = vor.u32 %v1588, %v1589
        %v1592 = vrot.slane %v1588, 4
        %v1594 = vshrl.u32 %v894, 16
        %v1596 = vrot.slane %v1594, 7
        %v1597 = vshll.u32 %v894, 16
        %v1599 = vor.u32 %v1596, %v1597
        %v1600 = vsel %vm1142, %v1592, %v1599
        %v1601 = vrot.slane %v1596, 4
        %v1603 = vshrl.u32 %v895, 16
        %v1605 = vrot.slane %v1603, 7
        %v1606 = vshll.u32 %v895, 16
        %v1608 = vor.u32 %v1605, %v1606
        %v1609 = vrot.slane %v1605, 4
        %v1611 = vshrl.u32 %v896, 16
        %v1613 = vrot.slane %v1611, 7
        %v1614 = vshll.u32 %v896, 16
        %v1616 = vor.u32 %v1613, %v1614
        %v1617 = vsel %vm1142, %v1609, %v1616
        %v1618 = vrot.slane %v1613, 4
        %v1620 = vshrl.u32 %v897, 16
        %v1622 = vrot.slane %v1620, 7
        %v1623 = vshll.u32 %v897, 16
        %v1625 = vor.u32 %v1622, %v1623
        %v1626 = vrot.slane %v1622, 4
        %v1628 = vshrl.u32 %v898, 16
        %v1630 = vrot.slane %v1628, 7
        %v1631 = vshll.u32 %v898, 16
        %v1633 = vor.u32 %v1630, %v1631
        %v1634 = vsel %vm1142, %v1626, %v1633
        %v1635 = vrot.slane %v1630, 4
        %v1637 = vshrl.u32 %v899, 16
        %v1639 = vrot.slane %v1637, 7
        %v1640 = vshll.u32 %v899, 16
        %v1642 = vor.u32 %v1639, %v1640
        %v1643 = vrot.slane %v1639, 4
        %v1645 = vshrl.u32 %v900, 16
        %v1647 = vrot.slane %v1645, 7
        %v1648 = vshll.u32 %v900, 16
        %v1650 = vor.u32 %v1647, %v1648
        %v1651 = vsel %vm1142, %v1643, %v1650
        %v1652 = vrot.slane %v1647, 4
        %v1654 = vshrl.u32 %v901, 16
        %v1656 = vrot.slane %v1654, 7
        %v1657 = vshll.u32 %v901, 16
        %v1659 = vor.u32 %v1656, %v1657
        %v1660 = vrot.slane %v1656, 4
        %v1662 = vshrl.u32 %v902, 16
        %v1664 = vrot.slane %v1662, 7
        %v1665 = vshll.u32 %v902, 16
        %v1667 = vor.u32 %v1664, %v1665
        %v1668 = vsel %vm1142, %v1660, %v1667
        %v1669 = vrot.slane %v1664, 4
        %v1671 = vshrl.u32 %v903, 16
        %v1673 = vrot.slane %v1671, 7
        %v1674 = vshll.u32 %v903, 16
        %v1676 = vor.u32 %v1673, %v1674
        %v1677 = vrot.slane %v1673, 4
        %v1679 = vshrl.u32 %v904, 16
        %v1681 = vrot.slane %v1679, 7
        %v1682 = vshll.u32 %v904, 16
        %v1684 = vor.u32 %v1681, %v1682
        %v1685 = vsel %vm1142, %v1677, %v1684
        %v1686 = vrot.slane %v1681, 4
        %s1783 = scalar_lea.vmem [#allocation2], 12
        %vm1784 = vcmask 257024
        %vm1785 = vmand %vm1784, %vm1031
        %v1786 = vld [vmem:[%s1783] sm:$0xf]
        %v1787 = vsel %vm1785, %v1149, %v1786
        %1788 = vst [vmem:[%s1783] sm:$0xf] %v1787
        %1789 = vst.msk [vmem:[%s1783 + $0x4] sm:$0xf] %vm905, %v1158
        %v1790 = vld [vmem:[%s1783 + $0x8] sm:$0x1]
        %v1791 = vsel %vm922, %v1159, %v1790
        %1792 = vst [vmem:[%s1783 + $0x8] sm:$0x1] %v1791
        %v1793 = vld [vmem:[%s1783 + $0xc] sm:$0xf]
        %v1794 = vsel %vm1785, %v1166, %v1793
        %1795 = vst [vmem:[%s1783 + $0xc] sm:$0xf] %v1794
        %1796 = vst.msk [vmem:[%s1783 + $0x10] sm:$0xf] %vm905, %v1175
        %v1797 = vld [vmem:[%s1783 + $0x14] sm:$0x1]
        %v1798 = vsel %vm922, %v1176, %v1797
        %1799 = vst [vmem:[%s1783 + $0x14] sm:$0x1] %v1798
        %v1800 = vld [vmem:[%s1783 + $0x18] sm:$0xf]
        %v1801 = vsel %vm1785, %v1183, %v1800
        %1802 = vst [vmem:[%s1783 + $0x18] sm:$0xf] %v1801
        %1803 = vst.msk [vmem:[%s1783 + $0x1c] sm:$0xf] %vm905, %v1192
        %v1804 = vld [vmem:[%s1783 + $0x20] sm:$0x1]
        %v1805 = vsel %vm922, %v1193, %v1804
        %1806 = vst [vmem:[%s1783 + $0x20] sm:$0x1] %v1805
        %v1807 = vld [vmem:[%s1783 + $0x24] sm:$0xf]
        %v1808 = vsel %vm1785, %v1200, %v1807
        %1809 = vst [vmem:[%s1783 + $0x24] sm:$0xf] %v1808
        %1810 = vst.msk [vmem:[%s1783 + $0x28] sm:$0xf] %vm905, %v1209
        %v1811 = vld [vmem:[%s1783 + $0x2c] sm:$0x1]
        %v1812 = vsel %vm922, %v1210, %v1811
        %1813 = vst [vmem:[%s1783 + $0x2c] sm:$0x1] %v1812
        %v1814 = vld [vmem:[%s1783 + $0x30] sm:$0xf]
        %v1815 = vsel %vm1785, %v1217, %v1814
        %1816 = vst [vmem:[%s1783 + $0x30] sm:$0xf] %v1815
        %1817 = vst.msk [vmem:[%s1783 + $0x34] sm:$0xf] %vm905, %v1226
        %v1818 = vld [vmem:[%s1783 + $0x38] sm:$0x1]
        %v1819 = vsel %vm922, %v1227, %v1818
        %1820 = vst [vmem:[%s1783 + $0x38] sm:$0x1] %v1819
        %v1821 = vld [vmem:[%s1783 + $0x3c] sm:$0xf]
        %v1822 = vsel %vm1785, %v1234, %v1821
        %1823 = vst [vmem:[%s1783 + $0x3c] sm:$0xf] %v1822
        %1824 = vst.msk [vmem:[%s1783 + $0x40] sm:$0xf] %vm905, %v1243
        %v1825 = vld [vmem:[%s1783 + $0x44] sm:$0x1]
        %v1826 = vsel %vm922, %v1244, %v1825
        %1827 = vst [vmem:[%s1783 + $0x44] sm:$0x1] %v1826
        %v1828 = vld [vmem:[%s1783 + $0x48] sm:$0xf]
        %v1829 = vsel %vm1785, %v1251, %v1828
        %1830 = vst [vmem:[%s1783 + $0x48] sm:$0xf] %v1829
        %1831 = vst.msk [vmem:[%s1783 + $0x4c] sm:$0xf] %vm905, %v1260
        %v1832 = vld [vmem:[%s1783 + $0x50] sm:$0x1]
        %v1833 = vsel %vm922, %v1261, %v1832
        %1834 = vst [vmem:[%s1783 + $0x50] sm:$0x1] %v1833
        %v1835 = vld [vmem:[%s1783 + $0x54] sm:$0xf]
        %v1836 = vsel %vm1785, %v1268, %v1835
        %1837 = vst [vmem:[%s1783 + $0x54] sm:$0xf] %v1836
        %1838 = vst.msk [vmem:[%s1783 + $0x58] sm:$0xf] %vm905, %v1277
        %v1839 = vld [vmem:[%s1783 + $0x5c] sm:$0x1]
        %v1840 = vsel %vm922, %v1278, %v1839
        %1841 = vst [vmem:[%s1783 + $0x5c] sm:$0x1] %v1840
        %v1842 = vld [vmem:[%s1783 + $0x60] sm:$0xf]
        %v1843 = vsel %vm1785, %v1285, %v1842
        %1844 = vst [vmem:[%s1783 + $0x60] sm:$0xf] %v1843
        %1845 = vst.msk [vmem:[%s1783 + $0x64] sm:$0xf] %vm905, %v1294
        %v1846 = vld [vmem:[%s1783 + $0x68] sm:$0x1]
        %v1847 = vsel %vm922, %v1295, %v1846
        %1848 = vst [vmem:[%s1783 + $0x68] sm:$0x1] %v1847
        %v1849 = vld [vmem:[%s1783 + $0x6c] sm:$0xf]
        %v1850 = vsel %vm1785, %v1302, %v1849
        %1851 = vst [vmem:[%s1783 + $0x6c] sm:$0xf] %v1850
        %1852 = vst.msk [vmem:[%s1783 + $0x70] sm:$0xf] %vm905, %v1311
        %v1853 = vld [vmem:[%s1783 + $0x74] sm:$0x1]
        %v1854 = vsel %vm922, %v1312, %v1853
        %1855 = vst [vmem:[%s1783 + $0x74] sm:$0x1] %v1854
        %v1856 = vld [vmem:[%s1783 + $0x78] sm:$0xf]
        %v1857 = vsel %vm1785, %v1319, %v1856
        %1858 = vst [vmem:[%s1783 + $0x78] sm:$0xf] %v1857
        %1859 = vst.msk [vmem:[%s1783 + $0x7c] sm:$0xf] %vm905, %v1328
        %v1860 = vld [vmem:[%s1783 + $0x80] sm:$0x1]
        %v1861 = vsel %vm922, %v1329, %v1860
        %1862 = vst [vmem:[%s1783 + $0x80] sm:$0x1] %v1861
        %v1863 = vld [vmem:[%s1783 + $0x84] sm:$0xf]
        %v1864 = vsel %vm1785, %v1336, %v1863
        %1865 = vst [vmem:[%s1783 + $0x84] sm:$0xf] %v1864
        %1866 = vst.msk [vmem:[%s1783 + $0x88] sm:$0xf] %vm905, %v1345
        %v1867 = vld [vmem:[%s1783 + $0x8c] sm:$0x1]
        %v1868 = vsel %vm922, %v1346, %v1867
        %1869 = vst [vmem:[%s1783 + $0x8c] sm:$0x1] %v1868
        %v1870 = vld [vmem:[%s1783 + $0x90] sm:$0xf]
        %v1871 = vsel %vm1785, %v1353, %v1870
        %1872 = vst [vmem:[%s1783 + $0x90] sm:$0xf] %v1871
        %1873 = vst.msk [vmem:[%s1783 + $0x94] sm:$0xf] %vm905, %v1362
        %v1874 = vld [vmem:[%s1783 + $0x98] sm:$0x1]
        %v1875 = vsel %vm922, %v1363, %v1874
        %1876 = vst [vmem:[%s1783 + $0x98] sm:$0x1] %v1875
        %v1877 = vld [vmem:[%s1783 + $0x9c] sm:$0xf]
        %v1878 = vsel %vm1785, %v1370, %v1877
        %1879 = vst [vmem:[%s1783 + $0x9c] sm:$0xf] %v1878
        %1880 = vst.msk [vmem:[%s1783 + $0xa0] sm:$0xf] %vm905, %v1379
        %v1881 = vld [vmem:[%s1783 + $0xa4] sm:$0x1]
        %v1882 = vsel %vm922, %v1380, %v1881
        %1883 = vst [vmem:[%s1783 + $0xa4] sm:$0x1] %v1882
        %v1884 = vld [vmem:[%s1783 + $0xa8] sm:$0xf]
        %v1885 = vsel %vm1785, %v1387, %v1884
        %1886 = vst [vmem:[%s1783 + $0xa8] sm:$0xf] %v1885
        %1887 = vst.msk [vmem:[%s1783 + $0xac] sm:$0xf] %vm905, %v1396
        %v1888 = vld [vmem:[%s1783 + $0xb0] sm:$0x1]
        %v1889 = vsel %vm922, %v1397, %v1888
        %1890 = vst [vmem:[%s1783 + $0xb0] sm:$0x1] %v1889
        %v1891 = vld [vmem:[%s1783 + $0xb4] sm:$0xf]
        %v1892 = vsel %vm1785, %v1404, %v1891
        %1893 = vst [vmem:[%s1783 + $0xb4] sm:$0xf] %v1892
        %1894 = vst.msk [vmem:[%s1783 + $0xb8] sm:$0xf] %vm905, %v1413
        %v1895 = vld [vmem:[%s1783 + $0xbc] sm:$0x1]
        %v1896 = vsel %vm922, %v1414, %v1895
        %1897 = vst [vmem:[%s1783 + $0xbc] sm:$0x1] %v1896
        %v1898 = vld [vmem:[%s1783 + $0xd8] sm:$0xf]
        %v1899 = vsel %vm1785, %v1421, %v1898
        %1900 = vst [vmem:[%s1783 + $0xd8] sm:$0xf] %v1899
        %1901 = vst.msk [vmem:[%s1783 + $0xdc] sm:$0xf] %vm905, %v1430
        %v1902 = vld [vmem:[%s1783 + $0xe0] sm:$0x1]
        %v1903 = vsel %vm922, %v1431, %v1902
        %1904 = vst [vmem:[%s1783 + $0xe0] sm:$0x1] %v1903
        %v1905 = vld [vmem:[%s1783 + $0xe4] sm:$0xf]
        %v1906 = vsel %vm1785, %v1438, %v1905
        %1907 = vst [vmem:[%s1783 + $0xe4] sm:$0xf] %v1906
        %1908 = vst.msk [vmem:[%s1783 + $0xe8] sm:$0xf] %vm905, %v1447
        %v1909 = vld [vmem:[%s1783 + $0xec] sm:$0x1]
        %v1910 = vsel %vm922, %v1448, %v1909
        %1911 = vst [vmem:[%s1783 + $0xec] sm:$0x1] %v1910
        %v1912 = vld [vmem:[%s1783 + $0xf0] sm:$0xf]
        %v1913 = vsel %vm1785, %v1455, %v1912
        %1914 = vst [vmem:[%s1783 + $0xf0] sm:$0xf] %v1913
        %1915 = vst.msk [vmem:[%s1783 + $0xf4] sm:$0xf] %vm905, %v1464
        %v1916 = vld [vmem:[%s1783 + $0xf8] sm:$0x1]
        %v1917 = vsel %vm922, %v1465, %v1916
        %1918 = vst [vmem:[%s1783 + $0xf8] sm:$0x1] %v1917
        %v1919 = vld [vmem:[%s1783 + $0xfc] sm:$0xf]
        %v1920 = vsel %vm1785, %v1472, %v1919
        %1921 = vst [vmem:[%s1783 + $0xfc] sm:$0xf] %v1920
        %1922 = vst.msk [vmem:[%s1783 + $0x100] sm:$0xf] %vm905, %v1481
        %v1923 = vld [vmem:[%s1783 + $0x104] sm:$0x1]
        %v1924 = vsel %vm922, %v1482, %v1923
        %1925 = vst [vmem:[%s1783 + $0x104] sm:$0x1] %v1924
        %v1926 = vld [vmem:[%s1783 + $0x108] sm:$0xf]
        %v1927 = vsel %vm1785, %v1489, %v1926
        %1928 = vst [vmem:[%s1783 + $0x108] sm:$0xf] %v1927
        %1929 = vst.msk [vmem:[%s1783 + $0x10c] sm:$0xf] %vm905, %v1498
        %v1930 = vld [vmem:[%s1783 + $0x110] sm:$0x1]
        %v1931 = vsel %vm922, %v1499, %v1930
        %1932 = vst [vmem:[%s1783 + $0x110] sm:$0x1] %v1931
        %v1933 = vld [vmem:[%s1783 + $0x114] sm:$0xf]
        %v1934 = vsel %vm1785, %v1506, %v1933
        %1935 = vst [vmem:[%s1783 + $0x114] sm:$0xf] %v1934
        %1936 = vst.msk [vmem:[%s1783 + $0x118] sm:$0xf] %vm905, %v1515
        %v1937 = vld [vmem:[%s1783 + $0x11c] sm:$0x1]
        %v1938 = vsel %vm922, %v1516, %v1937
        %1939 = vst [vmem:[%s1783 + $0x11c] sm:$0x1] %v1938
        %v1940 = vld [vmem:[%s1783 + $0x120] sm:$0xf]
        %v1941 = vsel %vm1785, %v1523, %v1940
        %1942 = vst [vmem:[%s1783 + $0x120] sm:$0xf] %v1941
        %1943 = vst.msk [vmem:[%s1783 + $0x124] sm:$0xf] %vm905, %v1532
        %v1944 = vld [vmem:[%s1783 + $0x128] sm:$0x1]
        %v1945 = vsel %vm922, %v1533, %v1944
        %1946 = vst [vmem:[%s1783 + $0x128] sm:$0x1] %v1945
        %v1947 = vld [vmem:[%s1783 + $0x12c] sm:$0xf]
        %v1948 = vsel %vm1785, %v1540, %v1947
        %1949 = vst [vmem:[%s1783 + $0x12c] sm:$0xf] %v1948
        %1950 = vst.msk [vmem:[%s1783 + $0x130] sm:$0xf] %vm905, %v1549
        %v1951 = vld [vmem:[%s1783 + $0x134] sm:$0x1]
        %v1952 = vsel %vm922, %v1550, %v1951
        %1953 = vst [vmem:[%s1783 + $0x134] sm:$0x1] %v1952
        %v1954 = vld [vmem:[%s1783 + $0x138] sm:$0xf]
        %v1955 = vsel %vm1785, %v1557, %v1954
        %1956 = vst [vmem:[%s1783 + $0x138] sm:$0xf] %v1955
        %1957 = vst.msk [vmem:[%s1783 + $0x13c] sm:$0xf] %vm905, %v1566
        %v1958 = vld [vmem:[%s1783 + $0x140] sm:$0x1]
        %v1959 = vsel %vm922, %v1567, %v1958
        %1960 = vst [vmem:[%s1783 + $0x140] sm:$0x1] %v1959
        %v1961 = vld [vmem:[%s1783 + $0x144] sm:$0xf]
        %v1962 = vsel %vm1785, %v1574, %v1961
        %1963 = vst [vmem:[%s1783 + $0x144] sm:$0xf] %v1962
        %1964 = vst.msk [vmem:[%s1783 + $0x148] sm:$0xf] %vm905, %v1583
        %v1965 = vld [vmem:[%s1783 + $0x14c] sm:$0x1]
        %v1966 = vsel %vm922, %v1584, %v1965
        %1967 = vst [vmem:[%s1783 + $0x14c] sm:$0x1] %v1966
        %v1968 = vld [vmem:[%s1783 + $0x150] sm:$0xf]
        %v1969 = vsel %vm1785, %v1591, %v1968
        %1970 = vst [vmem:[%s1783 + $0x150] sm:$0xf] %v1969
        %1971 = vst.msk [vmem:[%s1783 + $0x154] sm:$0xf] %vm905, %v1600
        %v1972 = vld [vmem:[%s1783 + $0x158] sm:$0x1]
        %v1973 = vsel %vm922, %v1601, %v1972
        %1974 = vst [vmem:[%s1783 + $0x158] sm:$0x1] %v1973
        %v1975 = vld [vmem:[%s1783 + $0x15c] sm:$0xf]
        %v1976 = vsel %vm1785, %v1608, %v1975
        %1977 = vst [vmem:[%s1783 + $0x15c] sm:$0xf] %v1976
        %1978 = vst.msk [vmem:[%s1783 + $0x160] sm:$0xf] %vm905, %v1617
        %v1979 = vld [vmem:[%s1783 + $0x164] sm:$0x1]
        %v1980 = vsel %vm922, %v1618, %v1979
        %1981 = vst [vmem:[%s1783 + $0x164] sm:$0x1] %v1980
        %v1982 = vld [vmem:[%s1783 + $0x168] sm:$0xf]
        %v1983 = vsel %vm1785, %v1625, %v1982
        %1984 = vst [vmem:[%s1783 + $0x168] sm:$0xf] %v1983
        %1985 = vst.msk [vmem:[%s1783 + $0x16c] sm:$0xf] %vm905, %v1634
        %v1986 = vld [vmem:[%s1783 + $0x170] sm:$0x1]
        %v1987 = vsel %vm922, %v1635, %v1986
        %1988 = vst [vmem:[%s1783 + $0x170] sm:$0x1] %v1987
        %v1989 = vld [vmem:[%s1783 + $0x174] sm:$0xf]
        %v1990 = vsel %vm1785, %v1642, %v1989
        %1991 = vst [vmem:[%s1783 + $0x174] sm:$0xf] %v1990
        %1992 = vst.msk [vmem:[%s1783 + $0x178] sm:$0xf] %vm905, %v1651
        %v1993 = vld [vmem:[%s1783 + $0x17c] sm:$0x1]
        %v1994 = vsel %vm922, %v1652, %v1993
        %1995 = vst [vmem:[%s1783 + $0x17c] sm:$0x1] %v1994
        %v1996 = vld [vmem:[%s1783 + $0x180] sm:$0xf]
        %v1997 = vsel %vm1785, %v1659, %v1996
        %1998 = vst [vmem:[%s1783 + $0x180] sm:$0xf] %v1997
        %1999 = vst.msk [vmem:[%s1783 + $0x184] sm:$0xf] %vm905, %v1668
        %v2000 = vld [vmem:[%s1783 + $0x188] sm:$0x1]
        %v2001 = vsel %vm922, %v1669, %v2000
        %2002 = vst [vmem:[%s1783 + $0x188] sm:$0x1] %v2001
        %v2003 = vld [vmem:[%s1783 + $0x18c] sm:$0xf]
        %v2004 = vsel %vm1785, %v1676, %v2003
        %2005 = vst [vmem:[%s1783 + $0x18c] sm:$0xf] %v2004
        %2006 = vst.msk [vmem:[%s1783 + $0x190] sm:$0xf] %vm905, %v1685
        %v2007 = vld [vmem:[%s1783 + $0x194] sm:$0x1]
        %v2008 = vsel %vm922, %v1686, %v2007
        %2009 = vst [vmem:[%s1783 + $0x194] sm:$0x1] %v2008
        %v2010 = vld [vmem:[#allocation2] sm:$0xf]
        %v2011 = vld [vmem:[#allocation2 + $0x4] sm:$0xf]
        %v2012 = vld [vmem:[#allocation2 + $0xc] sm:$0xf]
        %v2013 = vld [vmem:[#allocation2 + $0x10] sm:$0xf]
        %v2014 = vld [vmem:[#allocation2 + $0x18] sm:$0xf]
        %v2015 = vld [vmem:[#allocation2 + $0x1c] sm:$0xf]
        %v2016 = vld [vmem:[#allocation2 + $0x24] sm:$0xf]
        %v2017 = vld [vmem:[#allocation2 + $0x28] sm:$0xf]
        %v2018 = vld [vmem:[#allocation2 + $0x30] sm:$0xf]
        %v2019 = vld [vmem:[#allocation2 + $0x34] sm:$0xf]
        %v2020 = vld [vmem:[#allocation2 + $0x3c] sm:$0xf]
        %v2021 = vld [vmem:[#allocation2 + $0x40] sm:$0xf]
        %v2022 = vld [vmem:[#allocation2 + $0x48] sm:$0xf]
        %v2023 = vld [vmem:[#allocation2 + $0x4c] sm:$0xf]
        %v2024 = vld [vmem:[#allocation2 + $0x54] sm:$0xf]
        %v2025 = vld [vmem:[#allocation2 + $0x58] sm:$0xf]
        %v2026 = vld [vmem:[#allocation2 + $0x60] sm:$0xf]
        %v2027 = vld [vmem:[#allocation2 + $0x64] sm:$0xf]
        %v2028 = vld [vmem:[#allocation2 + $0x6c] sm:$0xf]
        %v2029 = vld [vmem:[#allocation2 + $0x70] sm:$0xf]
        %v2030 = vld [vmem:[#allocation2 + $0x78] sm:$0xf]
        %v2031 = vld [vmem:[#allocation2 + $0x7c] sm:$0xf]
        %v2032 = vld [vmem:[#allocation2 + $0x84] sm:$0xf]
        %v2033 = vld [vmem:[#allocation2 + $0x88] sm:$0xf]
        %v2034 = vld [vmem:[#allocation2 + $0x90] sm:$0xf]
        %v2035 = vld [vmem:[#allocation2 + $0x94] sm:$0xf]
        %v2036 = vld [vmem:[#allocation2 + $0x9c] sm:$0xf]
        %v2037 = vld [vmem:[#allocation2 + $0xa0] sm:$0xf]
        %v2038 = vld [vmem:[#allocation2 + $0xa8] sm:$0xf]
        %v2039 = vld [vmem:[#allocation2 + $0xac] sm:$0xf]
        %v2040 = vld [vmem:[#allocation2 + $0xb4] sm:$0xf]
        %v2041 = vld [vmem:[#allocation2 + $0xb8] sm:$0xf]
        %v2042 = vld [vmem:[#allocation2 + $0xd8] sm:$0xf]
        %v2043 = vld [vmem:[#allocation2 + $0xdc] sm:$0xf]
        %v2044 = vld [vmem:[#allocation2 + $0xe4] sm:$0xf]
        %v2045 = vld [vmem:[#allocation2 + $0xe8] sm:$0xf]
        %v2046 = vld [vmem:[#allocation2 + $0xf0] sm:$0xf]
        %v2047 = vld [vmem:[#allocation2 + $0xf4] sm:$0xf]
        %v2048 = vld [vmem:[#allocation2 + $0xfc] sm:$0xf]
        %v2049 = vld [vmem:[#allocation2 + $0x100] sm:$0xf]
        %v2050 = vld [vmem:[#allocation2 + $0x108] sm:$0xf]
        %v2051 = vld [vmem:[#allocation2 + $0x10c] sm:$0xf]
        %v2052 = vld [vmem:[#allocation2 + $0x114] sm:$0xf]
        %v2053 = vld [vmem:[#allocation2 + $0x118] sm:$0xf]
        %v2054 = vld [vmem:[#allocation2 + $0x120] sm:$0xf]
        %v2055 = vld [vmem:[#allocation2 + $0x124] sm:$0xf]
        %v2056 = vld [vmem:[#allocation2 + $0x12c] sm:$0xf]
        %v2057 = vld [vmem:[#allocation2 + $0x130] sm:$0xf]
        %v2058 = vld [vmem:[#allocation2 + $0x138] sm:$0xf]
        %v2059 = vld [vmem:[#allocation2 + $0x13c] sm:$0xf]
        %v2060 = vld [vmem:[#allocation2 + $0x144] sm:$0xf]
        %v2061 = vld [vmem:[#allocation2 + $0x148] sm:$0xf]
        %v2062 = vld [vmem:[#allocation2 + $0x150] sm:$0xf]
        %v2063 = vld [vmem:[#allocation2 + $0x154] sm:$0xf]
        %v2064 = vld [vmem:[#allocation2 + $0x15c] sm:$0xf]
        %v2065 = vld [vmem:[#allocation2 + $0x160] sm:$0xf]
        %v2066 = vld [vmem:[#allocation2 + $0x168] sm:$0xf]
        %v2067 = vld [vmem:[#allocation2 + $0x16c] sm:$0xf]
        %v2068 = vld [vmem:[#allocation2 + $0x174] sm:$0xf]
        %v2069 = vld [vmem:[#allocation2 + $0x178] sm:$0xf]
        %v2070 = vld [vmem:[#allocation2 + $0x180] sm:$0xf]
        %v2071 = vld [vmem:[#allocation2 + $0x184] sm:$0xf]
        %v2072 = vld [vmem:[#allocation2 + $0x18c] sm:$0xf]
        %v2073 = vld [vmem:[#allocation2 + $0x190] sm:$0xf]
        %v2074 = vld [vmem:[#allocation2 + $0x8] sm:$0x1]
        %v2075 = vld [vmem:[#allocation2 + $0x14] sm:$0x1]
        %v2076 = vld [vmem:[#allocation2 + $0x20] sm:$0x1]
        %v2077 = vld [vmem:[#allocation2 + $0x2c] sm:$0x1]
        %v2078 = vld [vmem:[#allocation2 + $0x38] sm:$0x1]
        %v2079 = vld [vmem:[#allocation2 + $0x44] sm:$0x1]
        %v2080 = vld [vmem:[#allocation2 + $0x50] sm:$0x1]
        %v2081 = vld [vmem:[#allocation2 + $0x5c] sm:$0x1]
        %v2082 = vld [vmem:[#allocation2 + $0x68] sm:$0x1]
        %v2083 = vld [vmem:[#allocation2 + $0x74] sm:$0x1]
        %v2084 = vld [vmem:[#allocation2 + $0x80] sm:$0x1]
        %v2085 = vld [vmem:[#allocation2 + $0x8c] sm:$0x1]
        %v2086 = vld [vmem:[#allocation2 + $0x98] sm:$0x1]
        %v2087 = vld [vmem:[#allocation2 + $0xa4] sm:$0x1]
        %v2088 = vld [vmem:[#allocation2 + $0xb0] sm:$0x1]
        %v2089 = vld [vmem:[#allocation2 + $0xbc] sm:$0x1]
        %v2090 = vld [vmem:[#allocation2 + $0xe0] sm:$0x1]
        %v2091 = vld [vmem:[#allocation2 + $0xec] sm:$0x1]
        %v2092 = vld [vmem:[#allocation2 + $0xf8] sm:$0x1]
        %v2093 = vld [vmem:[#allocation2 + $0x104] sm:$0x1]
        %v2094 = vld [vmem:[#allocation2 + $0x110] sm:$0x1]
        %v2095 = vld [vmem:[#allocation2 + $0x11c] sm:$0x1]
        %v2096 = vld [vmem:[#allocation2 + $0x128] sm:$0x1]
        %v2097 = vld [vmem:[#allocation2 + $0x134] sm:$0x1]
        %v2098 = vld [vmem:[#allocation2 + $0x140] sm:$0x1]
        %v2099 = vld [vmem:[#allocation2 + $0x14c] sm:$0x1]
        %v2100 = vld [vmem:[#allocation2 + $0x158] sm:$0x1]
        %v2101 = vld [vmem:[#allocation2 + $0x164] sm:$0x1]
        %v2102 = vld [vmem:[#allocation2 + $0x170] sm:$0x1]
        %v2103 = vld [vmem:[#allocation2 + $0x17c] sm:$0x1]
        %v2104 = vld [vmem:[#allocation2 + $0x188] sm:$0x1]
        %v2105 = vld [vmem:[#allocation2 + $0x194] sm:$0x1]
        %v2106 = vld [vmem:[#allocation2] sm:$0xe]
        %v2107 = vld [vmem:[#allocation2 + $0xc] sm:$0xe]
        %v2108 = vld [vmem:[#allocation2 + $0x18] sm:$0xe]
        %v2109 = vld [vmem:[#allocation2 + $0x24] sm:$0xe]
        %v2110 = vld [vmem:[#allocation2 + $0x30] sm:$0xe]
        %v2111 = vld [vmem:[#allocation2 + $0x3c] sm:$0xe]
        %v2112 = vld [vmem:[#allocation2 + $0x48] sm:$0xe]
        %v2113 = vld [vmem:[#allocation2 + $0x54] sm:$0xe]
        %v2114 = vld [vmem:[#allocation2 + $0x60] sm:$0xe]
        %v2115 = vld [vmem:[#allocation2 + $0x6c] sm:$0xe]
        %v2116 = vld [vmem:[#allocation2 + $0x78] sm:$0xe]
        %v2117 = vld [vmem:[#allocation2 + $0x84] sm:$0xe]
        %v2118 = vld [vmem:[#allocation2 + $0x90] sm:$0xe]
        %v2119 = vld [vmem:[#allocation2 + $0x9c] sm:$0xe]
        %v2120 = vld [vmem:[#allocation2 + $0xa8] sm:$0xe]
        %v2121 = vld [vmem:[#allocation2 + $0xb4] sm:$0xe]
        %v2122 = vld [vmem:[#allocation2 + $0xd8] sm:$0xe]
        %v2123 = vld [vmem:[#allocation2 + $0xe4] sm:$0xe]
        %v2124 = vld [vmem:[#allocation2 + $0xf0] sm:$0xe]
        %v2125 = vld [vmem:[#allocation2 + $0xfc] sm:$0xe]
        %v2126 = vld [vmem:[#allocation2 + $0x108] sm:$0xe]
        %v2127 = vld [vmem:[#allocation2 + $0x114] sm:$0xe]
        %v2128 = vld [vmem:[#allocation2 + $0x120] sm:$0xe]
        %v2129 = vld [vmem:[#allocation2 + $0x12c] sm:$0xe]
        %v2130 = vld [vmem:[#allocation2 + $0x138] sm:$0xe]
        %v2131 = vld [vmem:[#allocation2 + $0x144] sm:$0xe]
        %v2132 = vld [vmem:[#allocation2 + $0x150] sm:$0xe]
        %v2133 = vld [vmem:[#allocation2 + $0x15c] sm:$0xe]
        %v2134 = vld [vmem:[#allocation2 + $0x168] sm:$0xe]
        %v2135 = vld [vmem:[#allocation2 + $0x174] sm:$0xe]
        %v2136 = vld [vmem:[#allocation2 + $0x180] sm:$0xe]
        %v2137 = vld [vmem:[#allocation2 + $0x18c] sm:$0xe]
        %v2138 = vld [vmem:[%s1783] sm:$0xf]
        %v2139 = vld [vmem:[%s1783 + $0x4] sm:$0xf]
        %v2140 = vld [vmem:[%s1783 + $0xc] sm:$0xf]
        %v2141 = vld [vmem:[%s1783 + $0x10] sm:$0xf]
        %v2142 = vld [vmem:[%s1783 + $0x18] sm:$0xf]
        %v2143 = vld [vmem:[%s1783 + $0x1c] sm:$0xf]
        %v2144 = vld [vmem:[%s1783 + $0x24] sm:$0xf]
        %v2145 = vld [vmem:[%s1783 + $0x28] sm:$0xf]
        %v2146 = vld [vmem:[%s1783 + $0x30] sm:$0xf]
        %v2147 = vld [vmem:[%s1783 + $0x34] sm:$0xf]
        %v2148 = vld [vmem:[%s1783 + $0x3c] sm:$0xf]
        %v2149 = vld [vmem:[%s1783 + $0x40] sm:$0xf]
        %v2150 = vld [vmem:[%s1783 + $0x48] sm:$0xf]
        %v2151 = vld [vmem:[%s1783 + $0x4c] sm:$0xf]
        %v2152 = vld [vmem:[%s1783 + $0x54] sm:$0xf]
        %v2153 = vld [vmem:[%s1783 + $0x58] sm:$0xf]
        %v2154 = vld [vmem:[%s1783 + $0x60] sm:$0xf]
        %v2155 = vld [vmem:[%s1783 + $0x64] sm:$0xf]
        %v2156 = vld [vmem:[%s1783 + $0x6c] sm:$0xf]
        %v2157 = vld [vmem:[%s1783 + $0x70] sm:$0xf]
        %v2158 = vld [vmem:[%s1783 + $0x78] sm:$0xf]
        %v2159 = vld [vmem:[%s1783 + $0x7c] sm:$0xf]
        %v2160 = vld [vmem:[%s1783 + $0x84] sm:$0xf]
        %v2161 = vld [vmem:[%s1783 + $0x88] sm:$0xf]
        %v2162 = vld [vmem:[%s1783 + $0x90] sm:$0xf]
        %v2163 = vld [vmem:[%s1783 + $0x94] sm:$0xf]
        %v2164 = vld [vmem:[%s1783 + $0x9c] sm:$0xf]
        %v2165 = vld [vmem:[%s1783 + $0xa0] sm:$0xf]
        %v2166 = vld [vmem:[%s1783 + $0xa8] sm:$0xf]
        %v2167 = vld [vmem:[%s1783 + $0xac] sm:$0xf]
        %v2168 = vld [vmem:[%s1783 + $0xb4] sm:$0xf]
        %v2169 = vld [vmem:[%s1783 + $0xb8] sm:$0xf]
        %v2170 = vld [vmem:[%s1783 + $0xd8] sm:$0xf]
        %v2171 = vld [vmem:[%s1783 + $0xdc] sm:$0xf]
        %v2172 = vld [vmem:[%s1783 + $0xe4] sm:$0xf]
        %v2173 = vld [vmem:[%s1783 + $0xe8] sm:$0xf]
        %v2174 = vld [vmem:[%s1783 + $0xf0] sm:$0xf]
        %v2175 = vld [vmem:[%s1783 + $0xf4] sm:$0xf]
        %v2176 = vld [vmem:[%s1783 + $0xfc] sm:$0xf]
        %v2177 = vld [vmem:[%s1783 + $0x100] sm:$0xf]
        %v2178 = vld [vmem:[%s1783 + $0x108] sm:$0xf]
        %v2179 = vld [vmem:[%s1783 + $0x10c] sm:$0xf]
        %v2180 = vld [vmem:[%s1783 + $0x114] sm:$0xf]
        %v2181 = vld [vmem:[%s1783 + $0x118] sm:$0xf]
        %v2182 = vld [vmem:[%s1783 + $0x120] sm:$0xf]
        %v2183 = vld [vmem:[%s1783 + $0x124] sm:$0xf]
        %v2184 = vld [vmem:[%s1783 + $0x12c] sm:$0xf]
        %v2185 = vld [vmem:[%s1783 + $0x130] sm:$0xf]
        %v2186 = vld [vmem:[%s1783 + $0x138] sm:$0xf]
        %v2187 = vld [vmem:[%s1783 + $0x13c] sm:$0xf]
        %v2188 = vld [vmem:[%s1783 + $0x144] sm:$0xf]
        %v2189 = vld [vmem:[%s1783 + $0x148] sm:$0xf]
        %v2190 = vld [vmem:[%s1783 + $0x150] sm:$0xf]
        %v2191 = vld [vmem:[%s1783 + $0x154] sm:$0xf]
        %v2192 = vld [vmem:[%s1783 + $0x15c] sm:$0xf]
        %v2193 = vld [vmem:[%s1783 + $0x160] sm:$0xf]
        %v2194 = vld [vmem:[%s1783 + $0x168] sm:$0xf]
        %v2195 = vld [vmem:[%s1783 + $0x16c] sm:$0xf]
        %v2196 = vld [vmem:[%s1783 + $0x174] sm:$0xf]
        %v2197 = vld [vmem:[%s1783 + $0x178] sm:$0xf]
        %v2198 = vld [vmem:[%s1783 + $0x180] sm:$0xf]
        %v2199 = vld [vmem:[%s1783 + $0x184] sm:$0xf]
        %v2200 = vld [vmem:[%s1783 + $0x18c] sm:$0xf]
        %v2201 = vld [vmem:[%s1783 + $0x190] sm:$0xf]
        %v2202 = vld [vmem:[%s1783 + $0x8] sm:$0x1]
        %v2203 = vld [vmem:[%s1783 + $0x14] sm:$0x1]
        %v2204 = vld [vmem:[%s1783 + $0x20] sm:$0x1]
        %v2205 = vld [vmem:[%s1783 + $0x2c] sm:$0x1]
        %v2206 = vld [vmem:[%s1783 + $0x38] sm:$0x1]
        %v2207 = vld [vmem:[%s1783 + $0x44] sm:$0x1]
        %v2208 = vld [vmem:[%s1783 + $0x50] sm:$0x1]
        %v2209 = vld [vmem:[%s1783 + $0x5c] sm:$0x1]
        %v2210 = vld [vmem:[%s1783 + $0x68] sm:$0x1]
        %v2211 = vld [vmem:[%s1783 + $0x74] sm:$0x1]
        %v2212 = vld [vmem:[%s1783 + $0x80] sm:$0x1]
        %v2213 = vld [vmem:[%s1783 + $0x8c] sm:$0x1]
        %v2214 = vld [vmem:[%s1783 + $0x98] sm:$0x1]
        %v2215 = vld [vmem:[%s1783 + $0xa4] sm:$0x1]
        %v2216 = vld [vmem:[%s1783 + $0xb0] sm:$0x1]
        %v2217 = vld [vmem:[%s1783 + $0xbc] sm:$0x1]
        %v2218 = vld [vmem:[%s1783 + $0xe0] sm:$0x1]
        %v2219 = vld [vmem:[%s1783 + $0xec] sm:$0x1]
        %v2220 = vld [vmem:[%s1783 + $0xf8] sm:$0x1]
        %v2221 = vld [vmem:[%s1783 + $0x104] sm:$0x1]
        %v2222 = vld [vmem:[%s1783 + $0x110] sm:$0x1]
        %v2223 = vld [vmem:[%s1783 + $0x11c] sm:$0x1]
        %v2224 = vld [vmem:[%s1783 + $0x128] sm:$0x1]
        %v2225 = vld [vmem:[%s1783 + $0x134] sm:$0x1]
        %v2226 = vld [vmem:[%s1783 + $0x140] sm:$0x1]
        %v2227 = vld [vmem:[%s1783 + $0x14c] sm:$0x1]
        %v2228 = vld [vmem:[%s1783 + $0x158] sm:$0x1]
        %v2229 = vld [vmem:[%s1783 + $0x164] sm:$0x1]
        %v2230 = vld [vmem:[%s1783 + $0x170] sm:$0x1]
        %v2231 = vld [vmem:[%s1783 + $0x17c] sm:$0x1]
        %v2232 = vld [vmem:[%s1783 + $0x188] sm:$0x1]
        %v2233 = vld [vmem:[%s1783 + $0x194] sm:$0x1]
        %v2234 = vld [vmem:[%s1783] sm:$0xe]
        %v2235 = vld [vmem:[%s1783 + $0xc] sm:$0xe]
        %v2236 = vld [vmem:[%s1783 + $0x18] sm:$0xe]
        %v2237 = vld [vmem:[%s1783 + $0x24] sm:$0xe]
        %v2238 = vld [vmem:[%s1783 + $0x30] sm:$0xe]
        %v2239 = vld [vmem:[%s1783 + $0x3c] sm:$0xe]
        %v2240 = vld [vmem:[%s1783 + $0x48] sm:$0xe]
        %v2241 = vld [vmem:[%s1783 + $0x54] sm:$0xe]
        %v2242 = vld [vmem:[%s1783 + $0x60] sm:$0xe]
        %v2243 = vld [vmem:[%s1783 + $0x6c] sm:$0xe]
        %v2244 = vld [vmem:[%s1783 + $0x78] sm:$0xe]
        %v2245 = vld [vmem:[%s1783 + $0x84] sm:$0xe]
        %v2246 = vld [vmem:[%s1783 + $0x90] sm:$0xe]
        %v2247 = vld [vmem:[%s1783 + $0x9c] sm:$0xe]
        %v2248 = vld [vmem:[%s1783 + $0xa8] sm:$0xe]
        %v2249 = vld [vmem:[%s1783 + $0xb4] sm:$0xe]
        %v2250 = vld [vmem:[%s1783 + $0xd8] sm:$0xe]
        %v2251 = vld [vmem:[%s1783 + $0xe4] sm:$0xe]
        %v2252 = vld [vmem:[%s1783 + $0xf0] sm:$0xe]
        %v2253 = vld [vmem:[%s1783 + $0xfc] sm:$0xe]
        %v2254 = vld [vmem:[%s1783 + $0x108] sm:$0xe]
        %v2255 = vld [vmem:[%s1783 + $0x114] sm:$0xe]
        %v2256 = vld [vmem:[%s1783 + $0x120] sm:$0xe]
        %v2257 = vld [vmem:[%s1783 + $0x12c] sm:$0xe]
        %v2258 = vld [vmem:[%s1783 + $0x138] sm:$0xe]
        %v2259 = vld [vmem:[%s1783 + $0x144] sm:$0xe]
        %v2260 = vld [vmem:[%s1783 + $0x150] sm:$0xe]
        %v2261 = vld [vmem:[%s1783 + $0x15c] sm:$0xe]
        %v2262 = vld [vmem:[%s1783 + $0x168] sm:$0xe]
        %v2263 = vld [vmem:[%s1783 + $0x174] sm:$0xe]
        %v2264 = vld [vmem:[%s1783 + $0x180] sm:$0xe]
        %v2265 = vld [vmem:[%s1783 + $0x18c] sm:$0xe]
        %s2266 = scalar_lea.vmem [#allocation2], 24
        %v2267 = vld [vmem:[%s2266] sm:$0xf]
        %v2268 = vld [vmem:[%s2266 + $0x4] sm:$0xf]
        %v2269 = vld [vmem:[%s2266 + $0xc] sm:$0xf]
        %v2270 = vld [vmem:[%s2266 + $0x10] sm:$0xf]
        %v2271 = vld [vmem:[%s2266 + $0x18] sm:$0xf]
        %v2272 = vld [vmem:[%s2266 + $0x1c] sm:$0xf]
        %v2273 = vld [vmem:[%s2266 + $0x24] sm:$0xf]
        %v2274 = vld [vmem:[%s2266 + $0x28] sm:$0xf]
        %v2275 = vld [vmem:[%s2266 + $0x30] sm:$0xf]
        %v2276 = vld [vmem:[%s2266 + $0x34] sm:$0xf]
        %v2277 = vld [vmem:[%s2266 + $0x3c] sm:$0xf]
        %v2278 = vld [vmem:[%s2266 + $0x40] sm:$0xf]
        %v2279 = vld [vmem:[%s2266 + $0x48] sm:$0xf]
        %v2280 = vld [vmem:[%s2266 + $0x4c] sm:$0xf]
        %v2281 = vld [vmem:[%s2266 + $0x54] sm:$0xf]
        %v2282 = vld [vmem:[%s2266 + $0x58] sm:$0xf]
        %v2283 = vld [vmem:[%s2266 + $0x60] sm:$0xf]
        %v2284 = vld [vmem:[%s2266 + $0x64] sm:$0xf]
        %v2285 = vld [vmem:[%s2266 + $0x6c] sm:$0xf]
        %v2286 = vld [vmem:[%s2266 + $0x70] sm:$0xf]
        %v2287 = vld [vmem:[%s2266 + $0x78] sm:$0xf]
        %v2288 = vld [vmem:[%s2266 + $0x7c] sm:$0xf]
        %v2289 = vld [vmem:[%s2266 + $0x84] sm:$0xf]
        %v2290 = vld [vmem:[%s2266 + $0x88] sm:$0xf]
        %v2291 = vld [vmem:[%s2266 + $0x90] sm:$0xf]
        %v2292 = vld [vmem:[%s2266 + $0x94] sm:$0xf]
        %v2293 = vld [vmem:[%s2266 + $0x9c] sm:$0xf]
        %v2294 = vld [vmem:[%s2266 + $0xa0] sm:$0xf]
        %v2295 = vld [vmem:[%s2266 + $0xa8] sm:$0xf]
        %v2296 = vld [vmem:[%s2266 + $0xac] sm:$0xf]
        %v2297 = vld [vmem:[%s2266 + $0xb4] sm:$0xf]
        %v2298 = vld [vmem:[%s2266 + $0xb8] sm:$0xf]
        %v2299 = vld [vmem:[%s2266 + $0xd8] sm:$0xf]
        %v2300 = vld [vmem:[%s2266 + $0xdc] sm:$0xf]
        %v2301 = vld [vmem:[%s2266 + $0xe4] sm:$0xf]
        %v2302 = vld [vmem:[%s2266 + $0xe8] sm:$0xf]
        %v2303 = vld [vmem:[%s2266 + $0xf0] sm:$0xf]
        %v2304 = vld [vmem:[%s2266 + $0xf4] sm:$0xf]
        %v2305 = vld [vmem:[%s2266 + $0xfc] sm:$0xf]
        %v2306 = vld [vmem:[%s2266 + $0x100] sm:$0xf]
        %v2307 = vld [vmem:[%s2266 + $0x108] sm:$0xf]
        %v2308 = vld [vmem:[%s2266 + $0x10c] sm:$0xf]
        %v2309 = vld [vmem:[%s2266 + $0x114] sm:$0xf]
        %v2310 = vld [vmem:[%s2266 + $0x118] sm:$0xf]
        %v2311 = vld [vmem:[%s2266 + $0x120] sm:$0xf]
        %v2312 = vld [vmem:[%s2266 + $0x124] sm:$0xf]
        %v2313 = vld [vmem:[%s2266 + $0x12c] sm:$0xf]
        %v2314 = vld [vmem:[%s2266 + $0x130] sm:$0xf]
        %v2315 = vld [vmem:[%s2266 + $0x138] sm:$0xf]
        %v2316 = vld [vmem:[%s2266 + $0x13c] sm:$0xf]
        %v2317 = vld [vmem:[%s2266 + $0x144] sm:$0xf]
        %v2318 = vld [vmem:[%s2266 + $0x148] sm:$0xf]
        %v2319 = vld [vmem:[%s2266 + $0x150] sm:$0xf]
        %v2320 = vld [vmem:[%s2266 + $0x154] sm:$0xf]
        %v2321 = vld [vmem:[%s2266 + $0x15c] sm:$0xf]
        %v2322 = vld [vmem:[%s2266 + $0x160] sm:$0xf]
        %v2323 = vld [vmem:[%s2266 + $0x168] sm:$0xf]
        %v2324 = vld [vmem:[%s2266 + $0x16c] sm:$0xf]
        %v2325 = vld [vmem:[%s2266 + $0x174] sm:$0xf]
        %v2326 = vld [vmem:[%s2266 + $0x178] sm:$0xf]
        %v2327 = vld [vmem:[%s2266 + $0x180] sm:$0xf]
        %v2328 = vld [vmem:[%s2266 + $0x184] sm:$0xf]
        %v2329 = vld [vmem:[%s2266 + $0x18c] sm:$0xf]
        %v2330 = vld [vmem:[%s2266 + $0x190] sm:$0xf]
        %v2331 = vld [vmem:[%s2266 + $0x8] sm:$0x1]
        %v2332 = vld [vmem:[%s2266 + $0x14] sm:$0x1]
        %v2333 = vld [vmem:[%s2266 + $0x20] sm:$0x1]
        %v2334 = vld [vmem:[%s2266 + $0x2c] sm:$0x1]
        %v2335 = vld [vmem:[%s2266 + $0x38] sm:$0x1]
        %v2336 = vld [vmem:[%s2266 + $0x44] sm:$0x1]
        %v2337 = vld [vmem:[%s2266 + $0x50] sm:$0x1]
        %v2338 = vld [vmem:[%s2266 + $0x5c] sm:$0x1]
        %v2339 = vld [vmem:[%s2266 + $0x68] sm:$0x1]
        %v2340 = vld [vmem:[%s2266 + $0x74] sm:$0x1]
        %v2341 = vld [vmem:[%s2266 + $0x80] sm:$0x1]
        %v2342 = vld [vmem:[%s2266 + $0x8c] sm:$0x1]
        %v2343 = vld [vmem:[%s2266 + $0x98] sm:$0x1]
        %v2344 = vld [vmem:[%s2266 + $0xa4] sm:$0x1]
        %v2345 = vld [vmem:[%s2266 + $0xb0] sm:$0x1]
        %v2346 = vld [vmem:[%s2266 + $0xbc] sm:$0x1]
        %v2347 = vld [vmem:[%s2266 + $0xe0] sm:$0x1]
        %v2348 = vld [vmem:[%s2266 + $0xec] sm:$0x1]
        %v2349 = vld [vmem:[%s2266 + $0xf8] sm:$0x1]
        %v2350 = vld [vmem:[%s2266 + $0x104] sm:$0x1]
        %v2351 = vld [vmem:[%s2266 + $0x110] sm:$0x1]
        %v2352 = vld [vmem:[%s2266 + $0x11c] sm:$0x1]
        %v2353 = vld [vmem:[%s2266 + $0x128] sm:$0x1]
        %v2354 = vld [vmem:[%s2266 + $0x134] sm:$0x1]
        %v2355 = vld [vmem:[%s2266 + $0x140] sm:$0x1]
        %v2356 = vld [vmem:[%s2266 + $0x14c] sm:$0x1]
        %v2357 = vld [vmem:[%s2266 + $0x158] sm:$0x1]
        %v2358 = vld [vmem:[%s2266 + $0x164] sm:$0x1]
        %v2359 = vld [vmem:[%s2266 + $0x170] sm:$0x1]
        %v2360 = vld [vmem:[%s2266 + $0x17c] sm:$0x1]
        %v2361 = vld [vmem:[%s2266 + $0x188] sm:$0x1]
        %v2362 = vld [vmem:[%s2266 + $0x194] sm:$0x1]
        %v2363 = vld [vmem:[%s2266] sm:$0xe]
        %v2364 = vld [vmem:[%s2266 + $0xc] sm:$0xe]
        %v2365 = vld [vmem:[%s2266 + $0x18] sm:$0xe]
        %v2366 = vld [vmem:[%s2266 + $0x24] sm:$0xe]
        %v2367 = vld [vmem:[%s2266 + $0x30] sm:$0xe]
        %v2368 = vld [vmem:[%s2266 + $0x3c] sm:$0xe]
        %v2369 = vld [vmem:[%s2266 + $0x48] sm:$0xe]
        %v2370 = vld [vmem:[%s2266 + $0x54] sm:$0xe]
        %v2371 = vld [vmem:[%s2266 + $0x60] sm:$0xe]
        %v2372 = vld [vmem:[%s2266 + $0x6c] sm:$0xe]
        %v2373 = vld [vmem:[%s2266 + $0x78] sm:$0xe]
        %v2374 = vld [vmem:[%s2266 + $0x84] sm:$0xe]
        %v2375 = vld [vmem:[%s2266 + $0x90] sm:$0xe]
        %v2376 = vld [vmem:[%s2266 + $0x9c] sm:$0xe]
        %v2377 = vld [vmem:[%s2266 + $0xa8] sm:$0xe]
        %v2378 = vld [vmem:[%s2266 + $0xb4] sm:$0xe]
        %v2379 = vld [vmem:[%s2266 + $0xd8] sm:$0xe]
        %v2380 = vld [vmem:[%s2266 + $0xe4] sm:$0xe]
        %v2381 = vld [vmem:[%s2266 + $0xf0] sm:$0xe]
        %v2382 = vld [vmem:[%s2266 + $0xfc] sm:$0xe]
        %v2383 = vld [vmem:[%s2266 + $0x108] sm:$0xe]
        %v2384 = vld [vmem:[%s2266 + $0x114] sm:$0xe]
        %v2385 = vld [vmem:[%s2266 + $0x120] sm:$0xe]
        %v2386 = vld [vmem:[%s2266 + $0x12c] sm:$0xe]
        %v2387 = vld [vmem:[%s2266 + $0x138] sm:$0xe]
        %v2388 = vld [vmem:[%s2266 + $0x144] sm:$0xe]
        %v2389 = vld [vmem:[%s2266 + $0x150] sm:$0xe]
        %v2390 = vld [vmem:[%s2266 + $0x15c] sm:$0xe]
        %v2391 = vld [vmem:[%s2266 + $0x168] sm:$0xe]
        %v2392 = vld [vmem:[%s2266 + $0x174] sm:$0xe]
        %v2393 = vld [vmem:[%s2266 + $0x180] sm:$0xe]
        %v2394 = vld [vmem:[%s2266 + $0x18c] sm:$0xe]
        %v2459 = vunpack.c.l.b16 %v2010
        %v2460 = vunpack.c.l.b16 %v2011
        %v2461 = vunpack.c.l.b16 %v2012
        %v2462 = vunpack.c.l.b16 %v2013
        %v2463 = vunpack.c.l.b16 %v2014
        %v2464 = vunpack.c.l.b16 %v2015
        %v2465 = vunpack.c.l.b16 %v2016
        %v2466 = vunpack.c.l.b16 %v2017
        %v2467 = vunpack.c.l.b16 %v2018
        %v2468 = vunpack.c.l.b16 %v2019
        %v2469 = vunpack.c.l.b16 %v2020
        %v2470 = vunpack.c.l.b16 %v2021
        %v2471 = vunpack.c.l.b16 %v2022
        %v2472 = vunpack.c.l.b16 %v2023
        %v2473 = vunpack.c.l.b16 %v2024
        %v2474 = vunpack.c.l.b16 %v2025
        %v2475 = vunpack.c.l.b16 %v2026
        %v2476 = vunpack.c.l.b16 %v2027
        %v2477 = vunpack.c.l.b16 %v2028
        %v2478 = vunpack.c.l.b16 %v2029
        %v2479 = vunpack.c.l.b16 %v2030
        %v2480 = vunpack.c.l.b16 %v2031
        %v2481 = vunpack.c.l.b16 %v2032
        %v2482 = vunpack.c.l.b16 %v2033
        %v2483 = vunpack.c.l.b16 %v2034
        %v2484 = vunpack.c.l.b16 %v2035
        %v2485 = vunpack.c.l.b16 %v2036
        %v2486 = vunpack.c.l.b16 %v2037
        %v2487 = vunpack.c.l.b16 %v2038
        %v2488 = vunpack.c.l.b16 %v2039
        %v2489 = vunpack.c.l.b16 %v2040
        %v2490 = vunpack.c.l.b16 %v2041
        %v2491 = vunpack.c.l.b16 %v2042
        %v2492 = vunpack.c.l.b16 %v2043
        %v2493 = vunpack.c.l.b16 %v2044
        %v2494 = vunpack.c.l.b16 %v2045
        %v2495 = vunpack.c.l.b16 %v2046
        %v2496 = vunpack.c.l.b16 %v2047
        %v2497 = vunpack.c.l.b16 %v2048
        %v2498 = vunpack.c.l.b16 %v2049
        %v2499 = vunpack.c.l.b16 %v2050
        %v2500 = vunpack.c.l.b16 %v2051
        %v2501 = vunpack.c.l.b16 %v2052
        %v2502 = vunpack.c.l.b16 %v2053
        %v2503 = vunpack.c.l.b16 %v2054
        %v2504 = vunpack.c.l.b16 %v2055
        %v2505 = vunpack.c.l.b16 %v2056
        %v2506 = vunpack.c.l.b16 %v2057
        %v2507 = vunpack.c.l.b16 %v2058
        %v2508 = vunpack.c.l.b16 %v2059
        %v2509 = vunpack.c.l.b16 %v2060
        %v2510 = vunpack.c.l.b16 %v2061
        %v2511 = vunpack.c.l.b16 %v2062
        %v2512 = vunpack.c.l.b16 %v2063
        %v2513 = vunpack.c.l.b16 %v2064
        %v2514 = vunpack.c.l.b16 %v2065
        %v2515 = vunpack.c.l.b16 %v2066
        %v2516 = vunpack.c.l.b16 %v2067
        %v2517 = vunpack.c.l.b16 %v2068
        %v2518 = vunpack.c.l.b16 %v2069
        %v2519 = vunpack.c.l.b16 %v2070
        %v2520 = vunpack.c.l.b16 %v2071
        %v2521 = vunpack.c.l.b16 %v2072
        %v2522 = vunpack.c.l.b16 %v2073
        %v2523 = vpack.c.b16 %v2460, %v2459
        %v2524 = vpack.c.b16 %v2462, %v2461
        %v2525 = vpack.c.b16 %v2464, %v2463
        %v2526 = vpack.c.b16 %v2466, %v2465
        %v2527 = vpack.c.b16 %v2468, %v2467
        %v2528 = vpack.c.b16 %v2470, %v2469
        %v2529 = vpack.c.b16 %v2472, %v2471
        %v2530 = vpack.c.b16 %v2474, %v2473
        %v2531 = vpack.c.b16 %v2476, %v2475
        %v2532 = vpack.c.b16 %v2478, %v2477
        %v2533 = vpack.c.b16 %v2480, %v2479
        %v2534 = vpack.c.b16 %v2482, %v2481
        %v2535 = vpack.c.b16 %v2484, %v2483
        %v2536 = vpack.c.b16 %v2486, %v2485
        %v2537 = vpack.c.b16 %v2488, %v2487
        %v2538 = vpack.c.b16 %v2490, %v2489
        %v2539 = vpack.c.b16 %v2492, %v2491
        %v2540 = vpack.c.b16 %v2494, %v2493
        %v2541 = vpack.c.b16 %v2496, %v2495
        %v2542 = vpack.c.b16 %v2498, %v2497
        %v2543 = vpack.c.b16 %v2500, %v2499
        %v2544 = vpack.c.b16 %v2502, %v2501
        %v2545 = vpack.c.b16 %v2504, %v2503
        %v2546 = vpack.c.b16 %v2506, %v2505
        %v2547 = vpack.c.b16 %v2508, %v2507
        %v2548 = vpack.c.b16 %v2510, %v2509
        %v2549 = vpack.c.b16 %v2512, %v2511
        %v2550 = vpack.c.b16 %v2514, %v2513
        %v2551 = vpack.c.b16 %v2516, %v2515
        %v2552 = vpack.c.b16 %v2518, %v2517
        %v2553 = vpack.c.b16 %v2520, %v2519
        %v2554 = vpack.c.b16 %v2522, %v2521
        %v2587 = vunpack.c.l.b16 %v2074
        %v2588 = vunpack.c.l.b16 %v2075
        %v2589 = vunpack.c.l.b16 %v2076
        %v2590 = vunpack.c.l.b16 %v2077
        %v2591 = vunpack.c.l.b16 %v2078
        %v2592 = vunpack.c.l.b16 %v2079
        %v2593 = vunpack.c.l.b16 %v2080
        %v2594 = vunpack.c.l.b16 %v2081
        %v2595 = vunpack.c.l.b16 %v2082
        %v2596 = vunpack.c.l.b16 %v2083
        %v2597 = vunpack.c.l.b16 %v2084
        %v2598 = vunpack.c.l.b16 %v2085
        %v2599 = vunpack.c.l.b16 %v2086
        %v2600 = vunpack.c.l.b16 %v2087
        %v2601 = vunpack.c.l.b16 %v2088
        %v2602 = vunpack.c.l.b16 %v2089
        %v2603 = vunpack.c.l.b16 %v2090
        %v2604 = vunpack.c.l.b16 %v2091
        %v2605 = vunpack.c.l.b16 %v2092
        %v2606 = vunpack.c.l.b16 %v2093
        %v2607 = vunpack.c.l.b16 %v2094
        %v2608 = vunpack.c.l.b16 %v2095
        %v2609 = vunpack.c.l.b16 %v2096
        %v2610 = vunpack.c.l.b16 %v2097
        %v2611 = vunpack.c.l.b16 %v2098
        %v2612 = vunpack.c.l.b16 %v2099
        %v2613 = vunpack.c.l.b16 %v2100
        %v2614 = vunpack.c.l.b16 %v2101
        %v2615 = vunpack.c.l.b16 %v2102
        %v2616 = vunpack.c.l.b16 %v2103
        %v2617 = vunpack.c.l.b16 %v2104
        %v2618 = vunpack.c.l.b16 %v2105
        %v2619 = vpack.c.b16 %v2587, %v2587
        %v2620 = vpack.c.b16 %v2588, %v2588
        %v2621 = vpack.c.b16 %v2589, %v2589
        %v2622 = vpack.c.b16 %v2590, %v2590
        %v2623 = vpack.c.b16 %v2591, %v2591
        %v2624 = vpack.c.b16 %v2592, %v2592
        %v2625 = vpack.c.b16 %v2593, %v2593
        %v2626 = vpack.c.b16 %v2594, %v2594
        %v2627 = vpack.c.b16 %v2595, %v2595
        %v2628 = vpack.c.b16 %v2596, %v2596
        %v2629 = vpack.c.b16 %v2597, %v2597
        %v2630 = vpack.c.b16 %v2598, %v2598
        %v2631 = vpack.c.b16 %v2599, %v2599
        %v2632 = vpack.c.b16 %v2600, %v2600
        %v2633 = vpack.c.b16 %v2601, %v2601
        %v2634 = vpack.c.b16 %v2602, %v2602
        %v2635 = vpack.c.b16 %v2603, %v2603
        %v2636 = vpack.c.b16 %v2604, %v2604
        %v2637 = vpack.c.b16 %v2605, %v2605
        %v2638 = vpack.c.b16 %v2606, %v2606
        %v2639 = vpack.c.b16 %v2607, %v2607
        %v2640 = vpack.c.b16 %v2608, %v2608
        %v2641 = vpack.c.b16 %v2609, %v2609
        %v2642 = vpack.c.b16 %v2610, %v2610
        %v2643 = vpack.c.b16 %v2611, %v2611
        %v2644 = vpack.c.b16 %v2612, %v2612
        %v2645 = vpack.c.b16 %v2613, %v2613
        %v2646 = vpack.c.b16 %v2614, %v2614
        %v2647 = vpack.c.b16 %v2615, %v2615
        %v2648 = vpack.c.b16 %v2616, %v2616
        %v2649 = vpack.c.b16 %v2617, %v2617
        %v2650 = vpack.c.b16 %v2618, %v2618
        %vm2651 = vsmask.f32 7424
        %v2653 = vshrl.u32 %v2523, 16
        %v2655 = vshll.u32 %v2523, 16
        %v2657 = vrot.slane %v2655, 1
        %v2658 = vor.u32 %v2653, %v2657
        %v2660 = vshll.u32 %v2619, 16
        %v2662 = vrot.slane %v2660, 1
        %v2663 = vsel %vm2651, %v2658, %v2662
        %v2665 = vshrl.u32 %v2524, 16
        %v2667 = vshll.u32 %v2524, 16
        %v2669 = vrot.slane %v2667, 1
        %v2670 = vor.u32 %v2665, %v2669
        %v2672 = vshll.u32 %v2620, 16
        %v2674 = vrot.slane %v2672, 1
        %v2675 = vsel %vm2651, %v2670, %v2674
        %v2677 = vshrl.u32 %v2525, 16
        %v2679 = vshll.u32 %v2525, 16
        %v2681 = vrot.slane %v2679, 1
        %v2682 = vor.u32 %v2677, %v2681
        %v2684 = vshll.u32 %v2621, 16
        %v2686 = vrot.slane %v2684, 1
        %v2687 = vsel %vm2651, %v2682, %v2686
        %v2689 = vshrl.u32 %v2526, 16
        %v2691 = vshll.u32 %v2526, 16
        %v2693 = vrot.slane %v2691, 1
        %v2694 = vor.u32 %v2689, %v2693
        %v2696 = vshll.u32 %v2622, 16
        %v2698 = vrot.slane %v2696, 1
        %v2699 = vsel %vm2651, %v2694, %v2698
        %v2701 = vshrl.u32 %v2527, 16
        %v2703 = vshll.u32 %v2527, 16
        %v2705 = vrot.slane %v2703, 1
        %v2706 = vor.u32 %v2701, %v2705
        %v2708 = vshll.u32 %v2623, 16
        %v2710 = vrot.slane %v2708, 1
        %v2711 = vsel %vm2651, %v2706, %v2710
        %v2713 = vshrl.u32 %v2528, 16
        %v2715 = vshll.u32 %v2528, 16
        %v2717 = vrot.slane %v2715, 1
        %v2718 = vor.u32 %v2713, %v2717
        %v2720 = vshll.u32 %v2624, 16
        %v2722 = vrot.slane %v2720, 1
        %v2723 = vsel %vm2651, %v2718, %v2722
        %v2725 = vshrl.u32 %v2529, 16
        %v2727 = vshll.u32 %v2529, 16
        %v2729 = vrot.slane %v2727, 1
        %v2730 = vor.u32 %v2725, %v2729
        %v2732 = vshll.u32 %v2625, 16
        %v2734 = vrot.slane %v2732, 1
        %v2735 = vsel %vm2651, %v2730, %v2734
        %v2737 = vshrl.u32 %v2530, 16
        %v2739 = vshll.u32 %v2530, 16
        %v2741 = vrot.slane %v2739, 1
        %v2742 = vor.u32 %v2737, %v2741
        %v2744 = vshll.u32 %v2626, 16
        %v2746 = vrot.slane %v2744, 1
        %v2747 = vsel %vm2651, %v2742, %v2746
        %v2749 = vshrl.u32 %v2531, 16
        %v2751 = vshll.u32 %v2531, 16
        %v2753 = vrot.slane %v2751, 1
        %v2754 = vor.u32 %v2749, %v2753
        %v2756 = vshll.u32 %v2627, 16
        %v2758 = vrot.slane %v2756, 1
        %v2759 = vsel %vm2651, %v2754, %v2758
        %v2761 = vshrl.u32 %v2532, 16
        %v2763 = vshll.u32 %v2532, 16
        %v2765 = vrot.slane %v2763, 1
        %v2766 = vor.u32 %v2761, %v2765
        %v2768 = vshll.u32 %v2628, 16
        %v2770 = vrot.slane %v2768, 1
        %v2771 = vsel %vm2651, %v2766, %v2770
        %v2773 = vshrl.u32 %v2533, 16
        %v2775 = vshll.u32 %v2533, 16
        %v2777 = vrot.slane %v2775, 1
        %v2778 = vor.u32 %v2773, %v2777
        %v2780 = vshll.u32 %v2629, 16
        %v2782 = vrot.slane %v2780, 1
        %v2783 = vsel %vm2651, %v2778, %v2782
        %v2785 = vshrl.u32 %v2534, 16
        %v2787 = vshll.u32 %v2534, 16
        %v2789 = vrot.slane %v2787, 1
        %v2790 = vor.u32 %v2785, %v2789
        %v2792 = vshll.u32 %v2630, 16
        %v2794 = vrot.slane %v2792, 1
        %v2795 = vsel %vm2651, %v2790, %v2794
        %v2797 = vshrl.u32 %v2535, 16
        %v2799 = vshll.u32 %v2535, 16
        %v2801 = vrot.slane %v2799, 1
        %v2802 = vor.u32 %v2797, %v2801
        %v2804 = vshll.u32 %v2631, 16
        %v2806 = vrot.slane %v2804, 1
        %v2807 = vsel %vm2651, %v2802, %v2806
        %v2809 = vshrl.u32 %v2536, 16
        %v2811 = vshll.u32 %v2536, 16
        %v2813 = vrot.slane %v2811, 1
        %v2814 = vor.u32 %v2809, %v2813
        %v2816 = vshll.u32 %v2632, 16
        %v2818 = vrot.slane %v2816, 1
        %v2819 = vsel %vm2651, %v2814, %v2818
        %v2821 = vshrl.u32 %v2537, 16
        %v2823 = vshll.u32 %v2537, 16
        %v2825 = vrot.slane %v2823, 1
        %v2826 = vor.u32 %v2821, %v2825
        %v2828 = vshll.u32 %v2633, 16
        %v2830 = vrot.slane %v2828, 1
        %v2831 = vsel %vm2651, %v2826, %v2830
        %v2833 = vshrl.u32 %v2538, 16
        %v2835 = vshll.u32 %v2538, 16
        %v2837 = vrot.slane %v2835, 1
        %v2838 = vor.u32 %v2833, %v2837
        %v2840 = vshll.u32 %v2634, 16
        %v2842 = vrot.slane %v2840, 1
        %v2843 = vsel %vm2651, %v2838, %v2842
        %v2845 = vshrl.u32 %v2539, 16
        %v2847 = vshll.u32 %v2539, 16
        %v2849 = vrot.slane %v2847, 1
        %v2850 = vor.u32 %v2845, %v2849
        %v2852 = vshll.u32 %v2635, 16
        %v2854 = vrot.slane %v2852, 1
        %v2855 = vsel %vm2651, %v2850, %v2854
        %v2857 = vshrl.u32 %v2540, 16
        %v2859 = vshll.u32 %v2540, 16
        %v2861 = vrot.slane %v2859, 1
        %v2862 = vor.u32 %v2857, %v2861
        %v2864 = vshll.u32 %v2636, 16
        %v2866 = vrot.slane %v2864, 1
        %v2867 = vsel %vm2651, %v2862, %v2866
        %v2869 = vshrl.u32 %v2541, 16
        %v2871 = vshll.u32 %v2541, 16
        %v2873 = vrot.slane %v2871, 1
        %v2874 = vor.u32 %v2869, %v2873
        %v2876 = vshll.u32 %v2637, 16
        %v2878 = vrot.slane %v2876, 1
        %v2879 = vsel %vm2651, %v2874, %v2878
        %v2881 = vshrl.u32 %v2542, 16
        %v2883 = vshll.u32 %v2542, 16
        %v2885 = vrot.slane %v2883, 1
        %v2886 = vor.u32 %v2881, %v2885
        %v2888 = vshll.u32 %v2638, 16
        %v2890 = vrot.slane %v2888, 1
        %v2891 = vsel %vm2651, %v2886, %v2890
        %v2893 = vshrl.u32 %v2543, 16
        %v2895 = vshll.u32 %v2543, 16
        %v2897 = vrot.slane %v2895, 1
        %v2898 = vor.u32 %v2893, %v2897
        %v2900 = vshll.u32 %v2639, 16
        %v2902 = vrot.slane %v2900, 1
        %v2903 = vsel %vm2651, %v2898, %v2902
        %v2905 = vshrl.u32 %v2544, 16
        %v2907 = vshll.u32 %v2544, 16
        %v2909 = vrot.slane %v2907, 1
        %v2910 = vor.u32 %v2905, %v2909
        %v2912 = vshll.u32 %v2640, 16
        %v2914 = vrot.slane %v2912, 1
        %v2915 = vsel %vm2651, %v2910, %v2914
        %v2917 = vshrl.u32 %v2545, 16
        %v2919 = vshll.u32 %v2545, 16
        %v2921 = vrot.slane %v2919, 1
        %v2922 = vor.u32 %v2917, %v2921
        %v2924 = vshll.u32 %v2641, 16
        %v2926 = vrot.slane %v2924, 1
        %v2927 = vsel %vm2651, %v2922, %v2926
        %v2929 = vshrl.u32 %v2546, 16
        %v2931 = vshll.u32 %v2546, 16
        %v2933 = vrot.slane %v2931, 1
        %v2934 = vor.u32 %v2929, %v2933
        %v2936 = vshll.u32 %v2642, 16
        %v2938 = vrot.slane %v2936, 1
        %v2939 = vsel %vm2651, %v2934, %v2938
        %v2941 = vshrl.u32 %v2547, 16
        %v2943 = vshll.u32 %v2547, 16
        %v2945 = vrot.slane %v2943, 1
        %v2946 = vor.u32 %v2941, %v2945
        %v2948 = vshll.u32 %v2643, 16
        %v2950 = vrot.slane %v2948, 1
        %v2951 = vsel %vm2651, %v2946, %v2950
        %v2953 = vshrl.u32 %v2548, 16
        %v2955 = vshll.u32 %v2548, 16
        %v2957 = vrot.slane %v2955, 1
        %v2958 = vor.u32 %v2953, %v2957
        %v2960 = vshll.u32 %v2644, 16
        %v2962 = vrot.slane %v2960, 1
        %v2963 = vsel %vm2651, %v2958, %v2962
        %v2965 = vshrl.u32 %v2549, 16
        %v2967 = vshll.u32 %v2549, 16
        %v2969 = vrot.slane %v2967, 1
        %v2970 = vor.u32 %v2965, %v2969
        %v2972 = vshll.u32 %v2645, 16
        %v2974 = vrot.slane %v2972, 1
        %v2975 = vsel %vm2651, %v2970, %v2974
        %v2977 = vshrl.u32 %v2550, 16
        %v2979 = vshll.u32 %v2550, 16
        %v2981 = vrot.slane %v2979, 1
        %v2982 = vor.u32 %v2977, %v2981
        %v2984 = vshll.u32 %v2646, 16
        %v2986 = vrot.slane %v2984, 1
        %v2987 = vsel %vm2651, %v2982, %v2986
        %v2989 = vshrl.u32 %v2551, 16
        %v2991 = vshll.u32 %v2551, 16
        %v2993 = vrot.slane %v2991, 1
        %v2994 = vor.u32 %v2989, %v2993
        %v2996 = vshll.u32 %v2647, 16
        %v2998 = vrot.slane %v2996, 1
        %v2999 = vsel %vm2651, %v2994, %v2998
        %v3001 = vshrl.u32 %v2552, 16
        %v3003 = vshll.u32 %v2552, 16
        %v3005 = vrot.slane %v3003, 1
        %v3006 = vor.u32 %v3001, %v3005
        %v3008 = vshll.u32 %v2648, 16
        %v3010 = vrot.slane %v3008, 1
        %v3011 = vsel %vm2651, %v3006, %v3010
        %v3013 = vshrl.u32 %v2553, 16
        %v3015 = vshll.u32 %v2553, 16
        %v3017 = vrot.slane %v3015, 1
        %v3018 = vor.u32 %v3013, %v3017
        %v3020 = vshll.u32 %v2649, 16
        %v3022 = vrot.slane %v3020, 1
        %v3023 = vsel %vm2651, %v3018, %v3022
        %v3025 = vshrl.u32 %v2554, 16
        %v3027 = vshll.u32 %v2554, 16
        %v3029 = vrot.slane %v3027, 1
        %v3030 = vor.u32 %v3025, %v3029
        %v3032 = vshll.u32 %v2650, 16
        %v3034 = vrot.slane %v3032, 1
        %v3035 = vsel %vm2651, %v3030, %v3034
        %3036 = vrot.lane.b32.xlu0 %v2663, 32
        %v3037 = vpop.permute.xlu0 %3036
        %3038 = vrot.lane.b32.xlu0 %v2675, 32
        %v3039 = vpop.permute.xlu0 %3038
        %3040 = vrot.lane.b32.xlu0 %v2687, 32
        %v3041 = vpop.permute.xlu0 %3040
        %3042 = vrot.lane.b32.xlu0 %v2699, 32
        %v3043 = vpop.permute.xlu0 %3042
        %3044 = vrot.lane.b32.xlu0 %v2711, 32
        %v3045 = vpop.permute.xlu0 %3044
        %3046 = vrot.lane.b32.xlu0 %v2723, 32
        %v3047 = vpop.permute.xlu0 %3046
        %3048 = vrot.lane.b32.xlu0 %v2735, 32
        %v3049 = vpop.permute.xlu0 %3048
        %3050 = vrot.lane.b32.xlu0 %v2747, 32
        %v3051 = vpop.permute.xlu0 %3050
        %3052 = vrot.lane.b32.xlu0 %v2759, 32
        %v3053 = vpop.permute.xlu0 %3052
        %3054 = vrot.lane.b32.xlu0 %v2771, 32
        %v3055 = vpop.permute.xlu0 %3054
        %3056 = vrot.lane.b32.xlu0 %v2783, 32
        %v3057 = vpop.permute.xlu0 %3056
        %3058 = vrot.lane.b32.xlu0 %v2795, 32
        %v3059 = vpop.permute.xlu0 %3058
        %3060 = vrot.lane.b32.xlu0 %v2807, 32
        %v3061 = vpop.permute.xlu0 %3060
        %3062 = vrot.lane.b32.xlu0 %v2819, 32
        %v3063 = vpop.permute.xlu0 %3062
        %3064 = vrot.lane.b32.xlu0 %v2831, 32
        %v3065 = vpop.permute.xlu0 %3064
        %3066 = vrot.lane.b32.xlu0 %v2843, 32
        %v3067 = vpop.permute.xlu0 %3066
        %3068 = vrot.lane.b32.xlu0 %v2855, 32
        %v3069 = vpop.permute.xlu0 %3068
        %3070 = vrot.lane.b32.xlu0 %v2867, 32
        %v3071 = vpop.permute.xlu0 %3070
        %3072 = vrot.lane.b32.xlu0 %v2879, 32
        %v3073 = vpop.permute.xlu0 %3072
        %3074 = vrot.lane.b32.xlu0 %v2891, 32
        %v3075 = vpop.permute.xlu0 %3074
        %3076 = vrot.lane.b32.xlu0 %v2903, 32
        %v3077 = vpop.permute.xlu0 %3076
        %3078 = vrot.lane.b32.xlu0 %v2915, 32
        %v3079 = vpop.permute.xlu0 %3078
        %3080 = vrot.lane.b32.xlu0 %v2927, 32
        %v3081 = vpop.permute.xlu0 %3080
        %3082 = vrot.lane.b32.xlu0 %v2939, 32
        %v3083 = vpop.permute.xlu0 %3082
        %3084 = vrot.lane.b32.xlu0 %v2951, 32
        %v3085 = vpop.permute.xlu0 %3084
        %3086 = vrot.lane.b32.xlu0 %v2963, 32
        %v3087 = vpop.permute.xlu0 %3086
        %3088 = vrot.lane.b32.xlu0 %v2975, 32
        %v3089 = vpop.permute.xlu0 %3088
        %3090 = vrot.lane.b32.xlu0 %v2987, 32
        %v3091 = vpop.permute.xlu0 %3090
        %3092 = vrot.lane.b32.xlu0 %v2999, 32
        %v3093 = vpop.permute.xlu0 %3092
        %3094 = vrot.lane.b32.xlu0 %v3011, 32
        %v3095 = vpop.permute.xlu0 %3094
        %3096 = vrot.lane.b32.xlu0 %v3023, 32
        %v3097 = vpop.permute.xlu0 %3096
        %3098 = vrot.lane.b32.xlu0 %v3035, 32
        %v3099 = vpop.permute.xlu0 %3098
        %v3132 = vunpack.c.l.b16 %v2106
        %v3133 = vunpack.c.l.b16 %v2107
        %v3134 = vunpack.c.l.b16 %v2108
        %v3135 = vunpack.c.l.b16 %v2109
        %v3136 = vunpack.c.l.b16 %v2110
        %v3137 = vunpack.c.l.b16 %v2111
        %v3138 = vunpack.c.l.b16 %v2112
        %v3139 = vunpack.c.l.b16 %v2113
        %v3140 = vunpack.c.l.b16 %v2114
        %v3141 = vunpack.c.l.b16 %v2115
        %v3142 = vunpack.c.l.b16 %v2116
        %v3143 = vunpack.c.l.b16 %v2117
        %v3144 = vunpack.c.l.b16 %v2118
        %v3145 = vunpack.c.l.b16 %v2119
        %v3146 = vunpack.c.l.b16 %v2120
        %v3147 = vunpack.c.l.b16 %v2121
        %v3148 = vunpack.c.l.b16 %v2122
        %v3149 = vunpack.c.l.b16 %v2123
        %v3150 = vunpack.c.l.b16 %v2124
        %v3151 = vunpack.c.l.b16 %v2125
        %v3152 = vunpack.c.l.b16 %v2126
        %v3153 = vunpack.c.l.b16 %v2127
        %v3154 = vunpack.c.l.b16 %v2128
        %v3155 = vunpack.c.l.b16 %v2129
        %v3156 = vunpack.c.l.b16 %v2130
        %v3157 = vunpack.c.l.b16 %v2131
        %v3158 = vunpack.c.l.b16 %v2132
        %v3159 = vunpack.c.l.b16 %v2133
        %v3160 = vunpack.c.l.b16 %v2134
        %v3161 = vunpack.c.l.b16 %v2135
        %v3162 = vunpack.c.l.b16 %v2136
        %v3163 = vunpack.c.l.b16 %v2137
        %v3164 = vpack.c.b16 %v2460, %v3132
        %v3165 = vpack.c.b16 %v2462, %v3133
        %v3166 = vpack.c.b16 %v2464, %v3134
        %v3167 = vpack.c.b16 %v2466, %v3135
        %v3168 = vpack.c.b16 %v2468, %v3136
        %v3169 = vpack.c.b16 %v2470, %v3137
        %v3170 = vpack.c.b16 %v2472, %v3138
        %v3171 = vpack.c.b16 %v2474, %v3139
        %v3172 = vpack.c.b16 %v2476, %v3140
        %v3173 = vpack.c.b16 %v2478, %v3141
        %v3174 = vpack.c.b16 %v2480, %v3142
        %v3175 = vpack.c.b16 %v2482, %v3143
        %v3176 = vpack.c.b16 %v2484, %v3144
        %v3177 = vpack.c.b16 %v2486, %v3145
        %v3178 = vpack.c.b16 %v2488, %v3146
        %v3179 = vpack.c.b16 %v2490, %v3147
        %v3180 = vpack.c.b16 %v2492, %v3148
        %v3181 = vpack.c.b16 %v2494, %v3149
        %v3182 = vpack.c.b16 %v2496, %v3150
        %v3183 = vpack.c.b16 %v2498, %v3151
        %v3184 = vpack.c.b16 %v2500, %v3152
        %v3185 = vpack.c.b16 %v2502, %v3153
        %v3186 = vpack.c.b16 %v2504, %v3154
        %v3187 = vpack.c.b16 %v2506, %v3155
        %v3188 = vpack.c.b16 %v2508, %v3156
        %v3189 = vpack.c.b16 %v2510, %v3157
        %v3190 = vpack.c.b16 %v2512, %v3158
        %v3191 = vpack.c.b16 %v2514, %v3159
        %v3192 = vpack.c.b16 %v2516, %v3160
        %v3193 = vpack.c.b16 %v2518, %v3161
        %v3194 = vpack.c.b16 %v2520, %v3162
        %v3195 = vpack.c.b16 %v2522, %v3163
        %vm3196 = vcmask 1046528
        %v3197 = vrot.slane %v3164, 1
        %v3198 = vrot.slane %v2619, 1
        %v3199 = vsel %vm3196, %v3197, %v3198
        %v3200 = vrot.slane %v3165, 1
        %v3201 = vrot.slane %v2620, 1
        %v3202 = vsel %vm3196, %v3200, %v3201
        %v3203 = vrot.slane %v3166, 1
        %v3204 = vrot.slane %v2621, 1
        %v3205 = vsel %vm3196, %v3203, %v3204
        %v3206 = vrot.slane %v3167, 1
        %v3207 = vrot.slane %v2622, 1
        %v3208 = vsel %vm3196, %v3206, %v3207
        %v3209 = vrot.slane %v3168, 1
        %v3210 = vrot.slane %v2623, 1
        %v3211 = vsel %vm3196, %v3209, %v3210
        %v3212 = vrot.slane %v3169, 1
        %v3213 = vrot.slane %v2624, 1
        %v3214 = vsel %vm3196, %v3212, %v3213
        %v3215 = vrot.slane %v3170, 1
        %v3216 = vrot.slane %v2625, 1
        %v3217 = vsel %vm3196, %v3215, %v3216
        %v3218 = vrot.slane %v3171, 1
        %v3219 = vrot.slane %v2626, 1
        %v3220 = vsel %vm3196, %v3218, %v3219
        %v3221 = vrot.slane %v3172, 1
        %v3222 = vrot.slane %v2627, 1
        %v3223 = vsel %vm3196, %v3221, %v3222
        %v3224 = vrot.slane %v3173, 1
        %v3225 = vrot.slane %v2628, 1
        %v3226 = vsel %vm3196, %v3224, %v3225
        %v3227 = vrot.slane %v3174, 1
        %v3228 = vrot.slane %v2629, 1
        %v3229 = vsel %vm3196, %v3227, %v3228
        %v3230 = vrot.slane %v3175, 1
        %v3231 = vrot.slane %v2630, 1
        %v3232 = vsel %vm3196, %v3230, %v3231
        %v3233 = vrot.slane %v3176, 1
        %v3234 = vrot.slane %v2631, 1
        %v3235 = vsel %vm3196, %v3233, %v3234
        %v3236 = vrot.slane %v3177, 1
        %v3237 = vrot.slane %v2632, 1
        %v3238 = vsel %vm3196, %v3236, %v3237
        %v3239 = vrot.slane %v3178, 1
        %v3240 = vrot.slane %v2633, 1
        %v3241 = vsel %vm3196, %v3239, %v3240
        %v3242 = vrot.slane %v3179, 1
        %v3243 = vrot.slane %v2634, 1
        %v3244 = vsel %vm3196, %v3242, %v3243
        %v3245 = vrot.slane %v3180, 1
        %v3246 = vrot.slane %v2635, 1
        %v3247 = vsel %vm3196, %v3245, %v3246
        %v3248 = vrot.slane %v3181, 1
        %v3249 = vrot.slane %v2636, 1
        %v3250 = vsel %vm3196, %v3248, %v3249
        %v3251 = vrot.slane %v3182, 1
        %v3252 = vrot.slane %v2637, 1
        %v3253 = vsel %vm3196, %v3251, %v3252
        %v3254 = vrot.slane %v3183, 1
        %v3255 = vrot.slane %v2638, 1
        %v3256 = vsel %vm3196, %v3254, %v3255
        %v3257 = vrot.slane %v3184, 1
        %v3258 = vrot.slane %v2639, 1
        %v3259 = vsel %vm3196, %v3257, %v3258
        %v3260 = vrot.slane %v3185, 1
        %v3261 = vrot.slane %v2640, 1
        %v3262 = vsel %vm3196, %v3260, %v3261
        %v3263 = vrot.slane %v3186, 1
        %v3264 = vrot.slane %v2641, 1
        %v3265 = vsel %vm3196, %v3263, %v3264
        %v3266 = vrot.slane %v3187, 1
        %v3267 = vrot.slane %v2642, 1
        %v3268 = vsel %vm3196, %v3266, %v3267
        %v3269 = vrot.slane %v3188, 1
        %v3270 = vrot.slane %v2643, 1
        %v3271 = vsel %vm3196, %v3269, %v3270
        %v3272 = vrot.slane %v3189, 1
        %v3273 = vrot.slane %v2644, 1
        %v3274 = vsel %vm3196, %v3272, %v3273
        %v3275 = vrot.slane %v3190, 1
        %v3276 = vrot.slane %v2645, 1
        %v3277 = vsel %vm3196, %v3275, %v3276
        %v3278 = vrot.slane %v3191, 1
        %v3279 = vrot.slane %v2646, 1
        %v3280 = vsel %vm3196, %v3278, %v3279
        %v3281 = vrot.slane %v3192, 1
        %v3282 = vrot.slane %v2647, 1
        %v3283 = vsel %vm3196, %v3281, %v3282
        %v3284 = vrot.slane %v3193, 1
        %v3285 = vrot.slane %v2648, 1
        %v3286 = vsel %vm3196, %v3284, %v3285
        %v3287 = vrot.slane %v3194, 1
        %v3288 = vrot.slane %v2649, 1
        %v3289 = vsel %vm3196, %v3287, %v3288
        %v3290 = vrot.slane %v3195, 1
        %v3291 = vrot.slane %v2650, 1
        %v3292 = vsel %vm3196, %v3290, %v3291
        %3293 = vrot.lane.b32.xlu0 %v3199, 64
        %v3294 = vpop.permute.xlu0 %3293
        %3295 = vrot.lane.b32.xlu0 %v3202, 64
        %v3296 = vpop.permute.xlu0 %3295
        %3297 = vrot.lane.b32.xlu0 %v3205, 64
        %v3298 = vpop.permute.xlu0 %3297
        %3299 = vrot.lane.b32.xlu0 %v3208, 64
        %v3300 = vpop.permute.xlu0 %3299
        %3301 = vrot.lane.b32.xlu0 %v3211, 64
        %v3302 = vpop.permute.xlu0 %3301
        %3303 = vrot.lane.b32.xlu0 %v3214, 64
        %v3304 = vpop.permute.xlu0 %3303
        %3305 = vrot.lane.b32.xlu0 %v3217, 64
        %v3306 = vpop.permute.xlu0 %3305
        %3307 = vrot.lane.b32.xlu0 %v3220, 64
        %v3308 = vpop.permute.xlu0 %3307
        %3309 = vrot.lane.b32.xlu0 %v3223, 64
        %v3310 = vpop.permute.xlu0 %3309
        %3311 = vrot.lane.b32.xlu0 %v3226, 64
        %v3312 = vpop.permute.xlu0 %3311
        %3313 = vrot.lane.b32.xlu0 %v3229, 64
        %v3314 = vpop.permute.xlu0 %3313
        %3315 = vrot.lane.b32.xlu0 %v3232, 64
        %v3316 = vpop.permute.xlu0 %3315
        %3317 = vrot.lane.b32.xlu0 %v3235, 64
        %v3318 = vpop.permute.xlu0 %3317
        %3319 = vrot.lane.b32.xlu0 %v3238, 64
        %v3320 = vpop.permute.xlu0 %3319
        %3321 = vrot.lane.b32.xlu0 %v3241, 64
        %v3322 = vpop.permute.xlu0 %3321
        %3323 = vrot.lane.b32.xlu0 %v3244, 64
        %v3324 = vpop.permute.xlu0 %3323
        %3325 = vrot.lane.b32.xlu0 %v3247, 64
        %v3326 = vpop.permute.xlu0 %3325
        %3327 = vrot.lane.b32.xlu0 %v3250, 64
        %v3328 = vpop.permute.xlu0 %3327
        %3329 = vrot.lane.b32.xlu0 %v3253, 64
        %v3330 = vpop.permute.xlu0 %3329
        %3331 = vrot.lane.b32.xlu0 %v3256, 64
        %v3332 = vpop.permute.xlu0 %3331
        %3333 = vrot.lane.b32.xlu0 %v3259, 64
        %v3334 = vpop.permute.xlu0 %3333
        %3335 = vrot.lane.b32.xlu0 %v3262, 64
        %v3336 = vpop.permute.xlu0 %3335
        %3337 = vrot.lane.b32.xlu0 %v3265, 64
        %v3338 = vpop.permute.xlu0 %3337
        %3339 = vrot.lane.b32.xlu0 %v3268, 64
        %v3340 = vpop.permute.xlu0 %3339
        %3341 = vrot.lane.b32.xlu0 %v3271, 64
        %v3342 = vpop.permute.xlu0 %3341
        %3343 = vrot.lane.b32.xlu0 %v3274, 64
        %v3344 = vpop.permute.xlu0 %3343
        %3345 = vrot.lane.b32.xlu0 %v3277, 64
        %v3346 = vpop.permute.xlu0 %3345
        %3347 = vrot.lane.b32.xlu0 %v3280, 64
        %v3348 = vpop.permute.xlu0 %3347
        %3349 = vrot.lane.b32.xlu0 %v3283, 64
        %v3350 = vpop.permute.xlu0 %3349
        %3351 = vrot.lane.b32.xlu0 %v3286, 64
        %v3352 = vpop.permute.xlu0 %3351
        %3353 = vrot.lane.b32.xlu0 %v3289, 64
        %v3354 = vpop.permute.xlu0 %3353
        %3355 = vrot.lane.b32.xlu0 %v3292, 64
        %v3356 = vpop.permute.xlu0 %3355
        %v3421 = vunpack.c.l.b16 %v2138
        %v3422 = vunpack.c.l.b16 %v2139
        %v3423 = vunpack.c.l.b16 %v2140
        %v3424 = vunpack.c.l.b16 %v2141
        %v3425 = vunpack.c.l.b16 %v2142
        %v3426 = vunpack.c.l.b16 %v2143
        %v3427 = vunpack.c.l.b16 %v2144
        %v3428 = vunpack.c.l.b16 %v2145
        %v3429 = vunpack.c.l.b16 %v2146
        %v3430 = vunpack.c.l.b16 %v2147
        %v3431 = vunpack.c.l.b16 %v2148
        %v3432 = vunpack.c.l.b16 %v2149
        %v3433 = vunpack.c.l.b16 %v2150
        %v3434 = vunpack.c.l.b16 %v2151
        %v3435 = vunpack.c.l.b16 %v2152
        %v3436 = vunpack.c.l.b16 %v2153
        %v3437 = vunpack.c.l.b16 %v2154
        %v3438 = vunpack.c.l.b16 %v2155
        %v3439 = vunpack.c.l.b16 %v2156
        %v3440 = vunpack.c.l.b16 %v2157
        %v3441 = vunpack.c.l.b16 %v2158
        %v3442 = vunpack.c.l.b16 %v2159
        %v3443 = vunpack.c.l.b16 %v2160
        %v3444 = vunpack.c.l.b16 %v2161
        %v3445 = vunpack.c.l.b16 %v2162
        %v3446 = vunpack.c.l.b16 %v2163
        %v3447 = vunpack.c.l.b16 %v2164
        %v3448 = vunpack.c.l.b16 %v2165
        %v3449 = vunpack.c.l.b16 %v2166
        %v3450 = vunpack.c.l.b16 %v2167
        %v3451 = vunpack.c.l.b16 %v2168
        %v3452 = vunpack.c.l.b16 %v2169
        %v3453 = vunpack.c.l.b16 %v2170
        %v3454 = vunpack.c.l.b16 %v2171
        %v3455 = vunpack.c.l.b16 %v2172
        %v3456 = vunpack.c.l.b16 %v2173
        %v3457 = vunpack.c.l.b16 %v2174
        %v3458 = vunpack.c.l.b16 %v2175
        %v3459 = vunpack.c.l.b16 %v2176
        %v3460 = vunpack.c.l.b16 %v2177
        %v3461 = vunpack.c.l.b16 %v2178
        %v3462 = vunpack.c.l.b16 %v2179
        %v3463 = vunpack.c.l.b16 %v2180
        %v3464 = vunpack.c.l.b16 %v2181
        %v3465 = vunpack.c.l.b16 %v2182
        %v3466 = vunpack.c.l.b16 %v2183
        %v3467 = vunpack.c.l.b16 %v2184
        %v3468 = vunpack.c.l.b16 %v2185
        %v3469 = vunpack.c.l.b16 %v2186
        %v3470 = vunpack.c.l.b16 %v2187
        %v3471 = vunpack.c.l.b16 %v2188
        %v3472 = vunpack.c.l.b16 %v2189
        %v3473 = vunpack.c.l.b16 %v2190
        %v3474 = vunpack.c.l.b16 %v2191
        %v3475 = vunpack.c.l.b16 %v2192
        %v3476 = vunpack.c.l.b16 %v2193
        %v3477 = vunpack.c.l.b16 %v2194
        %v3478 = vunpack.c.l.b16 %v2195
        %v3479 = vunpack.c.l.b16 %v2196
        %v3480 = vunpack.c.l.b16 %v2197
        %v3481 = vunpack.c.l.b16 %v2198
        %v3482 = vunpack.c.l.b16 %v2199
        %v3483 = vunpack.c.l.b16 %v2200
        %v3484 = vunpack.c.l.b16 %v2201
        %v3485 = vpack.c.b16 %v3422, %v3421
        %v3486 = vpack.c.b16 %v3424, %v3423
        %v3487 = vpack.c.b16 %v3426, %v3425
        %v3488 = vpack.c.b16 %v3428, %v3427
        %v3489 = vpack.c.b16 %v3430, %v3429
        %v3490 = vpack.c.b16 %v3432, %v3431
        %v3491 = vpack.c.b16 %v3434, %v3433
        %v3492 = vpack.c.b16 %v3436, %v3435
        %v3493 = vpack.c.b16 %v3438, %v3437
        %v3494 = vpack.c.b16 %v3440, %v3439
        %v3495 = vpack.c.b16 %v3442, %v3441
        %v3496 = vpack.c.b16 %v3444, %v3443
        %v3497 = vpack.c.b16 %v3446, %v3445
        %v3498 = vpack.c.b16 %v3448, %v3447
        %v3499 = vpack.c.b16 %v3450, %v3449
        %v3500 = vpack.c.b16 %v3452, %v3451
        %v3501 = vpack.c.b16 %v3454, %v3453
        %v3502 = vpack.c.b16 %v3456, %v3455
        %v3503 = vpack.c.b16 %v3458, %v3457
        %v3504 = vpack.c.b16 %v3460, %v3459
        %v3505 = vpack.c.b16 %v3462, %v3461
        %v3506 = vpack.c.b16 %v3464, %v3463
        %v3507 = vpack.c.b16 %v3466, %v3465
        %v3508 = vpack.c.b16 %v3468, %v3467
        %v3509 = vpack.c.b16 %v3470, %v3469
        %v3510 = vpack.c.b16 %v3472, %v3471
        %v3511 = vpack.c.b16 %v3474, %v3473
        %v3512 = vpack.c.b16 %v3476, %v3475
        %v3513 = vpack.c.b16 %v3478, %v3477
        %v3514 = vpack.c.b16 %v3480, %v3479
        %v3515 = vpack.c.b16 %v3482, %v3481
        %v3516 = vpack.c.b16 %v3484, %v3483
        %3517 = vrot.lane.b32.xlu0 %v3485, 96
        %v3518 = vpop.permute.xlu0 %3517
        %3519 = vrot.lane.b32.xlu0 %v3486, 96
        %v3520 = vpop.permute.xlu0 %3519
        %3521 = vrot.lane.b32.xlu0 %v3487, 96
        %v3522 = vpop.permute.xlu0 %3521
        %3523 = vrot.lane.b32.xlu0 %v3488, 96
        %v3524 = vpop.permute.xlu0 %3523
        %3525 = vrot.lane.b32.xlu0 %v3489, 96
        %v3526 = vpop.permute.xlu0 %3525
        %3527 = vrot.lane.b32.xlu0 %v3490, 96
        %v3528 = vpop.permute.xlu0 %3527
        %3529 = vrot.lane.b32.xlu0 %v3491, 96
        %v3530 = vpop.permute.xlu0 %3529
        %3531 = vrot.lane.b32.xlu0 %v3492, 96
        %v3532 = vpop.permute.xlu0 %3531
        %3533 = vrot.lane.b32.xlu0 %v3493, 96
        %v3534 = vpop.permute.xlu0 %3533
        %3535 = vrot.lane.b32.xlu0 %v3494, 96
        %v3536 = vpop.permute.xlu0 %3535
        %3537 = vrot.lane.b32.xlu0 %v3495, 96
        %v3538 = vpop.permute.xlu0 %3537
        %3539 = vrot.lane.b32.xlu0 %v3496, 96
        %v3540 = vpop.permute.xlu0 %3539
        %3541 = vrot.lane.b32.xlu0 %v3497, 96
        %v3542 = vpop.permute.xlu0 %3541
        %3543 = vrot.lane.b32.xlu0 %v3498, 96
        %v3544 = vpop.permute.xlu0 %3543
        %3545 = vrot.lane.b32.xlu0 %v3499, 96
        %v3546 = vpop.permute.xlu0 %3545
        %3547 = vrot.lane.b32.xlu0 %v3500, 96
        %v3548 = vpop.permute.xlu0 %3547
        %3549 = vrot.lane.b32.xlu0 %v3501, 96
        %v3550 = vpop.permute.xlu0 %3549
        %3551 = vrot.lane.b32.xlu0 %v3502, 96
        %v3552 = vpop.permute.xlu0 %3551
        %3553 = vrot.lane.b32.xlu0 %v3503, 96
        %v3554 = vpop.permute.xlu0 %3553
        %3555 = vrot.lane.b32.xlu0 %v3504, 96
        %v3556 = vpop.permute.xlu0 %3555
        %3557 = vrot.lane.b32.xlu0 %v3505, 96
        %v3558 = vpop.permute.xlu0 %3557
        %3559 = vrot.lane.b32.xlu0 %v3506, 96
        %v3560 = vpop.permute.xlu0 %3559
        %3561 = vrot.lane.b32.xlu0 %v3507, 96
        %v3562 = vpop.permute.xlu0 %3561
        %3563 = vrot.lane.b32.xlu0 %v3508, 96
        %v3564 = vpop.permute.xlu0 %3563
        %3565 = vrot.lane.b32.xlu0 %v3509, 96
        %v3566 = vpop.permute.xlu0 %3565
        %3567 = vrot.lane.b32.xlu0 %v3510, 96
        %v3568 = vpop.permute.xlu0 %3567
        %3569 = vrot.lane.b32.xlu0 %v3511, 96
        %v3570 = vpop.permute.xlu0 %3569
        %3571 = vrot.lane.b32.xlu0 %v3512, 96
        %v3572 = vpop.permute.xlu0 %3571
        %3573 = vrot.lane.b32.xlu0 %v3513, 96
        %v3574 = vpop.permute.xlu0 %3573
        %3575 = vrot.lane.b32.xlu0 %v3514, 96
        %v3576 = vpop.permute.xlu0 %3575
        %3577 = vrot.lane.b32.xlu0 %v3515, 96
        %v3578 = vpop.permute.xlu0 %3577
        %3579 = vrot.lane.b32.xlu0 %v3516, 96
        %v3580 = vpop.permute.xlu0 %3579
        %v3613 = vunpack.c.l.b16 %v2202
        %v3614 = vunpack.c.l.b16 %v2203
        %v3615 = vunpack.c.l.b16 %v2204
        %v3616 = vunpack.c.l.b16 %v2205
        %v3617 = vunpack.c.l.b16 %v2206
        %v3618 = vunpack.c.l.b16 %v2207
        %v3619 = vunpack.c.l.b16 %v2208
        %v3620 = vunpack.c.l.b16 %v2209
        %v3621 = vunpack.c.l.b16 %v2210
        %v3622 = vunpack.c.l.b16 %v2211
        %v3623 = vunpack.c.l.b16 %v2212
        %v3624 = vunpack.c.l.b16 %v2213
        %v3625 = vunpack.c.l.b16 %v2214
        %v3626 = vunpack.c.l.b16 %v2215
        %v3627 = vunpack.c.l.b16 %v2216
        %v3628 = vunpack.c.l.b16 %v2217
        %v3629 = vunpack.c.l.b16 %v2218
        %v3630 = vunpack.c.l.b16 %v2219
        %v3631 = vunpack.c.l.b16 %v2220
        %v3632 = vunpack.c.l.b16 %v2221
        %v3633 = vunpack.c.l.b16 %v2222
        %v3634 = vunpack.c.l.b16 %v2223
        %v3635 = vunpack.c.l.b16 %v2224
        %v3636 = vunpack.c.l.b16 %v2225
        %v3637 = vunpack.c.l.b16 %v2226
        %v3638 = vunpack.c.l.b16 %v2227
        %v3639 = vunpack.c.l.b16 %v2228
        %v3640 = vunpack.c.l.b16 %v2229
        %v3641 = vunpack.c.l.b16 %v2230
        %v3642 = vunpack.c.l.b16 %v2231
        %v3643 = vunpack.c.l.b16 %v2232
        %v3644 = vunpack.c.l.b16 %v2233
        %v3645 = vpack.c.b16 %v3613, %v3613
        %v3646 = vpack.c.b16 %v3614, %v3614
        %v3647 = vpack.c.b16 %v3615, %v3615
        %v3648 = vpack.c.b16 %v3616, %v3616
        %v3649 = vpack.c.b16 %v3617, %v3617
        %v3650 = vpack.c.b16 %v3618, %v3618
        %v3651 = vpack.c.b16 %v3619, %v3619
        %v3652 = vpack.c.b16 %v3620, %v3620
        %v3653 = vpack.c.b16 %v3621, %v3621
        %v3654 = vpack.c.b16 %v3622, %v3622
        %v3655 = vpack.c.b16 %v3623, %v3623
        %v3656 = vpack.c.b16 %v3624, %v3624
        %v3657 = vpack.c.b16 %v3625, %v3625
        %v3658 = vpack.c.b16 %v3626, %v3626
        %v3659 = vpack.c.b16 %v3627, %v3627
        %v3660 = vpack.c.b16 %v3628, %v3628
        %v3661 = vpack.c.b16 %v3629, %v3629
        %v3662 = vpack.c.b16 %v3630, %v3630
        %v3663 = vpack.c.b16 %v3631, %v3631
        %v3664 = vpack.c.b16 %v3632, %v3632
        %v3665 = vpack.c.b16 %v3633, %v3633
        %v3666 = vpack.c.b16 %v3634, %v3634
        %v3667 = vpack.c.b16 %v3635, %v3635
        %v3668 = vpack.c.b16 %v3636, %v3636
        %v3669 = vpack.c.b16 %v3637, %v3637
        %v3670 = vpack.c.b16 %v3638, %v3638
        %v3671 = vpack.c.b16 %v3639, %v3639
        %v3672 = vpack.c.b16 %v3640, %v3640
        %v3673 = vpack.c.b16 %v3641, %v3641
        %v3674 = vpack.c.b16 %v3642, %v3642
        %v3675 = vpack.c.b16 %v3643, %v3643
        %v3676 = vpack.c.b16 %v3644, %v3644
        %v3678 = vshrl.u32 %v3485, 16
        %v3680 = vshll.u32 %v3485, 16
        %v3682 = vrot.slane %v3680, 1
        %v3683 = vor.u32 %v3678, %v3682
        %v3685 = vshll.u32 %v3645, 16
        %v3687 = vrot.slane %v3685, 1
        %v3688 = vsel %vm2651, %v3683, %v3687
        %v3690 = vshrl.u32 %v3486, 16
        %v3692 = vshll.u32 %v3486, 16
        %v3694 = vrot.slane %v3692, 1
        %v3695 = vor.u32 %v3690, %v3694
        %v3697 = vshll.u32 %v3646, 16
        %v3699 = vrot.slane %v3697, 1
        %v3700 = vsel %vm2651, %v3695, %v3699
        %v3702 = vshrl.u32 %v3487, 16
        %v3704 = vshll.u32 %v3487, 16
        %v3706 = vrot.slane %v3704, 1
        %v3707 = vor.u32 %v3702, %v3706
        %v3709 = vshll.u32 %v3647, 16
        %v3711 = vrot.slane %v3709, 1
        %v3712 = vsel %vm2651, %v3707, %v3711
        %v3714 = vshrl.u32 %v3488, 16
        %v3716 = vshll.u32 %v3488, 16
        %v3718 = vrot.slane %v3716, 1
        %v3719 = vor.u32 %v3714, %v3718
        %v3721 = vshll.u32 %v3648, 16
        %v3723 = vrot.slane %v3721, 1
        %v3724 = vsel %vm2651, %v3719, %v3723
        %v3726 = vshrl.u32 %v3489, 16
        %v3728 = vshll.u32 %v3489, 16
        %v3730 = vrot.slane %v3728, 1
        %v3731 = vor.u32 %v3726, %v3730
        %v3733 = vshll.u32 %v3649, 16
        %v3735 = vrot.slane %v3733, 1
        %v3736 = vsel %vm2651, %v3731, %v3735
        %v3738 = vshrl.u32 %v3490, 16
        %v3740 = vshll.u32 %v3490, 16
        %v3742 = vrot.slane %v3740, 1
        %v3743 = vor.u32 %v3738, %v3742
        %v3745 = vshll.u32 %v3650, 16
        %v3747 = vrot.slane %v3745, 1
        %v3748 = vsel %vm2651, %v3743, %v3747
        %v3750 = vshrl.u32 %v3491, 16
        %v3752 = vshll.u32 %v3491, 16
        %v3754 = vrot.slane %v3752, 1
        %v3755 = vor.u32 %v3750, %v3754
        %v3757 = vshll.u32 %v3651, 16
        %v3759 = vrot.slane %v3757, 1
        %v3760 = vsel %vm2651, %v3755, %v3759
        %v3762 = vshrl.u32 %v3492, 16
        %v3764 = vshll.u32 %v3492, 16
        %v3766 = vrot.slane %v3764, 1
        %v3767 = vor.u32 %v3762, %v3766
        %v3769 = vshll.u32 %v3652, 16
        %v3771 = vrot.slane %v3769, 1
        %v3772 = vsel %vm2651, %v3767, %v3771
        %v3774 = vshrl.u32 %v3493, 16
        %v3776 = vshll.u32 %v3493, 16
        %v3778 = vrot.slane %v3776, 1
        %v3779 = vor.u32 %v3774, %v3778
        %v3781 = vshll.u32 %v3653, 16
        %v3783 = vrot.slane %v3781, 1
        %v3784 = vsel %vm2651, %v3779, %v3783
        %v3786 = vshrl.u32 %v3494, 16
        %v3788 = vshll.u32 %v3494, 16
        %v3790 = vrot.slane %v3788, 1
        %v3791 = vor.u32 %v3786, %v3790
        %v3793 = vshll.u32 %v3654, 16
        %v3795 = vrot.slane %v3793, 1
        %v3796 = vsel %vm2651, %v3791, %v3795
        %v3798 = vshrl.u32 %v3495, 16
        %v3800 = vshll.u32 %v3495, 16
        %v3802 = vrot.slane %v3800, 1
        %v3803 = vor.u32 %v3798, %v3802
        %v3805 = vshll.u32 %v3655, 16
        %v3807 = vrot.slane %v3805, 1
        %v3808 = vsel %vm2651, %v3803, %v3807
        %v3810 = vshrl.u32 %v3496, 16
        %v3812 = vshll.u32 %v3496, 16
        %v3814 = vrot.slane %v3812, 1
        %v3815 = vor.u32 %v3810, %v3814
        %v3817 = vshll.u32 %v3656, 16
        %v3819 = vrot.slane %v3817, 1
        %v3820 = vsel %vm2651, %v3815, %v3819
        %v3822 = vshrl.u32 %v3497, 16
        %v3824 = vshll.u32 %v3497, 16
        %v3826 = vrot.slane %v3824, 1
        %v3827 = vor.u32 %v3822, %v3826
        %v3829 = vshll.u32 %v3657, 16
        %v3831 = vrot.slane %v3829, 1
        %v3832 = vsel %vm2651, %v3827, %v3831
        %v3834 = vshrl.u32 %v3498, 16
        %v3836 = vshll.u32 %v3498, 16
        %v3838 = vrot.slane %v3836, 1
        %v3839 = vor.u32 %v3834, %v3838
        %v3841 = vshll.u32 %v3658, 16
        %v3843 = vrot.slane %v3841, 1
        %v3844 = vsel %vm2651, %v3839, %v3843
        %v3846 = vshrl.u32 %v3499, 16
        %v3848 = vshll.u32 %v3499, 16
        %v3850 = vrot.slane %v3848, 1
        %v3851 = vor.u32 %v3846, %v3850
        %v3853 = vshll.u32 %v3659, 16
        %v3855 = vrot.slane %v3853, 1
        %v3856 = vsel %vm2651, %v3851, %v3855
        %v3858 = vshrl.u32 %v3500, 16
        %v3860 = vshll.u32 %v3500, 16
        %v3862 = vrot.slane %v3860, 1
        %v3863 = vor.u32 %v3858, %v3862
        %v3865 = vshll.u32 %v3660, 16
        %v3867 = vrot.slane %v3865, 1
        %v3868 = vsel %vm2651, %v3863, %v3867
        %v3870 = vshrl.u32 %v3501, 16
        %v3872 = vshll.u32 %v3501, 16
        %v3874 = vrot.slane %v3872, 1
        %v3875 = vor.u32 %v3870, %v3874
        %v3877 = vshll.u32 %v3661, 16
        %v3879 = vrot.slane %v3877, 1
        %v3880 = vsel %vm2651, %v3875, %v3879
        %v3882 = vshrl.u32 %v3502, 16
        %v3884 = vshll.u32 %v3502, 16
        %v3886 = vrot.slane %v3884, 1
        %v3887 = vor.u32 %v3882, %v3886
        %v3889 = vshll.u32 %v3662, 16
        %v3891 = vrot.slane %v3889, 1
        %v3892 = vsel %vm2651, %v3887, %v3891
        %v3894 = vshrl.u32 %v3503, 16
        %v3896 = vshll.u32 %v3503, 16
        %v3898 = vrot.slane %v3896, 1
        %v3899 = vor.u32 %v3894, %v3898
        %v3901 = vshll.u32 %v3663, 16
        %v3903 = vrot.slane %v3901, 1
        %v3904 = vsel %vm2651, %v3899, %v3903
        %v3906 = vshrl.u32 %v3504, 16
        %v3908 = vshll.u32 %v3504, 16
        %v3910 = vrot.slane %v3908, 1
        %v3911 = vor.u32 %v3906, %v3910
        %v3913 = vshll.u32 %v3664, 16
        %v3915 = vrot.slane %v3913, 1
        %v3916 = vsel %vm2651, %v3911, %v3915
        %v3918 = vshrl.u32 %v3505, 16
        %v3920 = vshll.u32 %v3505, 16
        %v3922 = vrot.slane %v3920, 1
        %v3923 = vor.u32 %v3918, %v3922
        %v3925 = vshll.u32 %v3665, 16
        %v3927 = vrot.slane %v3925, 1
        %v3928 = vsel %vm2651, %v3923, %v3927
        %v3930 = vshrl.u32 %v3506, 16
        %v3932 = vshll.u32 %v3506, 16
        %v3934 = vrot.slane %v3932, 1
        %v3935 = vor.u32 %v3930, %v3934
        %v3937 = vshll.u32 %v3666, 16
        %v3939 = vrot.slane %v3937, 1
        %v3940 = vsel %vm2651, %v3935, %v3939
        %v3942 = vshrl.u32 %v3507, 16
        %v3944 = vshll.u32 %v3507, 16
        %v3946 = vrot.slane %v3944, 1
        %v3947 = vor.u32 %v3942, %v3946
        %v3949 = vshll.u32 %v3667, 16
        %v3951 = vrot.slane %v3949, 1
        %v3952 = vsel %vm2651, %v3947, %v3951
        %v3954 = vshrl.u32 %v3508, 16
        %v3956 = vshll.u32 %v3508, 16
        %v3958 = vrot.slane %v3956, 1
        %v3959 = vor.u32 %v3954, %v3958
        %v3961 = vshll.u32 %v3668, 16
        %v3963 = vrot.slane %v3961, 1
        %v3964 = vsel %vm2651, %v3959, %v3963
        %v3966 = vshrl.u32 %v3509, 16
        %v3968 = vshll.u32 %v3509, 16
        %v3970 = vrot.slane %v3968, 1
        %v3971 = vor.u32 %v3966, %v3970
        %v3973 = vshll.u32 %v3669, 16
        %v3975 = vrot.slane %v3973, 1
        %v3976 = vsel %vm2651, %v3971, %v3975
        %v3978 = vshrl.u32 %v3510, 16
        %v3980 = vshll.u32 %v3510, 16
        %v3982 = vrot.slane %v3980, 1
        %v3983 = vor.u32 %v3978, %v3982
        %v3985 = vshll.u32 %v3670, 16
        %v3987 = vrot.slane %v3985, 1
        %v3988 = vsel %vm2651, %v3983, %v3987
        %v3990 = vshrl.u32 %v3511, 16
        %v3992 = vshll.u32 %v3511, 16
        %v3994 = vrot.slane %v3992, 1
        %v3995 = vor.u32 %v3990, %v3994
        %v3997 = vshll.u32 %v3671, 16
        %v3999 = vrot.slane %v3997, 1
        %v4000 = vsel %vm2651, %v3995, %v3999
        %v4002 = vshrl.u32 %v3512, 16
        %v4004 = vshll.u32 %v3512, 16
        %v4006 = vrot.slane %v4004, 1
        %v4007 = vor.u32 %v4002, %v4006
        %v4009 = vshll.u32 %v3672, 16
        %v4011 = vrot.slane %v4009, 1
        %v4012 = vsel %vm2651, %v4007, %v4011
        %v4014 = vshrl.u32 %v3513, 16
        %v4016 = vshll.u32 %v3513, 16
        %v4018 = vrot.slane %v4016, 1
        %v4019 = vor.u32 %v4014, %v4018
        %v4021 = vshll.u32 %v3673, 16
        %v4023 = vrot.slane %v4021, 1
        %v4024 = vsel %vm2651, %v4019, %v4023
        %v4026 = vshrl.u32 %v3514, 16
        %v4028 = vshll.u32 %v3514, 16
        %v4030 = vrot.slane %v4028, 1
        %v4031 = vor.u32 %v4026, %v4030
        %v4033 = vshll.u32 %v3674, 16
        %v4035 = vrot.slane %v4033, 1
        %v4036 = vsel %vm2651, %v4031, %v4035
        %v4038 = vshrl.u32 %v3515, 16
        %v4040 = vshll.u32 %v3515, 16
        %v4042 = vrot.slane %v4040, 1
        %v4043 = vor.u32 %v4038, %v4042
        %v4045 = vshll.u32 %v3675, 16
        %v4047 = vrot.slane %v4045, 1
        %v4048 = vsel %vm2651, %v4043, %v4047
        %v4050 = vshrl.u32 %v3516, 16
        %v4052 = vshll.u32 %v3516, 16
        %v4054 = vrot.slane %v4052, 1
        %v4055 = vor.u32 %v4050, %v4054
        %v4057 = vshll.u32 %v3676, 16
        %v4059 = vrot.slane %v4057, 1
        %v4060 = vsel %vm2651, %v4055, %v4059
        %v4093 = vunpack.c.l.b16 %v2234
        %v4094 = vunpack.c.l.b16 %v2235
        %v4095 = vunpack.c.l.b16 %v2236
        %v4096 = vunpack.c.l.b16 %v2237
        %v4097 = vunpack.c.l.b16 %v2238
        %v4098 = vunpack.c.l.b16 %v2239
        %v4099 = vunpack.c.l.b16 %v2240
        %v4100 = vunpack.c.l.b16 %v2241
        %v4101 = vunpack.c.l.b16 %v2242
        %v4102 = vunpack.c.l.b16 %v2243
        %v4103 = vunpack.c.l.b16 %v2244
        %v4104 = vunpack.c.l.b16 %v2245
        %v4105 = vunpack.c.l.b16 %v2246
        %v4106 = vunpack.c.l.b16 %v2247
        %v4107 = vunpack.c.l.b16 %v2248
        %v4108 = vunpack.c.l.b16 %v2249
        %v4109 = vunpack.c.l.b16 %v2250
        %v4110 = vunpack.c.l.b16 %v2251
        %v4111 = vunpack.c.l.b16 %v2252
        %v4112 = vunpack.c.l.b16 %v2253
        %v4113 = vunpack.c.l.b16 %v2254
        %v4114 = vunpack.c.l.b16 %v2255
        %v4115 = vunpack.c.l.b16 %v2256
        %v4116 = vunpack.c.l.b16 %v2257
        %v4117 = vunpack.c.l.b16 %v2258
        %v4118 = vunpack.c.l.b16 %v2259
        %v4119 = vunpack.c.l.b16 %v2260
        %v4120 = vunpack.c.l.b16 %v2261
        %v4121 = vunpack.c.l.b16 %v2262
        %v4122 = vunpack.c.l.b16 %v2263
        %v4123 = vunpack.c.l.b16 %v2264
        %v4124 = vunpack.c.l.b16 %v2265
        %v4125 = vpack.c.b16 %v3422, %v4093
        %v4126 = vpack.c.b16 %v3424, %v4094
        %v4127 = vpack.c.b16 %v3426, %v4095
        %v4128 = vpack.c.b16 %v3428, %v4096
        %v4129 = vpack.c.b16 %v3430, %v4097
        %v4130 = vpack.c.b16 %v3432, %v4098
        %v4131 = vpack.c.b16 %v3434, %v4099
        %v4132 = vpack.c.b16 %v3436, %v4100
        %v4133 = vpack.c.b16 %v3438, %v4101
        %v4134 = vpack.c.b16 %v3440, %v4102
        %v4135 = vpack.c.b16 %v3442, %v4103
        %v4136 = vpack.c.b16 %v3444, %v4104
        %v4137 = vpack.c.b16 %v3446, %v4105
        %v4138 = vpack.c.b16 %v3448, %v4106
        %v4139 = vpack.c.b16 %v3450, %v4107
        %v4140 = vpack.c.b16 %v3452, %v4108
        %v4141 = vpack.c.b16 %v3454, %v4109
        %v4142 = vpack.c.b16 %v3456, %v4110
        %v4143 = vpack.c.b16 %v3458, %v4111
        %v4144 = vpack.c.b16 %v3460, %v4112
        %v4145 = vpack.c.b16 %v3462, %v4113
        %v4146 = vpack.c.b16 %v3464, %v4114
        %v4147 = vpack.c.b16 %v3466, %v4115
        %v4148 = vpack.c.b16 %v3468, %v4116
        %v4149 = vpack.c.b16 %v3470, %v4117
        %v4150 = vpack.c.b16 %v3472, %v4118
        %v4151 = vpack.c.b16 %v3474, %v4119
        %v4152 = vpack.c.b16 %v3476, %v4120
        %v4153 = vpack.c.b16 %v3478, %v4121
        %v4154 = vpack.c.b16 %v3480, %v4122
        %v4155 = vpack.c.b16 %v3482, %v4123
        %v4156 = vpack.c.b16 %v3484, %v4124
        %v4157 = vrot.slane %v4125, 1
        %v4158 = vrot.slane %v3645, 1
        %v4159 = vsel %vm3196, %v4157, %v4158
        %v4160 = vrot.slane %v4126, 1
        %v4161 = vrot.slane %v3646, 1
        %v4162 = vsel %vm3196, %v4160, %v4161
        %v4163 = vrot.slane %v4127, 1
        %v4164 = vrot.slane %v3647, 1
        %v4165 = vsel %vm3196, %v4163, %v4164
        %v4166 = vrot.slane %v4128, 1
        %v4167 = vrot.slane %v3648, 1
        %v4168 = vsel %vm3196, %v4166, %v4167
        %v4169 = vrot.slane %v4129, 1
        %v4170 = vrot.slane %v3649, 1
        %v4171 = vsel %vm3196, %v4169, %v4170
        %v4172 = vrot.slane %v4130, 1
        %v4173 = vrot.slane %v3650, 1
        %v4174 = vsel %vm3196, %v4172, %v4173
        %v4175 = vrot.slane %v4131, 1
        %v4176 = vrot.slane %v3651, 1
        %v4177 = vsel %vm3196, %v4175, %v4176
        %v4178 = vrot.slane %v4132, 1
        %v4179 = vrot.slane %v3652, 1
        %v4180 = vsel %vm3196, %v4178, %v4179
        %v4181 = vrot.slane %v4133, 1
        %v4182 = vrot.slane %v3653, 1
        %v4183 = vsel %vm3196, %v4181, %v4182
        %v4184 = vrot.slane %v4134, 1
        %v4185 = vrot.slane %v3654, 1
        %v4186 = vsel %vm3196, %v4184, %v4185
        %v4187 = vrot.slane %v4135, 1
        %v4188 = vrot.slane %v3655, 1
        %v4189 = vsel %vm3196, %v4187, %v4188
        %v4190 = vrot.slane %v4136, 1
        %v4191 = vrot.slane %v3656, 1
        %v4192 = vsel %vm3196, %v4190, %v4191
        %v4193 = vrot.slane %v4137, 1
        %v4194 = vrot.slane %v3657, 1
        %v4195 = vsel %vm3196, %v4193, %v4194
        %v4196 = vrot.slane %v4138, 1
        %v4197 = vrot.slane %v3658, 1
        %v4198 = vsel %vm3196, %v4196, %v4197
        %v4199 = vrot.slane %v4139, 1
        %v4200 = vrot.slane %v3659, 1
        %v4201 = vsel %vm3196, %v4199, %v4200
        %v4202 = vrot.slane %v4140, 1
        %v4203 = vrot.slane %v3660, 1
        %v4204 = vsel %vm3196, %v4202, %v4203
        %v4205 = vrot.slane %v4141, 1
        %v4206 = vrot.slane %v3661, 1
        %v4207 = vsel %vm3196, %v4205, %v4206
        %v4208 = vrot.slane %v4142, 1
        %v4209 = vrot.slane %v3662, 1
        %v4210 = vsel %vm3196, %v4208, %v4209
        %v4211 = vrot.slane %v4143, 1
        %v4212 = vrot.slane %v3663, 1
        %v4213 = vsel %vm3196, %v4211, %v4212
        %v4214 = vrot.slane %v4144, 1
        %v4215 = vrot.slane %v3664, 1
        %v4216 = vsel %vm3196, %v4214, %v4215
        %v4217 = vrot.slane %v4145, 1
        %v4218 = vrot.slane %v3665, 1
        %v4219 = vsel %vm3196, %v4217, %v4218
        %v4220 = vrot.slane %v4146, 1
        %v4221 = vrot.slane %v3666, 1
        %v4222 = vsel %vm3196, %v4220, %v4221
        %v4223 = vrot.slane %v4147, 1
        %v4224 = vrot.slane %v3667, 1
        %v4225 = vsel %vm3196, %v4223, %v4224
        %v4226 = vrot.slane %v4148, 1
        %v4227 = vrot.slane %v3668, 1
        %v4228 = vsel %vm3196, %v4226, %v4227
        %v4229 = vrot.slane %v4149, 1
        %v4230 = vrot.slane %v3669, 1
        %v4231 = vsel %vm3196, %v4229, %v4230
        %v4232 = vrot.slane %v4150, 1
        %v4233 = vrot.slane %v3670, 1
        %v4234 = vsel %vm3196, %v4232, %v4233
        %v4235 = vrot.slane %v4151, 1
        %v4236 = vrot.slane %v3671, 1
        %v4237 = vsel %vm3196, %v4235, %v4236
        %v4238 = vrot.slane %v4152, 1
        %v4239 = vrot.slane %v3672, 1
        %v4240 = vsel %vm3196, %v4238, %v4239
        %v4241 = vrot.slane %v4153, 1
        %v4242 = vrot.slane %v3673, 1
        %v4243 = vsel %vm3196, %v4241, %v4242
        %v4244 = vrot.slane %v4154, 1
        %v4245 = vrot.slane %v3674, 1
        %v4246 = vsel %vm3196, %v4244, %v4245
        %v4247 = vrot.slane %v4155, 1
        %v4248 = vrot.slane %v3675, 1
        %v4249 = vsel %vm3196, %v4247, %v4248
        %v4250 = vrot.slane %v4156, 1
        %v4251 = vrot.slane %v3676, 1
        %v4252 = vsel %vm3196, %v4250, %v4251
        %4253 = vrot.lane.b32.xlu0 %v4159, 32
        %v4254 = vpop.permute.xlu0 %4253
        %4255 = vrot.lane.b32.xlu0 %v4162, 32
        %v4256 = vpop.permute.xlu0 %4255
        %4257 = vrot.lane.b32.xlu0 %v4165, 32
        %v4258 = vpop.permute.xlu0 %4257
        %4259 = vrot.lane.b32.xlu0 %v4168, 32
        %v4260 = vpop.permute.xlu0 %4259
        %4261 = vrot.lane.b32.xlu0 %v4171, 32
        %v4262 = vpop.permute.xlu0 %4261
        %4263 = vrot.lane.b32.xlu0 %v4174, 32
        %v4264 = vpop.permute.xlu0 %4263
        %4265 = vrot.lane.b32.xlu0 %v4177, 32
        %v4266 = vpop.permute.xlu0 %4265
        %4267 = vrot.lane.b32.xlu0 %v4180, 32
        %v4268 = vpop.permute.xlu0 %4267
        %4269 = vrot.lane.b32.xlu0 %v4183, 32
        %v4270 = vpop.permute.xlu0 %4269
        %4271 = vrot.lane.b32.xlu0 %v4186, 32
        %v4272 = vpop.permute.xlu0 %4271
        %4273 = vrot.lane.b32.xlu0 %v4189, 32
        %v4274 = vpop.permute.xlu0 %4273
        %4275 = vrot.lane.b32.xlu0 %v4192, 32
        %v4276 = vpop.permute.xlu0 %4275
        %4277 = vrot.lane.b32.xlu0 %v4195, 32
        %v4278 = vpop.permute.xlu0 %4277
        %4279 = vrot.lane.b32.xlu0 %v4198, 32
        %v4280 = vpop.permute.xlu0 %4279
        %4281 = vrot.lane.b32.xlu0 %v4201, 32
        %v4282 = vpop.permute.xlu0 %4281
        %4283 = vrot.lane.b32.xlu0 %v4204, 32
        %v4284 = vpop.permute.xlu0 %4283
        %4285 = vrot.lane.b32.xlu0 %v4207, 32
        %v4286 = vpop.permute.xlu0 %4285
        %4287 = vrot.lane.b32.xlu0 %v4210, 32
        %v4288 = vpop.permute.xlu0 %4287
        %4289 = vrot.lane.b32.xlu0 %v4213, 32
        %v4290 = vpop.permute.xlu0 %4289
        %4291 = vrot.lane.b32.xlu0 %v4216, 32
        %v4292 = vpop.permute.xlu0 %4291
        %4293 = vrot.lane.b32.xlu0 %v4219, 32
        %v4294 = vpop.permute.xlu0 %4293
        %4295 = vrot.lane.b32.xlu0 %v4222, 32
        %v4296 = vpop.permute.xlu0 %4295
        %4297 = vrot.lane.b32.xlu0 %v4225, 32
        %v4298 = vpop.permute.xlu0 %4297
        %4299 = vrot.lane.b32.xlu0 %v4228, 32
        %v4300 = vpop.permute.xlu0 %4299
        %4301 = vrot.lane.b32.xlu0 %v4231, 32
        %v4302 = vpop.permute.xlu0 %4301
        %4303 = vrot.lane.b32.xlu0 %v4234, 32
        %v4304 = vpop.permute.xlu0 %4303
        %4305 = vrot.lane.b32.xlu0 %v4237, 32
        %v4306 = vpop.permute.xlu0 %4305
        %4307 = vrot.lane.b32.xlu0 %v4240, 32
        %v4308 = vpop.permute.xlu0 %4307
        %4309 = vrot.lane.b32.xlu0 %v4243, 32
        %v4310 = vpop.permute.xlu0 %4309
        %4311 = vrot.lane.b32.xlu0 %v4246, 32
        %v4312 = vpop.permute.xlu0 %4311
        %4313 = vrot.lane.b32.xlu0 %v4249, 32
        %v4314 = vpop.permute.xlu0 %4313
        %4315 = vrot.lane.b32.xlu0 %v4252, 32
        %v4316 = vpop.permute.xlu0 %4315
        %v4381 = vunpack.c.l.b16 %v2267
        %v4382 = vunpack.c.l.b16 %v2268
        %v4383 = vunpack.c.l.b16 %v2269
        %v4384 = vunpack.c.l.b16 %v2270
        %v4385 = vunpack.c.l.b16 %v2271
        %v4386 = vunpack.c.l.b16 %v2272
        %v4387 = vunpack.c.l.b16 %v2273
        %v4388 = vunpack.c.l.b16 %v2274
        %v4389 = vunpack.c.l.b16 %v2275
        %v4390 = vunpack.c.l.b16 %v2276
        %v4391 = vunpack.c.l.b16 %v2277
        %v4392 = vunpack.c.l.b16 %v2278
        %v4393 = vunpack.c.l.b16 %v2279
        %v4394 = vunpack.c.l.b16 %v2280
        %v4395 = vunpack.c.l.b16 %v2281
        %v4396 = vunpack.c.l.b16 %v2282
        %v4397 = vunpack.c.l.b16 %v2283
        %v4398 = vunpack.c.l.b16 %v2284
        %v4399 = vunpack.c.l.b16 %v2285
        %v4400 = vunpack.c.l.b16 %v2286
        %v4401 = vunpack.c.l.b16 %v2287
        %v4402 = vunpack.c.l.b16 %v2288
        %v4403 = vunpack.c.l.b16 %v2289
        %v4404 = vunpack.c.l.b16 %v2290
        %v4405 = vunpack.c.l.b16 %v2291
        %v4406 = vunpack.c.l.b16 %v2292
        %v4407 = vunpack.c.l.b16 %v2293
        %v4408 = vunpack.c.l.b16 %v2294
        %v4409 = vunpack.c.l.b16 %v2295
        %v4410 = vunpack.c.l.b16 %v2296
        %v4411 = vunpack.c.l.b16 %v2297
        %v4412 = vunpack.c.l.b16 %v2298
        %v4413 = vunpack.c.l.b16 %v2299
        %v4414 = vunpack.c.l.b16 %v2300
        %v4415 = vunpack.c.l.b16 %v2301
        %v4416 = vunpack.c.l.b16 %v2302
        %v4417 = vunpack.c.l.b16 %v2303
        %v4418 = vunpack.c.l.b16 %v2304
        %v4419 = vunpack.c.l.b16 %v2305
        %v4420 = vunpack.c.l.b16 %v2306
        %v4421 = vunpack.c.l.b16 %v2307
        %v4422 = vunpack.c.l.b16 %v2308
        %v4423 = vunpack.c.l.b16 %v2309
        %v4424 = vunpack.c.l.b16 %v2310
        %v4425 = vunpack.c.l.b16 %v2311
        %v4426 = vunpack.c.l.b16 %v2312
        %v4427 = vunpack.c.l.b16 %v2313
        %v4428 = vunpack.c.l.b16 %v2314
        %v4429 = vunpack.c.l.b16 %v2315
        %v4430 = vunpack.c.l.b16 %v2316
        %v4431 = vunpack.c.l.b16 %v2317
        %v4432 = vunpack.c.l.b16 %v2318
        %v4433 = vunpack.c.l.b16 %v2319
        %v4434 = vunpack.c.l.b16 %v2320
        %v4435 = vunpack.c.l.b16 %v2321
        %v4436 = vunpack.c.l.b16 %v2322
        %v4437 = vunpack.c.l.b16 %v2323
        %v4438 = vunpack.c.l.b16 %v2324
        %v4439 = vunpack.c.l.b16 %v2325
        %v4440 = vunpack.c.l.b16 %v2326
        %v4441 = vunpack.c.l.b16 %v2327
        %v4442 = vunpack.c.l.b16 %v2328
        %v4443 = vunpack.c.l.b16 %v2329
        %v4444 = vunpack.c.l.b16 %v2330
        %v4445 = vpack.c.b16 %v4382, %v4381
        %v4446 = vpack.c.b16 %v4384, %v4383
        %v4447 = vpack.c.b16 %v4386, %v4385
        %v4448 = vpack.c.b16 %v4388, %v4387
        %v4449 = vpack.c.b16 %v4390, %v4389
        %v4450 = vpack.c.b16 %v4392, %v4391
        %v4451 = vpack.c.b16 %v4394, %v4393
        %v4452 = vpack.c.b16 %v4396, %v4395
        %v4453 = vpack.c.b16 %v4398, %v4397
        %v4454 = vpack.c.b16 %v4400, %v4399
        %v4455 = vpack.c.b16 %v4402, %v4401
        %v4456 = vpack.c.b16 %v4404, %v4403
        %v4457 = vpack.c.b16 %v4406, %v4405
        %v4458 = vpack.c.b16 %v4408, %v4407
        %v4459 = vpack.c.b16 %v4410, %v4409
        %v4460 = vpack.c.b16 %v4412, %v4411
        %v4461 = vpack.c.b16 %v4414, %v4413
        %v4462 = vpack.c.b16 %v4416, %v4415
        %v4463 = vpack.c.b16 %v4418, %v4417
        %v4464 = vpack.c.b16 %v4420, %v4419
        %v4465 = vpack.c.b16 %v4422, %v4421
        %v4466 = vpack.c.b16 %v4424, %v4423
        %v4467 = vpack.c.b16 %v4426, %v4425
        %v4468 = vpack.c.b16 %v4428, %v4427
        %v4469 = vpack.c.b16 %v4430, %v4429
        %v4470 = vpack.c.b16 %v4432, %v4431
        %v4471 = vpack.c.b16 %v4434, %v4433
        %v4472 = vpack.c.b16 %v4436, %v4435
        %v4473 = vpack.c.b16 %v4438, %v4437
        %v4474 = vpack.c.b16 %v4440, %v4439
        %v4475 = vpack.c.b16 %v4442, %v4441
        %v4476 = vpack.c.b16 %v4444, %v4443
        %4477 = vrot.lane.b32.xlu0 %v4445, 64
        %v4478 = vpop.permute.xlu0 %4477
        %4479 = vrot.lane.b32.xlu0 %v4446, 64
        %v4480 = vpop.permute.xlu0 %4479
        %4481 = vrot.lane.b32.xlu0 %v4447, 64
        %v4482 = vpop.permute.xlu0 %4481
        %4483 = vrot.lane.b32.xlu0 %v4448, 64
        %v4484 = vpop.permute.xlu0 %4483
        %4485 = vrot.lane.b32.xlu0 %v4449, 64
        %v4486 = vpop.permute.xlu0 %4485
        %4487 = vrot.lane.b32.xlu0 %v4450, 64
        %v4488 = vpop.permute.xlu0 %4487
        %4489 = vrot.lane.b32.xlu0 %v4451, 64
        %v4490 = vpop.permute.xlu0 %4489
        %4491 = vrot.lane.b32.xlu0 %v4452, 64
        %v4492 = vpop.permute.xlu0 %4491
        %4493 = vrot.lane.b32.xlu0 %v4453, 64
        %v4494 = vpop.permute.xlu0 %4493
        %4495 = vrot.lane.b32.xlu0 %v4454, 64
        %v4496 = vpop.permute.xlu0 %4495
        %4497 = vrot.lane.b32.xlu0 %v4455, 64
        %v4498 = vpop.permute.xlu0 %4497
        %4499 = vrot.lane.b32.xlu0 %v4456, 64
        %v4500 = vpop.permute.xlu0 %4499
        %4501 = vrot.lane.b32.xlu0 %v4457, 64
        %v4502 = vpop.permute.xlu0 %4501
        %4503 = vrot.lane.b32.xlu0 %v4458, 64
        %v4504 = vpop.permute.xlu0 %4503
        %4505 = vrot.lane.b32.xlu0 %v4459, 64
        %v4506 = vpop.permute.xlu0 %4505
        %4507 = vrot.lane.b32.xlu0 %v4460, 64
        %v4508 = vpop.permute.xlu0 %4507
        %4509 = vrot.lane.b32.xlu0 %v4461, 64
        %v4510 = vpop.permute.xlu0 %4509
        %4511 = vrot.lane.b32.xlu0 %v4462, 64
        %v4512 = vpop.permute.xlu0 %4511
        %4513 = vrot.lane.b32.xlu0 %v4463, 64
        %v4514 = vpop.permute.xlu0 %4513
        %4515 = vrot.lane.b32.xlu0 %v4464, 64
        %v4516 = vpop.permute.xlu0 %4515
        %4517 = vrot.lane.b32.xlu0 %v4465, 64
        %v4518 = vpop.permute.xlu0 %4517
        %4519 = vrot.lane.b32.xlu0 %v4466, 64
        %v4520 = vpop.permute.xlu0 %4519
        %4521 = vrot.lane.b32.xlu0 %v4467, 64
        %v4522 = vpop.permute.xlu0 %4521
        %4523 = vrot.lane.b32.xlu0 %v4468, 64
        %v4524 = vpop.permute.xlu0 %4523
        %4525 = vrot.lane.b32.xlu0 %v4469, 64
        %v4526 = vpop.permute.xlu0 %4525
        %4527 = vrot.lane.b32.xlu0 %v4470, 64
        %v4528 = vpop.permute.xlu0 %4527
        %4529 = vrot.lane.b32.xlu0 %v4471, 64
        %v4530 = vpop.permute.xlu0 %4529
        %4531 = vrot.lane.b32.xlu0 %v4472, 64
        %v4532 = vpop.permute.xlu0 %4531
        %4533 = vrot.lane.b32.xlu0 %v4473, 64
        %v4534 = vpop.permute.xlu0 %4533
        %4535 = vrot.lane.b32.xlu0 %v4474, 64
        %v4536 = vpop.permute.xlu0 %4535
        %4537 = vrot.lane.b32.xlu0 %v4475, 64
        %v4538 = vpop.permute.xlu0 %4537
        %4539 = vrot.lane.b32.xlu0 %v4476, 64
        %v4540 = vpop.permute.xlu0 %4539
        %v4573 = vunpack.c.l.b16 %v2331
        %v4574 = vunpack.c.l.b16 %v2332
        %v4575 = vunpack.c.l.b16 %v2333
        %v4576 = vunpack.c.l.b16 %v2334
        %v4577 = vunpack.c.l.b16 %v2335
        %v4578 = vunpack.c.l.b16 %v2336
        %v4579 = vunpack.c.l.b16 %v2337
        %v4580 = vunpack.c.l.b16 %v2338
        %v4581 = vunpack.c.l.b16 %v2339
        %v4582 = vunpack.c.l.b16 %v2340
        %v4583 = vunpack.c.l.b16 %v2341
        %v4584 = vunpack.c.l.b16 %v2342
        %v4585 = vunpack.c.l.b16 %v2343
        %v4586 = vunpack.c.l.b16 %v2344
        %v4587 = vunpack.c.l.b16 %v2345
        %v4588 = vunpack.c.l.b16 %v2346
        %v4589 = vunpack.c.l.b16 %v2347
        %v4590 = vunpack.c.l.b16 %v2348
        %v4591 = vunpack.c.l.b16 %v2349
        %v4592 = vunpack.c.l.b16 %v2350
        %v4593 = vunpack.c.l.b16 %v2351
        %v4594 = vunpack.c.l.b16 %v2352
        %v4595 = vunpack.c.l.b16 %v2353
        %v4596 = vunpack.c.l.b16 %v2354
        %v4597 = vunpack.c.l.b16 %v2355
        %v4598 = vunpack.c.l.b16 %v2356
        %v4599 = vunpack.c.l.b16 %v2357
        %v4600 = vunpack.c.l.b16 %v2358
        %v4601 = vunpack.c.l.b16 %v2359
        %v4602 = vunpack.c.l.b16 %v2360
        %v4603 = vunpack.c.l.b16 %v2361
        %v4604 = vunpack.c.l.b16 %v2362
        %v4605 = vpack.c.b16 %v4573, %v4573
        %v4606 = vpack.c.b16 %v4574, %v4574
        %v4607 = vpack.c.b16 %v4575, %v4575
        %v4608 = vpack.c.b16 %v4576, %v4576
        %v4609 = vpack.c.b16 %v4577, %v4577
        %v4610 = vpack.c.b16 %v4578, %v4578
        %v4611 = vpack.c.b16 %v4579, %v4579
        %v4612 = vpack.c.b16 %v4580, %v4580
        %v4613 = vpack.c.b16 %v4581, %v4581
        %v4614 = vpack.c.b16 %v4582, %v4582
        %v4615 = vpack.c.b16 %v4583, %v4583
        %v4616 = vpack.c.b16 %v4584, %v4584
        %v4617 = vpack.c.b16 %v4585, %v4585
        %v4618 = vpack.c.b16 %v4586, %v4586
        %v4619 = vpack.c.b16 %v4587, %v4587
        %v4620 = vpack.c.b16 %v4588, %v4588
        %v4621 = vpack.c.b16 %v4589, %v4589
        %v4622 = vpack.c.b16 %v4590, %v4590
        %v4623 = vpack.c.b16 %v4591, %v4591
        %v4624 = vpack.c.b16 %v4592, %v4592
        %v4625 = vpack.c.b16 %v4593, %v4593
        %v4626 = vpack.c.b16 %v4594, %v4594
        %v4627 = vpack.c.b16 %v4595, %v4595
        %v4628 = vpack.c.b16 %v4596, %v4596
        %v4629 = vpack.c.b16 %v4597, %v4597
        %v4630 = vpack.c.b16 %v4598, %v4598
        %v4631 = vpack.c.b16 %v4599, %v4599
        %v4632 = vpack.c.b16 %v4600, %v4600
        %v4633 = vpack.c.b16 %v4601, %v4601
        %v4634 = vpack.c.b16 %v4602, %v4602
        %v4635 = vpack.c.b16 %v4603, %v4603
        %v4636 = vpack.c.b16 %v4604, %v4604
        %v4638 = vshrl.u32 %v4445, 16
        %v4640 = vshll.u32 %v4445, 16
        %v4642 = vrot.slane %v4640, 1
        %v4643 = vor.u32 %v4638, %v4642
        %v4645 = vshll.u32 %v4605, 16
        %v4647 = vrot.slane %v4645, 1
        %v4648 = vsel %vm2651, %v4643, %v4647
        %v4650 = vshrl.u32 %v4446, 16
        %v4652 = vshll.u32 %v4446, 16
        %v4654 = vrot.slane %v4652, 1
        %v4655 = vor.u32 %v4650, %v4654
        %v4657 = vshll.u32 %v4606, 16
        %v4659 = vrot.slane %v4657, 1
        %v4660 = vsel %vm2651, %v4655, %v4659
        %v4662 = vshrl.u32 %v4447, 16
        %v4664 = vshll.u32 %v4447, 16
        %v4666 = vrot.slane %v4664, 1
        %v4667 = vor.u32 %v4662, %v4666
        %v4669 = vshll.u32 %v4607, 16
        %v4671 = vrot.slane %v4669, 1
        %v4672 = vsel %vm2651, %v4667, %v4671
        %v4674 = vshrl.u32 %v4448, 16
        %v4676 = vshll.u32 %v4448, 16
        %v4678 = vrot.slane %v4676, 1
        %v4679 = vor.u32 %v4674, %v4678
        %v4681 = vshll.u32 %v4608, 16
        %v4683 = vrot.slane %v4681, 1
        %v4684 = vsel %vm2651, %v4679, %v4683
        %v4686 = vshrl.u32 %v4449, 16
        %v4688 = vshll.u32 %v4449, 16
        %v4690 = vrot.slane %v4688, 1
        %v4691 = vor.u32 %v4686, %v4690
        %v4693 = vshll.u32 %v4609, 16
        %v4695 = vrot.slane %v4693, 1
        %v4696 = vsel %vm2651, %v4691, %v4695
        %v4698 = vshrl.u32 %v4450, 16
        %v4700 = vshll.u32 %v4450, 16
        %v4702 = vrot.slane %v4700, 1
        %v4703 = vor.u32 %v4698, %v4702
        %v4705 = vshll.u32 %v4610, 16
        %v4707 = vrot.slane %v4705, 1
        %v4708 = vsel %vm2651, %v4703, %v4707
        %v4710 = vshrl.u32 %v4451, 16
        %v4712 = vshll.u32 %v4451, 16
        %v4714 = vrot.slane %v4712, 1
        %v4715 = vor.u32 %v4710, %v4714
        %v4717 = vshll.u32 %v4611, 16
        %v4719 = vrot.slane %v4717, 1
        %v4720 = vsel %vm2651, %v4715, %v4719
        %v4722 = vshrl.u32 %v4452, 16
        %v4724 = vshll.u32 %v4452, 16
        %v4726 = vrot.slane %v4724, 1
        %v4727 = vor.u32 %v4722, %v4726
        %v4729 = vshll.u32 %v4612, 16
        %v4731 = vrot.slane %v4729, 1
        %v4732 = vsel %vm2651, %v4727, %v4731
        %v4734 = vshrl.u32 %v4453, 16
        %v4736 = vshll.u32 %v4453, 16
        %v4738 = vrot.slane %v4736, 1
        %v4739 = vor.u32 %v4734, %v4738
        %v4741 = vshll.u32 %v4613, 16
        %v4743 = vrot.slane %v4741, 1
        %v4744 = vsel %vm2651, %v4739, %v4743
        %v4746 = vshrl.u32 %v4454, 16
        %v4748 = vshll.u32 %v4454, 16
        %v4750 = vrot.slane %v4748, 1
        %v4751 = vor.u32 %v4746, %v4750
        %v4753 = vshll.u32 %v4614, 16
        %v4755 = vrot.slane %v4753, 1
        %v4756 = vsel %vm2651, %v4751, %v4755
        %v4758 = vshrl.u32 %v4455, 16
        %v4760 = vshll.u32 %v4455, 16
        %v4762 = vrot.slane %v4760, 1
        %v4763 = vor.u32 %v4758, %v4762
        %v4765 = vshll.u32 %v4615, 16
        %v4767 = vrot.slane %v4765, 1
        %v4768 = vsel %vm2651, %v4763, %v4767
        %v4770 = vshrl.u32 %v4456, 16
        %v4772 = vshll.u32 %v4456, 16
        %v4774 = vrot.slane %v4772, 1
        %v4775 = vor.u32 %v4770, %v4774
        %v4777 = vshll.u32 %v4616, 16
        %v4779 = vrot.slane %v4777, 1
        %v4780 = vsel %vm2651, %v4775, %v4779
        %v4782 = vshrl.u32 %v4457, 16
        %v4784 = vshll.u32 %v4457, 16
        %v4786 = vrot.slane %v4784, 1
        %v4787 = vor.u32 %v4782, %v4786
        %v4789 = vshll.u32 %v4617, 16
        %v4791 = vrot.slane %v4789, 1
        %v4792 = vsel %vm2651, %v4787, %v4791
        %v4794 = vshrl.u32 %v4458, 16
        %v4796 = vshll.u32 %v4458, 16
        %v4798 = vrot.slane %v4796, 1
        %v4799 = vor.u32 %v4794, %v4798
        %v4801 = vshll.u32 %v4618, 16
        %v4803 = vrot.slane %v4801, 1
        %v4804 = vsel %vm2651, %v4799, %v4803
        %v4806 = vshrl.u32 %v4459, 16
        %v4808 = vshll.u32 %v4459, 16
        %v4810 = vrot.slane %v4808, 1
        %v4811 = vor.u32 %v4806, %v4810
        %v4813 = vshll.u32 %v4619, 16
        %v4815 = vrot.slane %v4813, 1
        %v4816 = vsel %vm2651, %v4811, %v4815
        %v4818 = vshrl.u32 %v4460, 16
        %v4820 = vshll.u32 %v4460, 16
        %v4822 = vrot.slane %v4820, 1
        %v4823 = vor.u32 %v4818, %v4822
        %v4825 = vshll.u32 %v4620, 16
        %v4827 = vrot.slane %v4825, 1
        %v4828 = vsel %vm2651, %v4823, %v4827
        %v4830 = vshrl.u32 %v4461, 16
        %v4832 = vshll.u32 %v4461, 16
        %v4834 = vrot.slane %v4832, 1
        %v4835 = vor.u32 %v4830, %v4834
        %v4837 = vshll.u32 %v4621, 16
        %v4839 = vrot.slane %v4837, 1
        %v4840 = vsel %vm2651, %v4835, %v4839
        %v4842 = vshrl.u32 %v4462, 16
        %v4844 = vshll.u32 %v4462, 16
        %v4846 = vrot.slane %v4844, 1
        %v4847 = vor.u32 %v4842, %v4846
        %v4849 = vshll.u32 %v4622, 16
        %v4851 = vrot.slane %v4849, 1
        %v4852 = vsel %vm2651, %v4847, %v4851
        %v4854 = vshrl.u32 %v4463, 16
        %v4856 = vshll.u32 %v4463, 16
        %v4858 = vrot.slane %v4856, 1
        %v4859 = vor.u32 %v4854, %v4858
        %v4861 = vshll.u32 %v4623, 16
        %v4863 = vrot.slane %v4861, 1
        %v4864 = vsel %vm2651, %v4859, %v4863
        %v4866 = vshrl.u32 %v4464, 16
        %v4868 = vshll.u32 %v4464, 16
        %v4870 = vrot.slane %v4868, 1
        %v4871 = vor.u32 %v4866, %v4870
        %v4873 = vshll.u32 %v4624, 16
        %v4875 = vrot.slane %v4873, 1
        %v4876 = vsel %vm2651, %v4871, %v4875
        %v4878 = vshrl.u32 %v4465, 16
        %v4880 = vshll.u32 %v4465, 16
        %v4882 = vrot.slane %v4880, 1
        %v4883 = vor.u32 %v4878, %v4882
        %v4885 = vshll.u32 %v4625, 16
        %v4887 = vrot.slane %v4885, 1
        %v4888 = vsel %vm2651, %v4883, %v4887
        %v4890 = vshrl.u32 %v4466, 16
        %v4892 = vshll.u32 %v4466, 16
        %v4894 = vrot.slane %v4892, 1
        %v4895 = vor.u32 %v4890, %v4894
        %v4897 = vshll.u32 %v4626, 16
        %v4899 = vrot.slane %v4897, 1
        %v4900 = vsel %vm2651, %v4895, %v4899
        %v4902 = vshrl.u32 %v4467, 16
        %v4904 = vshll.u32 %v4467, 16
        %v4906 = vrot.slane %v4904, 1
        %v4907 = vor.u32 %v4902, %v4906
        %v4909 = vshll.u32 %v4627, 16
        %v4911 = vrot.slane %v4909, 1
        %v4912 = vsel %vm2651, %v4907, %v4911
        %v4914 = vshrl.u32 %v4468, 16
        %v4916 = vshll.u32 %v4468, 16
        %v4918 = vrot.slane %v4916, 1
        %v4919 = vor.u32 %v4914, %v4918
        %v4921 = vshll.u32 %v4628, 16
        %v4923 = vrot.slane %v4921, 1
        %v4924 = vsel %vm2651, %v4919, %v4923
        %v4926 = vshrl.u32 %v4469, 16
        %v4928 = vshll.u32 %v4469, 16
        %v4930 = vrot.slane %v4928, 1
        %v4931 = vor.u32 %v4926, %v4930
        %v4933 = vshll.u32 %v4629, 16
        %v4935 = vrot.slane %v4933, 1
        %v4936 = vsel %vm2651, %v4931, %v4935
        %v4938 = vshrl.u32 %v4470, 16
        %v4940 = vshll.u32 %v4470, 16
        %v4942 = vrot.slane %v4940, 1
        %v4943 = vor.u32 %v4938, %v4942
        %v4945 = vshll.u32 %v4630, 16
        %v4947 = vrot.slane %v4945, 1
        %v4948 = vsel %vm2651, %v4943, %v4947
        %v4950 = vshrl.u32 %v4471, 16
        %v4952 = vshll.u32 %v4471, 16
        %v4954 = vrot.slane %v4952, 1
        %v4955 = vor.u32 %v4950, %v4954
        %v4957 = vshll.u32 %v4631, 16
        %v4959 = vrot.slane %v4957, 1
        %v4960 = vsel %vm2651, %v4955, %v4959
        %v4962 = vshrl.u32 %v4472, 16
        %v4964 = vshll.u32 %v4472, 16
        %v4966 = vrot.slane %v4964, 1
        %v4967 = vor.u32 %v4962, %v4966
        %v4969 = vshll.u32 %v4632, 16
        %v4971 = vrot.slane %v4969, 1
        %v4972 = vsel %vm2651, %v4967, %v4971
        %v4974 = vshrl.u32 %v4473, 16
        %v4976 = vshll.u32 %v4473, 16
        %v4978 = vrot.slane %v4976, 1
        %v4979 = vor.u32 %v4974, %v4978
        %v4981 = vshll.u32 %v4633, 16
        %v4983 = vrot.slane %v4981, 1
        %v4984 = vsel %vm2651, %v4979, %v4983
        %v4986 = vshrl.u32 %v4474, 16
        %v4988 = vshll.u32 %v4474, 16
        %v4990 = vrot.slane %v4988, 1
        %v4991 = vor.u32 %v4986, %v4990
        %v4993 = vshll.u32 %v4634, 16
        %v4995 = vrot.slane %v4993, 1
        %v4996 = vsel %vm2651, %v4991, %v4995
        %v4998 = vshrl.u32 %v4475, 16
        %v5000 = vshll.u32 %v4475, 16
        %v5002 = vrot.slane %v5000, 1
        %v5003 = vor.u32 %v4998, %v5002
        %v5005 = vshll.u32 %v4635, 16
        %v5007 = vrot.slane %v5005, 1
        %v5008 = vsel %vm2651, %v5003, %v5007
        %v5010 = vshrl.u32 %v4476, 16
        %v5012 = vshll.u32 %v4476, 16
        %v5014 = vrot.slane %v5012, 1
        %v5015 = vor.u32 %v5010, %v5014
        %v5017 = vshll.u32 %v4636, 16
        %v5019 = vrot.slane %v5017, 1
        %v5020 = vsel %vm2651, %v5015, %v5019
        %5021 = vrot.lane.b32.xlu0 %v4648, 96
        %v5022 = vpop.permute.xlu0 %5021
        %5023 = vrot.lane.b32.xlu0 %v4660, 96
        %v5024 = vpop.permute.xlu0 %5023
        %5025 = vrot.lane.b32.xlu0 %v4672, 96
        %v5026 = vpop.permute.xlu0 %5025
        %5027 = vrot.lane.b32.xlu0 %v4684, 96
        %v5028 = vpop.permute.xlu0 %5027
        %5029 = vrot.lane.b32.xlu0 %v4696, 96
        %v5030 = vpop.permute.xlu0 %5029
        %5031 = vrot.lane.b32.xlu0 %v4708, 96
        %v5032 = vpop.permute.xlu0 %5031
        %5033 = vrot.lane.b32.xlu0 %v4720, 96
        %v5034 = vpop.permute.xlu0 %5033
        %5035 = vrot.lane.b32.xlu0 %v4732, 96
        %v5036 = vpop.permute.xlu0 %5035
        %5037 = vrot.lane.b32.xlu0 %v4744, 96
        %v5038 = vpop.permute.xlu0 %5037
        %5039 = vrot.lane.b32.xlu0 %v4756, 96
        %v5040 = vpop.permute.xlu0 %5039
        %5041 = vrot.lane.b32.xlu0 %v4768, 96
        %v5042 = vpop.permute.xlu0 %5041
        %5043 = vrot.lane.b32.xlu0 %v4780, 96
        %v5044 = vpop.permute.xlu0 %5043
        %5045 = vrot.lane.b32.xlu0 %v4792, 96
        %v5046 = vpop.permute.xlu0 %5045
        %5047 = vrot.lane.b32.xlu0 %v4804, 96
        %v5048 = vpop.permute.xlu0 %5047
        %5049 = vrot.lane.b32.xlu0 %v4816, 96
        %v5050 = vpop.permute.xlu0 %5049
        %5051 = vrot.lane.b32.xlu0 %v4828, 96
        %v5052 = vpop.permute.xlu0 %5051
        %5053 = vrot.lane.b32.xlu0 %v4840, 96
        %v5054 = vpop.permute.xlu0 %5053
        %5055 = vrot.lane.b32.xlu0 %v4852, 96
        %v5056 = vpop.permute.xlu0 %5055
        %5057 = vrot.lane.b32.xlu0 %v4864, 96
        %v5058 = vpop.permute.xlu0 %5057
        %5059 = vrot.lane.b32.xlu0 %v4876, 96
        %v5060 = vpop.permute.xlu0 %5059
        %5061 = vrot.lane.b32.xlu0 %v4888, 96
        %v5062 = vpop.permute.xlu0 %5061
        %5063 = vrot.lane.b32.xlu0 %v4900, 96
        %v5064 = vpop.permute.xlu0 %5063
        %5065 = vrot.lane.b32.xlu0 %v4912, 96
        %v5066 = vpop.permute.xlu0 %5065
        %5067 = vrot.lane.b32.xlu0 %v4924, 96
        %v5068 = vpop.permute.xlu0 %5067
        %5069 = vrot.lane.b32.xlu0 %v4936, 96
        %v5070 = vpop.permute.xlu0 %5069
        %5071 = vrot.lane.b32.xlu0 %v4948, 96
        %v5072 = vpop.permute.xlu0 %5071
        %5073 = vrot.lane.b32.xlu0 %v4960, 96
        %v5074 = vpop.permute.xlu0 %5073
        %5075 = vrot.lane.b32.xlu0 %v4972, 96
        %v5076 = vpop.permute.xlu0 %5075
        %5077 = vrot.lane.b32.xlu0 %v4984, 96
        %v5078 = vpop.permute.xlu0 %5077
        %5079 = vrot.lane.b32.xlu0 %v4996, 96
        %v5080 = vpop.permute.xlu0 %5079
        %5081 = vrot.lane.b32.xlu0 %v5008, 96
        %v5082 = vpop.permute.xlu0 %5081
        %5083 = vrot.lane.b32.xlu0 %v5020, 96
        %v5084 = vpop.permute.xlu0 %5083
        %v5117 = vunpack.c.l.b16 %v2363
        %v5118 = vunpack.c.l.b16 %v2364
        %v5119 = vunpack.c.l.b16 %v2365
        %v5120 = vunpack.c.l.b16 %v2366
        %v5121 = vunpack.c.l.b16 %v2367
        %v5122 = vunpack.c.l.b16 %v2368
        %v5123 = vunpack.c.l.b16 %v2369
        %v5124 = vunpack.c.l.b16 %v2370
        %v5125 = vunpack.c.l.b16 %v2371
        %v5126 = vunpack.c.l.b16 %v2372
        %v5127 = vunpack.c.l.b16 %v2373
        %v5128 = vunpack.c.l.b16 %v2374
        %v5129 = vunpack.c.l.b16 %v2375
        %v5130 = vunpack.c.l.b16 %v2376
        %v5131 = vunpack.c.l.b16 %v2377
        %v5132 = vunpack.c.l.b16 %v2378
        %v5133 = vunpack.c.l.b16 %v2379
        %v5134 = vunpack.c.l.b16 %v2380
        %v5135 = vunpack.c.l.b16 %v2381
        %v5136 = vunpack.c.l.b16 %v2382
        %v5137 = vunpack.c.l.b16 %v2383
        %v5138 = vunpack.c.l.b16 %v2384
        %v5139 = vunpack.c.l.b16 %v2385
        %v5140 = vunpack.c.l.b16 %v2386
        %v5141 = vunpack.c.l.b16 %v2387
        %v5142 = vunpack.c.l.b16 %v2388
        %v5143 = vunpack.c.l.b16 %v2389
        %v5144 = vunpack.c.l.b16 %v2390
        %v5145 = vunpack.c.l.b16 %v2391
        %v5146 = vunpack.c.l.b16 %v2392
        %v5147 = vunpack.c.l.b16 %v2393
        %v5148 = vunpack.c.l.b16 %v2394
        %v5149 = vpack.c.b16 %v4382, %v5117
        %v5150 = vpack.c.b16 %v4384, %v5118
        %v5151 = vpack.c.b16 %v4386, %v5119
        %v5152 = vpack.c.b16 %v4388, %v5120
        %v5153 = vpack.c.b16 %v4390, %v5121
        %v5154 = vpack.c.b16 %v4392, %v5122
        %v5155 = vpack.c.b16 %v4394, %v5123
        %v5156 = vpack.c.b16 %v4396, %v5124
        %v5157 = vpack.c.b16 %v4398, %v5125
        %v5158 = vpack.c.b16 %v4400, %v5126
        %v5159 = vpack.c.b16 %v4402, %v5127
        %v5160 = vpack.c.b16 %v4404, %v5128
        %v5161 = vpack.c.b16 %v4406, %v5129
        %v5162 = vpack.c.b16 %v4408, %v5130
        %v5163 = vpack.c.b16 %v4410, %v5131
        %v5164 = vpack.c.b16 %v4412, %v5132
        %v5165 = vpack.c.b16 %v4414, %v5133
        %v5166 = vpack.c.b16 %v4416, %v5134
        %v5167 = vpack.c.b16 %v4418, %v5135
        %v5168 = vpack.c.b16 %v4420, %v5136
        %v5169 = vpack.c.b16 %v4422, %v5137
        %v5170 = vpack.c.b16 %v4424, %v5138
        %v5171 = vpack.c.b16 %v4426, %v5139
        %v5172 = vpack.c.b16 %v4428, %v5140
        %v5173 = vpack.c.b16 %v4430, %v5141
        %v5174 = vpack.c.b16 %v4432, %v5142
        %v5175 = vpack.c.b16 %v4434, %v5143
        %v5176 = vpack.c.b16 %v4436, %v5144
        %v5177 = vpack.c.b16 %v4438, %v5145
        %v5178 = vpack.c.b16 %v4440, %v5146
        %v5179 = vpack.c.b16 %v4442, %v5147
        %v5180 = vpack.c.b16 %v4444, %v5148
        %v5181 = vrot.slane %v5149, 1
        %v5182 = vrot.slane %v4605, 1
        %v5183 = vsel %vm3196, %v5181, %v5182
        %v5184 = vrot.slane %v5150, 1
        %v5185 = vrot.slane %v4606, 1
        %v5186 = vsel %vm3196, %v5184, %v5185
        %v5187 = vrot.slane %v5151, 1
        %v5188 = vrot.slane %v4607, 1
        %v5189 = vsel %vm3196, %v5187, %v5188
        %v5190 = vrot.slane %v5152, 1
        %v5191 = vrot.slane %v4608, 1
        %v5192 = vsel %vm3196, %v5190, %v5191
        %v5193 = vrot.slane %v5153, 1
        %v5194 = vrot.slane %v4609, 1
        %v5195 = vsel %vm3196, %v5193, %v5194
        %v5196 = vrot.slane %v5154, 1
        %v5197 = vrot.slane %v4610, 1
        %v5198 = vsel %vm3196, %v5196, %v5197
        %v5199 = vrot.slane %v5155, 1
        %v5200 = vrot.slane %v4611, 1
        %v5201 = vsel %vm3196, %v5199, %v5200
        %v5202 = vrot.slane %v5156, 1
        %v5203 = vrot.slane %v4612, 1
        %v5204 = vsel %vm3196, %v5202, %v5203
        %v5205 = vrot.slane %v5157, 1
        %v5206 = vrot.slane %v4613, 1
        %v5207 = vsel %vm3196, %v5205, %v5206
        %v5208 = vrot.slane %v5158, 1
        %v5209 = vrot.slane %v4614, 1
        %v5210 = vsel %vm3196, %v5208, %v5209
        %v5211 = vrot.slane %v5159, 1
        %v5212 = vrot.slane %v4615, 1
        %v5213 = vsel %vm3196, %v5211, %v5212
        %v5214 = vrot.slane %v5160, 1
        %v5215 = vrot.slane %v4616, 1
        %v5216 = vsel %vm3196, %v5214, %v5215
        %v5217 = vrot.slane %v5161, 1
        %v5218 = vrot.slane %v4617, 1
        %v5219 = vsel %vm3196, %v5217, %v5218
        %v5220 = vrot.slane %v5162, 1
        %v5221 = vrot.slane %v4618, 1
        %v5222 = vsel %vm3196, %v5220, %v5221
        %v5223 = vrot.slane %v5163, 1
        %v5224 = vrot.slane %v4619, 1
        %v5225 = vsel %vm3196, %v5223, %v5224
        %v5226 = vrot.slane %v5164, 1
        %v5227 = vrot.slane %v4620, 1
        %v5228 = vsel %vm3196, %v5226, %v5227
        %v5229 = vrot.slane %v5165, 1
        %v5230 = vrot.slane %v4621, 1
        %v5231 = vsel %vm3196, %v5229, %v5230
        %v5232 = vrot.slane %v5166, 1
        %v5233 = vrot.slane %v4622, 1
        %v5234 = vsel %vm3196, %v5232, %v5233
        %v5235 = vrot.slane %v5167, 1
        %v5236 = vrot.slane %v4623, 1
        %v5237 = vsel %vm3196, %v5235, %v5236
        %v5238 = vrot.slane %v5168, 1
        %v5239 = vrot.slane %v4624, 1
        %v5240 = vsel %vm3196, %v5238, %v5239
        %v5241 = vrot.slane %v5169, 1
        %v5242 = vrot.slane %v4625, 1
        %v5243 = vsel %vm3196, %v5241, %v5242
        %v5244 = vrot.slane %v5170, 1
        %v5245 = vrot.slane %v4626, 1
        %v5246 = vsel %vm3196, %v5244, %v5245
        %v5247 = vrot.slane %v5171, 1
        %v5248 = vrot.slane %v4627, 1
        %v5249 = vsel %vm3196, %v5247, %v5248
        %v5250 = vrot.slane %v5172, 1
        %v5251 = vrot.slane %v4628, 1
        %v5252 = vsel %vm3196, %v5250, %v5251
        %v5253 = vrot.slane %v5173, 1
        %v5254 = vrot.slane %v4629, 1
        %v5255 = vsel %vm3196, %v5253, %v5254
        %v5256 = vrot.slane %v5174, 1
        %v5257 = vrot.slane %v4630, 1
        %v5258 = vsel %vm3196, %v5256, %v5257
        %v5259 = vrot.slane %v5175, 1
        %v5260 = vrot.slane %v4631, 1
        %v5261 = vsel %vm3196, %v5259, %v5260
        %v5262 = vrot.slane %v5176, 1
        %v5263 = vrot.slane %v4632, 1
        %v5264 = vsel %vm3196, %v5262, %v5263
        %v5265 = vrot.slane %v5177, 1
        %v5266 = vrot.slane %v4633, 1
        %v5267 = vsel %vm3196, %v5265, %v5266
        %v5268 = vrot.slane %v5178, 1
        %v5269 = vrot.slane %v4634, 1
        %v5270 = vsel %vm3196, %v5268, %v5269
        %v5271 = vrot.slane %v5179, 1
        %v5272 = vrot.slane %v4635, 1
        %v5273 = vsel %vm3196, %v5271, %v5272
        %v5274 = vrot.slane %v5180, 1
        %v5275 = vrot.slane %v4636, 1
        %v5276 = vsel %vm3196, %v5274, %v5275
        %vm5277 = vcmask 261120
        %v5279 = vsel %vm5277, %v2523, %v3037
        %v5281 = vsel %vm5277, %v2524, %v3039
        %v5283 = vsel %vm5277, %v2525, %v3041
        %v5285 = vsel %vm5277, %v2526, %v3043
        %v5287 = vsel %vm5277, %v2527, %v3045
        %v5289 = vsel %vm5277, %v2528, %v3047
        %v5291 = vsel %vm5277, %v2529, %v3049
        %v5293 = vsel %vm5277, %v2530, %v3051
        %v5295 = vsel %vm5277, %v2531, %v3053
        %v5297 = vsel %vm5277, %v2532, %v3055
        %v5299 = vsel %vm5277, %v2533, %v3057
        %v5301 = vsel %vm5277, %v2534, %v3059
        %v5303 = vsel %vm5277, %v2535, %v3061
        %v5305 = vsel %vm5277, %v2536, %v3063
        %v5307 = vsel %vm5277, %v2537, %v3065
        %v5309 = vsel %vm5277, %v2538, %v3067
        %v5311 = vsel %vm5277, %v2539, %v3069
        %v5313 = vsel %vm5277, %v2540, %v3071
        %v5315 = vsel %vm5277, %v2541, %v3073
        %v5317 = vsel %vm5277, %v2542, %v3075
        %v5319 = vsel %vm5277, %v2543, %v3077
        %v5321 = vsel %vm5277, %v2544, %v3079
        %v5323 = vsel %vm5277, %v2545, %v3081
        %v5325 = vsel %vm5277, %v2546, %v3083
        %v5327 = vsel %vm5277, %v2547, %v3085
        %v5329 = vsel %vm5277, %v2548, %v3087
        %v5331 = vsel %vm5277, %v2549, %v3089
        %v5333 = vsel %vm5277, %v2550, %v3091
        %v5335 = vsel %vm5277, %v2551, %v3093
        %v5337 = vsel %vm5277, %v2552, %v3095
        %v5339 = vsel %vm5277, %v2553, %v3097
        %v5341 = vsel %vm5277, %v2554, %v3099
        %vm5342 = vcmask 523264
        %v5344 = vsel %vm5342, %v5279, %v3294
        %v5346 = vsel %vm5342, %v5281, %v3296
        %v5348 = vsel %vm5342, %v5283, %v3298
        %v5350 = vsel %vm5342, %v5285, %v3300
        %v5352 = vsel %vm5342, %v5287, %v3302
        %v5354 = vsel %vm5342, %v5289, %v3304
        %v5356 = vsel %vm5342, %v5291, %v3306
        %v5358 = vsel %vm5342, %v5293, %v3308
        %v5360 = vsel %vm5342, %v5295, %v3310
        %v5362 = vsel %vm5342, %v5297, %v3312
        %v5364 = vsel %vm5342, %v5299, %v3314
        %v5366 = vsel %vm5342, %v5301, %v3316
        %v5368 = vsel %vm5342, %v5303, %v3318
        %v5370 = vsel %vm5342, %v5305, %v3320
        %v5372 = vsel %vm5342, %v5307, %v3322
        %v5374 = vsel %vm5342, %v5309, %v3324
        %v5376 = vsel %vm5342, %v5311, %v3326
        %v5378 = vsel %vm5342, %v5313, %v3328
        %v5380 = vsel %vm5342, %v5315, %v3330
        %v5382 = vsel %vm5342, %v5317, %v3332
        %v5384 = vsel %vm5342, %v5319, %v3334
        %v5386 = vsel %vm5342, %v5321, %v3336
        %v5388 = vsel %vm5342, %v5323, %v3338
        %v5390 = vsel %vm5342, %v5325, %v3340
        %v5392 = vsel %vm5342, %v5327, %v3342
        %v5394 = vsel %vm5342, %v5329, %v3344
        %v5396 = vsel %vm5342, %v5331, %v3346
        %v5398 = vsel %vm5342, %v5333, %v3348
        %v5400 = vsel %vm5342, %v5335, %v3350
        %v5402 = vsel %vm5342, %v5337, %v3352
        %v5404 = vsel %vm5342, %v5339, %v3354
        %v5406 = vsel %vm5342, %v5341, %v3356
        %vm5407 = vcmask 785408
        %v5409 = vsel %vm5407, %v5344, %v3518
        %v5412 = vsel %vm5407, %v5346, %v3520
        %v5415 = vsel %vm5407, %v5348, %v3522
        %v5418 = vsel %vm5407, %v5350, %v3524
        %v5421 = vsel %vm5407, %v5352, %v3526
        %v5424 = vsel %vm5407, %v5354, %v3528
        %v5427 = vsel %vm5407, %v5356, %v3530
        %v5430 = vsel %vm5407, %v5358, %v3532
        %v5433 = vsel %vm5407, %v5360, %v3534
        %v5436 = vsel %vm5407, %v5362, %v3536
        %v5439 = vsel %vm5407, %v5364, %v3538
        %v5442 = vsel %vm5407, %v5366, %v3540
        %v5445 = vsel %vm5407, %v5368, %v3542
        %v5448 = vsel %vm5407, %v5370, %v3544
        %v5451 = vsel %vm5407, %v5372, %v3546
        %v5454 = vsel %vm5407, %v5374, %v3548
        %v5457 = vsel %vm5407, %v5376, %v3550
        %v5460 = vsel %vm5407, %v5378, %v3552
        %v5463 = vsel %vm5407, %v5380, %v3554
        %v5466 = vsel %vm5407, %v5382, %v3556
        %v5469 = vsel %vm5407, %v5384, %v3558
        %v5472 = vsel %vm5407, %v5386, %v3560
        %v5475 = vsel %vm5407, %v5388, %v3562
        %v5478 = vsel %vm5407, %v5390, %v3564
        %v5481 = vsel %vm5407, %v5392, %v3566
        %v5484 = vsel %vm5407, %v5394, %v3568
        %v5487 = vsel %vm5407, %v5396, %v3570
        %v5490 = vsel %vm5407, %v5398, %v3572
        %v5493 = vsel %vm5407, %v5400, %v3574
        %v5496 = vsel %vm5407, %v5402, %v3576
        %v5499 = vsel %vm5407, %v5404, %v3578
        %v5502 = vsel %vm5407, %v5406, %v3580
        %v5506 = vsel %vm5277, %v3688, %v4254
        %v5509 = vsel %vm5277, %v3700, %v4256
        %v5512 = vsel %vm5277, %v3712, %v4258
        %v5515 = vsel %vm5277, %v3724, %v4260
        %v5518 = vsel %vm5277, %v3736, %v4262
        %v5521 = vsel %vm5277, %v3748, %v4264
        %v5524 = vsel %vm5277, %v3760, %v4266
        %v5527 = vsel %vm5277, %v3772, %v4268
        %v5530 = vsel %vm5277, %v3784, %v4270
        %v5533 = vsel %vm5277, %v3796, %v4272
        %v5536 = vsel %vm5277, %v3808, %v4274
        %v5539 = vsel %vm5277, %v3820, %v4276
        %v5542 = vsel %vm5277, %v3832, %v4278
        %v5545 = vsel %vm5277, %v3844, %v4280
        %v5548 = vsel %vm5277, %v3856, %v4282
        %v5551 = vsel %vm5277, %v3868, %v4284
        %v5554 = vsel %vm5277, %v3880, %v4286
        %v5557 = vsel %vm5277, %v3892, %v4288
        %v5560 = vsel %vm5277, %v3904, %v4290
        %v5563 = vsel %vm5277, %v3916, %v4292
        %v5566 = vsel %vm5277, %v3928, %v4294
        %v5569 = vsel %vm5277, %v3940, %v4296
        %v5572 = vsel %vm5277, %v3952, %v4298
        %v5575 = vsel %vm5277, %v3964, %v4300
        %v5578 = vsel %vm5277, %v3976, %v4302
        %v5581 = vsel %vm5277, %v3988, %v4304
        %v5584 = vsel %vm5277, %v4000, %v4306
        %v5587 = vsel %vm5277, %v4012, %v4308
        %v5590 = vsel %vm5277, %v4024, %v4310
        %v5593 = vsel %vm5277, %v4036, %v4312
        %v5596 = vsel %vm5277, %v4048, %v4314
        %v5599 = vsel %vm5277, %v4060, %v4316
        %v5601 = vsel %vm5342, %v5506, %v4478
        %v5603 = vsel %vm5342, %v5509, %v4480
        %v5605 = vsel %vm5342, %v5512, %v4482
        %v5607 = vsel %vm5342, %v5515, %v4484
        %v5609 = vsel %vm5342, %v5518, %v4486
        %v5611 = vsel %vm5342, %v5521, %v4488
        %v5613 = vsel %vm5342, %v5524, %v4490
        %v5615 = vsel %vm5342, %v5527, %v4492
        %v5617 = vsel %vm5342, %v5530, %v4494
        %v5619 = vsel %vm5342, %v5533, %v4496
        %v5621 = vsel %vm5342, %v5536, %v4498
        %v5623 = vsel %vm5342, %v5539, %v4500
        %v5625 = vsel %vm5342, %v5542, %v4502
        %v5627 = vsel %vm5342, %v5545, %v4504
        %v5629 = vsel %vm5342, %v5548, %v4506
        %v5631 = vsel %vm5342, %v5551, %v4508
        %v5633 = vsel %vm5342, %v5554, %v4510
        %v5635 = vsel %vm5342, %v5557, %v4512
        %v5637 = vsel %vm5342, %v5560, %v4514
        %v5639 = vsel %vm5342, %v5563, %v4516
        %v5641 = vsel %vm5342, %v5566, %v4518
        %v5643 = vsel %vm5342, %v5569, %v4520
        %v5645 = vsel %vm5342, %v5572, %v4522
        %v5647 = vsel %vm5342, %v5575, %v4524
        %v5649 = vsel %vm5342, %v5578, %v4526
        %v5651 = vsel %vm5342, %v5581, %v4528
        %v5653 = vsel %vm5342, %v5584, %v4530
        %v5655 = vsel %vm5342, %v5587, %v4532
        %v5657 = vsel %vm5342, %v5590, %v4534
        %v5659 = vsel %vm5342, %v5593, %v4536
        %v5661 = vsel %vm5342, %v5596, %v4538
        %v5663 = vsel %vm5342, %v5599, %v4540
        %v5665 = vsel %vm5407, %v5601, %v5022
        %v5668 = vsel %vm5407, %v5603, %v5024
        %v5671 = vsel %vm5407, %v5605, %v5026
        %v5674 = vsel %vm5407, %v5607, %v5028
        %v5677 = vsel %vm5407, %v5609, %v5030
        %v5680 = vsel %vm5407, %v5611, %v5032
        %v5683 = vsel %vm5407, %v5613, %v5034
        %v5686 = vsel %vm5407, %v5615, %v5036
        %v5689 = vsel %vm5407, %v5617, %v5038
        %v5692 = vsel %vm5407, %v5619, %v5040
        %v5695 = vsel %vm5407, %v5621, %v5042
        %v5698 = vsel %vm5407, %v5623, %v5044
        %v5701 = vsel %vm5407, %v5625, %v5046
        %v5704 = vsel %vm5407, %v5627, %v5048
        %v5707 = vsel %vm5407, %v5629, %v5050
        %v5710 = vsel %vm5407, %v5631, %v5052
        %v5713 = vsel %vm5407, %v5633, %v5054
        %v5716 = vsel %vm5407, %v5635, %v5056
        %v5719 = vsel %vm5407, %v5637, %v5058
        %v5722 = vsel %vm5407, %v5639, %v5060
        %v5725 = vsel %vm5407, %v5641, %v5062
        %v5728 = vsel %vm5407, %v5643, %v5064
        %v5731 = vsel %vm5407, %v5645, %v5066
        %v5734 = vsel %vm5407, %v5647, %v5068
        %v5737 = vsel %vm5407, %v5649, %v5070
        %v5740 = vsel %vm5407, %v5651, %v5072
        %v5743 = vsel %vm5407, %v5653, %v5074
        %v5746 = vsel %vm5407, %v5655, %v5076
        %v5749 = vsel %vm5407, %v5657, %v5078
        %v5752 = vsel %vm5407, %v5659, %v5080
        %v5755 = vsel %vm5407, %v5661, %v5082
        %v5758 = vsel %vm5407, %v5663, %v5084
        %v5760 = vld [vmem:[%s3] sm:$0xf]
        %v5761 = vld [vmem:[%s3 + $0x4] sm:$0xf]
        %v5762 = vld [vmem:[%s3 + $0x8] sm:$0xf]
        %v5763 = vld [vmem:[%s3 + $0xc] sm:$0xf]
        %v5764 = vld [vmem:[%s3 + $0x10] sm:$0xf]
        %v5765 = vld [vmem:[%s3 + $0x14] sm:$0xf]
        %v5766 = vld [vmem:[%s3 + $0x18] sm:$0xf]
        %v5767 = vld [vmem:[%s3 + $0x1c] sm:$0xf]
        %v5768 = vld [vmem:[%s3 + $0x20] sm:$0xf]
        %v5769 = vld [vmem:[%s3 + $0x24] sm:$0xf]
        %v5770 = vld [vmem:[%s3 + $0x28] sm:$0xf]
        %v5771 = vld [vmem:[%s3 + $0x2c] sm:$0xf]
        %v5772 = vld [vmem:[%s3 + $0x30] sm:$0xf]
        %v5773 = vld [vmem:[%s3 + $0x34] sm:$0xf]
        %v5774 = vld [vmem:[%s3 + $0x38] sm:$0xf]
        %v5775 = vld [vmem:[%s3 + $0x3c] sm:$0xf]
        %v5776 = vld [vmem:[%s3 + $0x40] sm:$0xf]
        %v5777 = vld [vmem:[%s3 + $0x44] sm:$0xf]
        %v5778 = vld [vmem:[%s3 + $0x48] sm:$0xf]
        %v5779 = vld [vmem:[%s3 + $0x4c] sm:$0xf]
        %v5780 = vld [vmem:[%s3 + $0x50] sm:$0xf]
        %v5781 = vld [vmem:[%s3 + $0x54] sm:$0xf]
        %v5782 = vld [vmem:[%s3 + $0x58] sm:$0xf]
        %v5783 = vld [vmem:[%s3 + $0x5c] sm:$0xf]
        %v5784 = vld [vmem:[%s3 + $0x60] sm:$0xf]
        %v5785 = vld [vmem:[%s3 + $0x64] sm:$0xf]
        %v5786 = vld [vmem:[%s3 + $0x68] sm:$0xf]
        %v5787 = vld [vmem:[%s3 + $0x6c] sm:$0xf]
        %v5788 = vld [vmem:[%s3 + $0x70] sm:$0xf]
        %v5789 = vld [vmem:[%s3 + $0x74] sm:$0xf]
        %v5790 = vld [vmem:[%s3 + $0x78] sm:$0xf]
        %v5791 = vld [vmem:[%s3 + $0x7c] sm:$0xf]
        %v5792 = vld [vmem:[%s3 + $0x80] sm:$0xf]
        %v5793 = vld [vmem:[%s3 + $0x84] sm:$0xf]
        %v5794 = vld [vmem:[%s3 + $0x88] sm:$0xf]
        %v5795 = vld [vmem:[%s3 + $0x8c] sm:$0xf]
        %v5796 = vld [vmem:[%s4] sm:$0x1]
        %v5798 = vperm.slane %v5796, 0
        %v5836 = vunpack.c.l.b16 %v5760
        %v5837 = vunpack.c.l.b16 %v5761
        %v5838 = vunpack.c.l.b16 %v5762
        %v5839 = vunpack.c.l.b16 %v5763
        %v5840 = vunpack.c.l.b16 %v5764
        %v5841 = vunpack.c.l.b16 %v5765
        %v5842 = vunpack.c.l.b16 %v5766
        %v5843 = vunpack.c.l.b16 %v5767
        %v5844 = vunpack.c.l.b16 %v5768
        %v5845 = vunpack.c.l.b16 %v5769
        %v5846 = vunpack.c.l.b16 %v5770
        %v5847 = vunpack.c.l.b16 %v5771
        %v5848 = vunpack.c.l.b16 %v5772
        %v5849 = vunpack.c.l.b16 %v5773
        %v5850 = vunpack.c.l.b16 %v5774
        %v5851 = vunpack.c.l.b16 %v5775
        %v5852 = vunpack.c.l.b16 %v5776
        %v5853 = vunpack.c.l.b16 %v5777
        %v5854 = vunpack.c.l.b16 %v5778
        %v5855 = vunpack.c.l.b16 %v5779
        %v5856 = vunpack.c.l.b16 %v5780
        %v5857 = vunpack.c.l.b16 %v5781
        %v5858 = vunpack.c.l.b16 %v5782
        %v5859 = vunpack.c.l.b16 %v5783
        %v5860 = vunpack.c.l.b16 %v5784
        %v5861 = vunpack.c.l.b16 %v5785
        %v5862 = vunpack.c.l.b16 %v5786
        %v5863 = vunpack.c.l.b16 %v5787
        %v5864 = vunpack.c.l.b16 %v5788
        %v5865 = vunpack.c.l.b16 %v5789
        %v5866 = vunpack.c.l.b16 %v5790
        %v5867 = vunpack.c.l.b16 %v5791
        %v5868 = vunpack.c.l.b16 %v5792
        %v5869 = vunpack.c.l.b16 %v5793
        %v5870 = vunpack.c.l.b16 %v5794
        %v5871 = vunpack.c.l.b16 %v5795
        %v5872 = vpack.c.b16 %v5837, %v5836
        %v5873 = vpack.c.b16 %v5839, %v5838
        %v5874 = vpack.c.b16 %v5841, %v5840
        %v5875 = vpack.c.b16 %v5843, %v5842
        %v5876 = vpack.c.b16 %v5845, %v5844
        %v5877 = vpack.c.b16 %v5847, %v5846
        %v5878 = vpack.c.b16 %v5849, %v5848
        %v5879 = vpack.c.b16 %v5851, %v5850
        %v5880 = vpack.c.b16 %v5853, %v5852
        %v5881 = vpack.c.b16 %v5855, %v5854
        %v5882 = vpack.c.b16 %v5857, %v5856
        %v5883 = vpack.c.b16 %v5859, %v5858
        %v5884 = vpack.c.b16 %v5861, %v5860
        %v5885 = vpack.c.b16 %v5863, %v5862
        %v5886 = vpack.c.b16 %v5865, %v5864
        %v5887 = vpack.c.b16 %v5867, %v5866
        %v5888 = vpack.c.b16 %v5869, %v5868
        %v5889 = vpack.c.b16 %v5871, %v5870
        %v5909 = vsel %vm5277, %v5183, 0
        %v5912 = vsel %vm5277, %v5186, 0
        %v5915 = vsel %vm5277, %v5189, 0
        %v5918 = vsel %vm5277, %v5192, 0
        %v5921 = vsel %vm5277, %v5195, 0
        %v5924 = vsel %vm5277, %v5198, 0
        %v5927 = vsel %vm5277, %v5201, 0
        %v5930 = vsel %vm5277, %v5204, 0
        %v5933 = vsel %vm5277, %v5207, 0
        %v5936 = vsel %vm5277, %v5210, 0
        %v5939 = vsel %vm5277, %v5213, 0
        %v5942 = vsel %vm5277, %v5216, 0
        %v5945 = vsel %vm5277, %v5219, 0
        %v5948 = vsel %vm5277, %v5222, 0
        %v5951 = vsel %vm5277, %v5225, 0
        %v5954 = vsel %vm5277, %v5228, 0
        %v5957 = vsel %vm5277, %v5231, 0
        %v5960 = vsel %vm5277, %v5234, 0
        %v5963 = vsel %vm5277, %v5237, 0
        %v5966 = vsel %vm5277, %v5240, 0
        %v5969 = vsel %vm5277, %v5243, 0
        %v5972 = vsel %vm5277, %v5246, 0
        %v5975 = vsel %vm5277, %v5249, 0
        %v5978 = vsel %vm5277, %v5252, 0
        %v5981 = vsel %vm5277, %v5255, 0
        %v5984 = vsel %vm5277, %v5258, 0
        %v5987 = vsel %vm5277, %v5261, 0
        %v5990 = vsel %vm5277, %v5264, 0
        %v5993 = vsel %vm5277, %v5267, 0
        %v5996 = vsel %vm5277, %v5270, 0
        %v5999 = vsel %vm5277, %v5273, 0
        %v6002 = vsel %vm5277, %v5276, 0
        %6004 = vmatpush.bf16.msra.mxu0 %v5879
        %6005 = vmatpush.bf16.msra.mxu0 %v5878
        %6006 = vmatpush.bf16.msra.mxu0 %v5877
        %6007 = vmatpush.bf16.msra.mxu0 %v5876
        %6008 = vmatpush.bf16.msra.mxu0 %v5875
        %6009 = vmatpush.bf16.msra.mxu0 %v5874
        %6010 = vmatpush.bf16.msra.mxu0 %v5873
        %6011 = vmatpush.bf16.msra.mxu0 %v5872
        %6012 = vmatmul.bf16.gmra.mxu0 %v5409
        %v6013 = vpop.f32.mrf.mxu0
        %v6014 = vadd.f32 %v5798, %v6013
        %v6015 = vpop.f32.mrf.mxu0
        %v6016 = vadd.f32 %v5798, %v6015
        %6017 = vmatmul.bf16.gmra.mxu0 %v5412
        %v6018 = vpop.f32.mrf.mxu0
        %v6019 = vadd.f32 %v5798, %v6018
        %v6020 = vpop.f32.mrf.mxu0
        %v6021 = vadd.f32 %v5798, %v6020
        %6022 = vmatmul.bf16.gmra.mxu0 %v5415
        %v6023 = vpop.f32.mrf.mxu0
        %v6024 = vadd.f32 %v5798, %v6023
        %v6025 = vpop.f32.mrf.mxu0
        %v6026 = vadd.f32 %v5798, %v6025
        %6027 = vmatmul.bf16.gmra.mxu0 %v5418
        %v6028 = vpop.f32.mrf.mxu0
        %v6029 = vadd.f32 %v5798, %v6028
        %v6030 = vpop.f32.mrf.mxu0
        %v6031 = vadd.f32 %v5798, %v6030
        %6032 = vmatmul.bf16.gmra.mxu0 %v5421
        %v6033 = vpop.f32.mrf.mxu0
        %v6034 = vadd.f32 %v5798, %v6033
        %v6035 = vpop.f32.mrf.mxu0
        %v6036 = vadd.f32 %v5798, %v6035
        %6037 = vmatmul.bf16.gmra.mxu0 %v5424
        %v6038 = vpop.f32.mrf.mxu0
        %v6039 = vadd.f32 %v5798, %v6038
        %v6040 = vpop.f32.mrf.mxu0
        %v6041 = vadd.f32 %v5798, %v6040
        %6042 = vmatmul.bf16.gmra.mxu0 %v5427
        %v6043 = vpop.f32.mrf.mxu0
        %v6044 = vadd.f32 %v5798, %v6043
        %v6045 = vpop.f32.mrf.mxu0
        %v6046 = vadd.f32 %v5798, %v6045
        %6047 = vmatmul.bf16.gmra.mxu0 %v5430
        %v6048 = vpop.f32.mrf.mxu0
        %v6049 = vadd.f32 %v5798, %v6048
        %v6050 = vpop.f32.mrf.mxu0
        %v6051 = vadd.f32 %v5798, %v6050
        %6052 = vmatmul.bf16.gmra.mxu0 %v5433
        %v6053 = vpop.f32.mrf.mxu0
        %v6054 = vadd.f32 %v5798, %v6053
        %v6055 = vpop.f32.mrf.mxu0
        %v6056 = vadd.f32 %v5798, %v6055
        %6057 = vmatmul.bf16.gmra.mxu0 %v5436
        %v6058 = vpop.f32.mrf.mxu0
        %v6059 = vadd.f32 %v5798, %v6058
        %v6060 = vpop.f32.mrf.mxu0
        %v6061 = vadd.f32 %v5798, %v6060
        %6062 = vmatmul.bf16.gmra.mxu0 %v5439
        %v6063 = vpop.f32.mrf.mxu0
        %v6064 = vadd.f32 %v5798, %v6063
        %v6065 = vpop.f32.mrf.mxu0
        %v6066 = vadd.f32 %v5798, %v6065
        %6067 = vmatmul.bf16.gmra.mxu0 %v5442
        %v6068 = vpop.f32.mrf.mxu0
        %v6069 = vadd.f32 %v5798, %v6068
        %v6070 = vpop.f32.mrf.mxu0
        %v6071 = vadd.f32 %v5798, %v6070
        %6072 = vmatmul.bf16.gmra.mxu0 %v5445
        %v6073 = vpop.f32.mrf.mxu0
        %v6074 = vadd.f32 %v5798, %v6073
        %v6075 = vpop.f32.mrf.mxu0
        %v6076 = vadd.f32 %v5798, %v6075
        %6077 = vmatmul.bf16.gmra.mxu0 %v5448
        %v6078 = vpop.f32.mrf.mxu0
        %v6079 = vadd.f32 %v5798, %v6078
        %v6080 = vpop.f32.mrf.mxu0
        %v6081 = vadd.f32 %v5798, %v6080
        %6082 = vmatmul.bf16.gmra.mxu0 %v5451
        %v6083 = vpop.f32.mrf.mxu0
        %v6084 = vadd.f32 %v5798, %v6083
        %v6085 = vpop.f32.mrf.mxu0
        %v6086 = vadd.f32 %v5798, %v6085
        %6087 = vmatmul.bf16.gmra.mxu0 %v5454
        %v6088 = vpop.f32.mrf.mxu0
        %v6089 = vadd.f32 %v5798, %v6088
        %v6090 = vpop.f32.mrf.mxu0
        %v6091 = vadd.f32 %v5798, %v6090
        %6092 = vmatmul.bf16.gmra.mxu0 %v5457
        %v6093 = vpop.f32.mrf.mxu0
        %v6094 = vadd.f32 %v5798, %v6093
        %v6095 = vpop.f32.mrf.mxu0
        %v6096 = vadd.f32 %v5798, %v6095
        %6097 = vmatmul.bf16.gmra.mxu0 %v5460
        %v6098 = vpop.f32.mrf.mxu0
        %v6099 = vadd.f32 %v5798, %v6098
        %v6100 = vpop.f32.mrf.mxu0
        %v6101 = vadd.f32 %v5798, %v6100
        %6102 = vmatmul.bf16.gmra.mxu0 %v5463
        %v6103 = vpop.f32.mrf.mxu0
        %v6104 = vadd.f32 %v5798, %v6103
        %v6105 = vpop.f32.mrf.mxu0
        %v6106 = vadd.f32 %v5798, %v6105
        %6107 = vmatmul.bf16.gmra.mxu0 %v5466
        %v6108 = vpop.f32.mrf.mxu0
        %v6109 = vadd.f32 %v5798, %v6108
        %v6110 = vpop.f32.mrf.mxu0
        %v6111 = vadd.f32 %v5798, %v6110
        %6112 = vmatmul.bf16.gmra.mxu0 %v5469
        %v6113 = vpop.f32.mrf.mxu0
        %v6114 = vadd.f32 %v5798, %v6113
        %v6115 = vpop.f32.mrf.mxu0
        %v6116 = vadd.f32 %v5798, %v6115
        %6117 = vmatmul.bf16.gmra.mxu0 %v5472
        %v6118 = vpop.f32.mrf.mxu0
        %v6119 = vadd.f32 %v5798, %v6118
        %v6120 = vpop.f32.mrf.mxu0
        %v6121 = vadd.f32 %v5798, %v6120
        %6122 = vmatmul.bf16.gmra.mxu0 %v5475
        %v6123 = vpop.f32.mrf.mxu0
        %v6124 = vadd.f32 %v5798, %v6123
        %v6125 = vpop.f32.mrf.mxu0
        %v6126 = vadd.f32 %v5798, %v6125
        %6127 = vmatmul.bf16.gmra.mxu0 %v5478
        %v6128 = vpop.f32.mrf.mxu0
        %v6129 = vadd.f32 %v5798, %v6128
        %v6130 = vpop.f32.mrf.mxu0
        %v6131 = vadd.f32 %v5798, %v6130
        %6132 = vmatmul.bf16.gmra.mxu0 %v5481
        %v6133 = vpop.f32.mrf.mxu0
        %v6134 = vadd.f32 %v5798, %v6133
        %v6135 = vpop.f32.mrf.mxu0
        %v6136 = vadd.f32 %v5798, %v6135
        %6137 = vmatmul.bf16.gmra.mxu0 %v5484
        %v6138 = vpop.f32.mrf.mxu0
        %v6139 = vadd.f32 %v5798, %v6138
        %v6140 = vpop.f32.mrf.mxu0
        %v6141 = vadd.f32 %v5798, %v6140
        %6142 = vmatmul.bf16.gmra.mxu0 %v5487
        %v6143 = vpop.f32.mrf.mxu0
        %v6144 = vadd.f32 %v5798, %v6143
        %v6145 = vpop.f32.mrf.mxu0
        %v6146 = vadd.f32 %v5798, %v6145
        %6147 = vmatmul.bf16.gmra.mxu0 %v5490
        %v6148 = vpop.f32.mrf.mxu0
        %v6149 = vadd.f32 %v5798, %v6148
        %v6150 = vpop.f32.mrf.mxu0
        %v6151 = vadd.f32 %v5798, %v6150
        %6152 = vmatmul.bf16.gmra.mxu0 %v5493
        %v6153 = vpop.f32.mrf.mxu0
        %v6154 = vadd.f32 %v5798, %v6153
        %v6155 = vpop.f32.mrf.mxu0
        %v6156 = vadd.f32 %v5798, %v6155
        %6157 = vmatmul.bf16.gmra.mxu0 %v5496
        %v6158 = vpop.f32.mrf.mxu0
        %v6159 = vadd.f32 %v5798, %v6158
        %v6160 = vpop.f32.mrf.mxu0
        %v6161 = vadd.f32 %v5798, %v6160
        %6162 = vmatmul.bf16.gmra.mxu0 %v5499
        %v6163 = vpop.f32.mrf.mxu0
        %v6164 = vadd.f32 %v5798, %v6163
        %v6165 = vpop.f32.mrf.mxu0
        %v6166 = vadd.f32 %v5798, %v6165
        %6167 = vmatmul.bf16.gmra.mxu0 %v5502
        %v6168 = vpop.f32.mrf.mxu0
        %v6169 = vadd.f32 %v5798, %v6168
        %v6170 = vpop.f32.mrf.mxu0
        %v6171 = vadd.f32 %v5798, %v6170
        %6172 = vdwg.mxu0
        %6173 = vmatpush.bf16.msra.mxu0 %v5887
        %6174 = vmatpush.bf16.msra.mxu0 %v5886
        %6175 = vmatpush.bf16.msra.mxu0 %v5885
        %6176 = vmatpush.bf16.msra.mxu0 %v5884
        %6177 = vmatpush.bf16.msra.mxu0 %v5883
        %6178 = vmatpush.bf16.msra.mxu0 %v5882
        %6179 = vmatpush.bf16.msra.mxu0 %v5881
        %6180 = vmatpush.bf16.msra.mxu0 %v5880
        %6181 = vmatmul.bf16.gmra.mxu0 %v5665
        %v6182 = vpop.f32.mrf.mxu0
        %v6183 = vadd.f32 %v6014, %v6182
        %v6184 = vpop.f32.mrf.mxu0
        %v6185 = vadd.f32 %v6016, %v6184
        %6186 = vmatmul.bf16.gmra.mxu0 %v5668
        %v6187 = vpop.f32.mrf.mxu0
        %v6188 = vadd.f32 %v6019, %v6187
        %v6189 = vpop.f32.mrf.mxu0
        %v6190 = vadd.f32 %v6021, %v6189
        %6191 = vmatmul.bf16.gmra.mxu0 %v5671
        %v6192 = vpop.f32.mrf.mxu0
        %v6193 = vadd.f32 %v6024, %v6192
        %v6194 = vpop.f32.mrf.mxu0
        %v6195 = vadd.f32 %v6026, %v6194
        %6196 = vmatmul.bf16.gmra.mxu0 %v5674
        %v6197 = vpop.f32.mrf.mxu0
        %v6198 = vadd.f32 %v6029, %v6197
        %v6199 = vpop.f32.mrf.mxu0
        %v6200 = vadd.f32 %v6031, %v6199
        %6201 = vmatmul.bf16.gmra.mxu0 %v5677
        %v6202 = vpop.f32.mrf.mxu0
        %v6203 = vadd.f32 %v6034, %v6202
        %v6204 = vpop.f32.mrf.mxu0
        %v6205 = vadd.f32 %v6036, %v6204
        %6206 = vmatmul.bf16.gmra.mxu0 %v5680
        %v6207 = vpop.f32.mrf.mxu0
        %v6208 = vadd.f32 %v6039, %v6207
        %v6209 = vpop.f32.mrf.mxu0
        %v6210 = vadd.f32 %v6041, %v6209
        %6211 = vmatmul.bf16.gmra.mxu0 %v5683
        %v6212 = vpop.f32.mrf.mxu0
        %v6213 = vadd.f32 %v6044, %v6212
        %v6214 = vpop.f32.mrf.mxu0
        %v6215 = vadd.f32 %v6046, %v6214
        %6216 = vmatmul.bf16.gmra.mxu0 %v5686
        %v6217 = vpop.f32.mrf.mxu0
        %v6218 = vadd.f32 %v6049, %v6217
        %v6219 = vpop.f32.mrf.mxu0
        %v6220 = vadd.f32 %v6051, %v6219
        %6221 = vmatmul.bf16.gmra.mxu0 %v5689
        %v6222 = vpop.f32.mrf.mxu0
        %v6223 = vadd.f32 %v6054, %v6222
        %v6224 = vpop.f32.mrf.mxu0
        %v6225 = vadd.f32 %v6056, %v6224
        %6226 = vmatmul.bf16.gmra.mxu0 %v5692
        %v6227 = vpop.f32.mrf.mxu0
        %v6228 = vadd.f32 %v6059, %v6227
        %v6229 = vpop.f32.mrf.mxu0
        %v6230 = vadd.f32 %v6061, %v6229
        %6231 = vmatmul.bf16.gmra.mxu0 %v5695
        %v6232 = vpop.f32.mrf.mxu0
        %v6233 = vadd.f32 %v6064, %v6232
        %v6234 = vpop.f32.mrf.mxu0
        %v6235 = vadd.f32 %v6066, %v6234
        %6236 = vmatmul.bf16.gmra.mxu0 %v5698
        %v6237 = vpop.f32.mrf.mxu0
        %v6238 = vadd.f32 %v6069, %v6237
        %v6239 = vpop.f32.mrf.mxu0
        %v6240 = vadd.f32 %v6071, %v6239
        %6241 = vmatmul.bf16.gmra.mxu0 %v5701
        %v6242 = vpop.f32.mrf.mxu0
        %v6243 = vadd.f32 %v6074, %v6242
        %v6244 = vpop.f32.mrf.mxu0
        %v6245 = vadd.f32 %v6076, %v6244
        %6246 = vmatmul.bf16.gmra.mxu0 %v5704
        %v6247 = vpop.f32.mrf.mxu0
        %v6248 = vadd.f32 %v6079, %v6247
        %v6249 = vpop.f32.mrf.mxu0
        %v6250 = vadd.f32 %v6081, %v6249
        %6251 = vmatmul.bf16.gmra.mxu0 %v5707
        %v6252 = vpop.f32.mrf.mxu0
        %v6253 = vadd.f32 %v6084, %v6252
        %v6254 = vpop.f32.mrf.mxu0
        %v6255 = vadd.f32 %v6086, %v6254
        %6256 = vmatmul.bf16.gmra.mxu0 %v5710
        %v6257 = vpop.f32.mrf.mxu0
        %v6258 = vadd.f32 %v6089, %v6257
        %v6259 = vpop.f32.mrf.mxu0
        %v6260 = vadd.f32 %v6091, %v6259
        %6261 = vmatmul.bf16.gmra.mxu0 %v5713
        %v6262 = vpop.f32.mrf.mxu0
        %v6263 = vadd.f32 %v6094, %v6262
        %v6264 = vpop.f32.mrf.mxu0
        %v6265 = vadd.f32 %v6096, %v6264
        %6266 = vmatmul.bf16.gmra.mxu0 %v5716
        %v6267 = vpop.f32.mrf.mxu0
        %v6268 = vadd.f32 %v6099, %v6267
        %v6269 = vpop.f32.mrf.mxu0
        %v6270 = vadd.f32 %v6101, %v6269
        %6271 = vmatmul.bf16.gmra.mxu0 %v5719
        %v6272 = vpop.f32.mrf.mxu0
        %v6273 = vadd.f32 %v6104, %v6272
        %v6274 = vpop.f32.mrf.mxu0
        %v6275 = vadd.f32 %v6106, %v6274
        %6276 = vmatmul.bf16.gmra.mxu0 %v5722
        %v6277 = vpop.f32.mrf.mxu0
        %v6278 = vadd.f32 %v6109, %v6277
        %v6279 = vpop.f32.mrf.mxu0
        %v6280 = vadd.f32 %v6111, %v6279
        %6281 = vmatmul.bf16.gmra.mxu0 %v5725
        %v6282 = vpop.f32.mrf.mxu0
        %v6283 = vadd.f32 %v6114, %v6282
        %v6284 = vpop.f32.mrf.mxu0
        %v6285 = vadd.f32 %v6116, %v6284
        %6286 = vmatmul.bf16.gmra.mxu0 %v5728
        %v6287 = vpop.f32.mrf.mxu0
        %v6288 = vadd.f32 %v6119, %v6287
        %v6289 = vpop.f32.mrf.mxu0
        %v6290 = vadd.f32 %v6121, %v6289
        %6291 = vmatmul.bf16.gmra.mxu0 %v5731
        %v6292 = vpop.f32.mrf.mxu0
        %v6293 = vadd.f32 %v6124, %v6292
        %v6294 = vpop.f32.mrf.mxu0
        %v6295 = vadd.f32 %v6126, %v6294
        %6296 = vmatmul.bf16.gmra.mxu0 %v5734
        %v6297 = vpop.f32.mrf.mxu0
        %v6298 = vadd.f32 %v6129, %v6297
        %v6299 = vpop.f32.mrf.mxu0
        %v6300 = vadd.f32 %v6131, %v6299
        %6301 = vmatmul.bf16.gmra.mxu0 %v5737
        %v6302 = vpop.f32.mrf.mxu0
        %v6303 = vadd.f32 %v6134, %v6302
        %v6304 = vpop.f32.mrf.mxu0
        %v6305 = vadd.f32 %v6136, %v6304
        %6306 = vmatmul.bf16.gmra.mxu0 %v5740
        %v6307 = vpop.f32.mrf.mxu0
        %v6308 = vadd.f32 %v6139, %v6307
        %v6309 = vpop.f32.mrf.mxu0
        %v6310 = vadd.f32 %v6141, %v6309
        %6311 = vmatmul.bf16.gmra.mxu0 %v5743
        %v6312 = vpop.f32.mrf.mxu0
        %v6313 = vadd.f32 %v6144, %v6312
        %v6314 = vpop.f32.mrf.mxu0
        %v6315 = vadd.f32 %v6146, %v6314
        %6316 = vmatmul.bf16.gmra.mxu0 %v5746
        %v6317 = vpop.f32.mrf.mxu0
        %v6318 = vadd.f32 %v6149, %v6317
        %v6319 = vpop.f32.mrf.mxu0
        %v6320 = vadd.f32 %v6151, %v6319
        %6321 = vmatmul.bf16.gmra.mxu0 %v5749
        %v6322 = vpop.f32.mrf.mxu0
        %v6323 = vadd.f32 %v6154, %v6322
        %v6324 = vpop.f32.mrf.mxu0
        %v6325 = vadd.f32 %v6156, %v6324
        %6326 = vmatmul.bf16.gmra.mxu0 %v5752
        %v6327 = vpop.f32.mrf.mxu0
        %v6328 = vadd.f32 %v6159, %v6327
        %v6329 = vpop.f32.mrf.mxu0
        %v6330 = vadd.f32 %v6161, %v6329
        %6331 = vmatmul.bf16.gmra.mxu0 %v5755
        %v6332 = vpop.f32.mrf.mxu0
        %v6333 = vadd.f32 %v6164, %v6332
        %v6334 = vpop.f32.mrf.mxu0
        %v6335 = vadd.f32 %v6166, %v6334
        %6336 = vmatmul.bf16.gmra.mxu0 %v5758
        %v6337 = vpop.f32.mrf.mxu0
        %v6338 = vadd.f32 %v6169, %v6337
        %v6339 = vpop.f32.mrf.mxu0
        %v6340 = vadd.f32 %v6171, %v6339
        %6341 = vdwg.mxu0
        %6342 = vmatpush.bf16.msra.mxu0 0
        %6343 = vmatpush.bf16.msra.mxu0 0
        %6344 = vmatpush.bf16.msra.mxu0 0
        %6345 = vmatpush.bf16.msra.mxu0 0
        %6346 = vmatpush.bf16.msra.mxu0 0
        %6347 = vmatpush.bf16.msra.mxu0 0
        %6348 = vmatpush.bf16.msra.mxu0 %v5889
        %6349 = vmatpush.bf16.msra.mxu0 %v5888
        %6350 = vmatmul.bf16.gmra.mxu0 %v5909
        %v6351 = vpop.f32.mrf.mxu0
        %v6352 = vadd.f32 %v6183, %v6351
        %v6353 = vpop.f32.mrf.mxu0
        %v6354 = vadd.f32 %v6185, %v6353
        %6355 = vmatmul.bf16.gmra.mxu0 %v5912
        %v6356 = vpop.f32.mrf.mxu0
        %v6357 = vadd.f32 %v6188, %v6356
        %v6358 = vpop.f32.mrf.mxu0
        %v6359 = vadd.f32 %v6190, %v6358
        %6360 = vmatmul.bf16.gmra.mxu0 %v5915
        %v6361 = vpop.f32.mrf.mxu0
        %v6362 = vadd.f32 %v6193, %v6361
        %v6363 = vpop.f32.mrf.mxu0
        %v6364 = vadd.f32 %v6195, %v6363
        %6365 = vmatmul.bf16.gmra.mxu0 %v5918
        %v6366 = vpop.f32.mrf.mxu0
        %v6367 = vadd.f32 %v6198, %v6366
        %v6368 = vpop.f32.mrf.mxu0
        %v6369 = vadd.f32 %v6200, %v6368
        %6370 = vmatmul.bf16.gmra.mxu0 %v5921
        %v6371 = vpop.f32.mrf.mxu0
        %v6372 = vadd.f32 %v6203, %v6371
        %v6373 = vpop.f32.mrf.mxu0
        %v6374 = vadd.f32 %v6205, %v6373
        %6375 = vmatmul.bf16.gmra.mxu0 %v5924
        %v6376 = vpop.f32.mrf.mxu0
        %v6377 = vadd.f32 %v6208, %v6376
        %v6378 = vpop.f32.mrf.mxu0
        %v6379 = vadd.f32 %v6210, %v6378
        %6380 = vmatmul.bf16.gmra.mxu0 %v5927
        %v6381 = vpop.f32.mrf.mxu0
        %v6382 = vadd.f32 %v6213, %v6381
        %v6383 = vpop.f32.mrf.mxu0
        %v6384 = vadd.f32 %v6215, %v6383
        %6385 = vmatmul.bf16.gmra.mxu0 %v5930
        %v6386 = vpop.f32.mrf.mxu0
        %v6387 = vadd.f32 %v6218, %v6386
        %v6388 = vpop.f32.mrf.mxu0
        %v6389 = vadd.f32 %v6220, %v6388
        %6390 = vmatmul.bf16.gmra.mxu0 %v5933
        %v6391 = vpop.f32.mrf.mxu0
        %v6392 = vadd.f32 %v6223, %v6391
        %v6393 = vpop.f32.mrf.mxu0
        %v6394 = vadd.f32 %v6225, %v6393
        %6395 = vmatmul.bf16.gmra.mxu0 %v5936
        %v6396 = vpop.f32.mrf.mxu0
        %v6397 = vadd.f32 %v6228, %v6396
        %v6398 = vpop.f32.mrf.mxu0
        %v6399 = vadd.f32 %v6230, %v6398
        %6400 = vmatmul.bf16.gmra.mxu0 %v5939
        %v6401 = vpop.f32.mrf.mxu0
        %v6402 = vadd.f32 %v6233, %v6401
        %v6403 = vpop.f32.mrf.mxu0
        %v6404 = vadd.f32 %v6235, %v6403
        %6405 = vmatmul.bf16.gmra.mxu0 %v5942
        %v6406 = vpop.f32.mrf.mxu0
        %v6407 = vadd.f32 %v6238, %v6406
        %v6408 = vpop.f32.mrf.mxu0
        %v6409 = vadd.f32 %v6240, %v6408
        %6410 = vmatmul.bf16.gmra.mxu0 %v5945
        %v6411 = vpop.f32.mrf.mxu0
        %v6412 = vadd.f32 %v6243, %v6411
        %v6413 = vpop.f32.mrf.mxu0
        %v6414 = vadd.f32 %v6245, %v6413
        %6415 = vmatmul.bf16.gmra.mxu0 %v5948
        %v6416 = vpop.f32.mrf.mxu0
        %v6417 = vadd.f32 %v6248, %v6416
        %v6418 = vpop.f32.mrf.mxu0
        %v6419 = vadd.f32 %v6250, %v6418
        %6420 = vmatmul.bf16.gmra.mxu0 %v5951
        %v6421 = vpop.f32.mrf.mxu0
        %v6422 = vadd.f32 %v6253, %v6421
        %v6423 = vpop.f32.mrf.mxu0
        %v6424 = vadd.f32 %v6255, %v6423
        %6425 = vmatmul.bf16.gmra.mxu0 %v5954
        %v6426 = vpop.f32.mrf.mxu0
        %v6427 = vadd.f32 %v6258, %v6426
        %v6428 = vpop.f32.mrf.mxu0
        %v6429 = vadd.f32 %v6260, %v6428
        %6430 = vmatmul.bf16.gmra.mxu0 %v5957
        %v6431 = vpop.f32.mrf.mxu0
        %v6432 = vadd.f32 %v6263, %v6431
        %v6433 = vpop.f32.mrf.mxu0
        %v6434 = vadd.f32 %v6265, %v6433
        %6435 = vmatmul.bf16.gmra.mxu0 %v5960
        %v6436 = vpop.f32.mrf.mxu0
        %v6437 = vadd.f32 %v6268, %v6436
        %v6438 = vpop.f32.mrf.mxu0
        %v6439 = vadd.f32 %v6270, %v6438
        %6440 = vmatmul.bf16.gmra.mxu0 %v5963
        %v6441 = vpop.f32.mrf.mxu0
        %v6442 = vadd.f32 %v6273, %v6441
        %v6443 = vpop.f32.mrf.mxu0
        %v6444 = vadd.f32 %v6275, %v6443
        %6445 = vmatmul.bf16.gmra.mxu0 %v5966
        %v6446 = vpop.f32.mrf.mxu0
        %v6447 = vadd.f32 %v6278, %v6446
        %v6448 = vpop.f32.mrf.mxu0
        %v6449 = vadd.f32 %v6280, %v6448
        %6450 = vmatmul.bf16.gmra.mxu0 %v5969
        %v6451 = vpop.f32.mrf.mxu0
        %v6452 = vadd.f32 %v6283, %v6451
        %v6453 = vpop.f32.mrf.mxu0
        %v6454 = vadd.f32 %v6285, %v6453
        %6455 = vmatmul.bf16.gmra.mxu0 %v5972
        %v6456 = vpop.f32.mrf.mxu0
        %v6457 = vadd.f32 %v6288, %v6456
        %v6458 = vpop.f32.mrf.mxu0
        %v6459 = vadd.f32 %v6290, %v6458
        %6460 = vmatmul.bf16.gmra.mxu0 %v5975
        %v6461 = vpop.f32.mrf.mxu0
        %v6462 = vadd.f32 %v6293, %v6461
        %v6463 = vpop.f32.mrf.mxu0
        %v6464 = vadd.f32 %v6295, %v6463
        %6465 = vmatmul.bf16.gmra.mxu0 %v5978
        %v6466 = vpop.f32.mrf.mxu0
        %v6467 = vadd.f32 %v6298, %v6466
        %v6468 = vpop.f32.mrf.mxu0
        %v6469 = vadd.f32 %v6300, %v6468
        %6470 = vmatmul.bf16.gmra.mxu0 %v5981
        %v6471 = vpop.f32.mrf.mxu0
        %v6472 = vadd.f32 %v6303, %v6471
        %v6473 = vpop.f32.mrf.mxu0
        %v6474 = vadd.f32 %v6305, %v6473
        %6475 = vmatmul.bf16.gmra.mxu0 %v5984
        %v6476 = vpop.f32.mrf.mxu0
        %v6477 = vadd.f32 %v6308, %v6476
        %v6478 = vpop.f32.mrf.mxu0
        %v6479 = vadd.f32 %v6310, %v6478
        %6480 = vmatmul.bf16.gmra.mxu0 %v5987
        %v6481 = vpop.f32.mrf.mxu0
        %v6482 = vadd.f32 %v6313, %v6481
        %v6483 = vpop.f32.mrf.mxu0
        %v6484 = vadd.f32 %v6315, %v6483
        %6485 = vmatmul.bf16.gmra.mxu0 %v5990
        %v6486 = vpop.f32.mrf.mxu0
        %v6487 = vadd.f32 %v6318, %v6486
        %v6488 = vpop.f32.mrf.mxu0
        %v6489 = vadd.f32 %v6320, %v6488
        %6490 = vmatmul.bf16.gmra.mxu0 %v5993
        %v6491 = vpop.f32.mrf.mxu0
        %v6492 = vadd.f32 %v6323, %v6491
        %v6493 = vpop.f32.mrf.mxu0
        %v6494 = vadd.f32 %v6325, %v6493
        %6495 = vmatmul.bf16.gmra.mxu0 %v5996
        %v6496 = vpop.f32.mrf.mxu0
        %v6497 = vadd.f32 %v6328, %v6496
        %v6498 = vpop.f32.mrf.mxu0
        %v6499 = vadd.f32 %v6330, %v6498
        %6500 = vmatmul.bf16.gmra.mxu0 %v5999
        %v6501 = vpop.f32.mrf.mxu0
        %v6502 = vadd.f32 %v6333, %v6501
        %v6503 = vpop.f32.mrf.mxu0
        %v6504 = vadd.f32 %v6335, %v6503
        %6505 = vmatmul.bf16.gmra.mxu0 %v6002
        %v6506 = vpop.f32.mrf.mxu0
        %v6507 = vadd.f32 %v6338, %v6506
        %v6508 = vpop.f32.mrf.mxu0
        %v6509 = vadd.f32 %v6340, %v6508
        %6510 = vdwg.mxu0
        %v6511 = vmax.f32 %v6352, 0.0
        %v6512 = vmax.f32 %v6354, 0.0
        %v6513 = vmax.f32 %v6357, 0.0
        %v6514 = vmax.f32 %v6359, 0.0
        %v6515 = vmax.f32 %v6362, 0.0
        %v6516 = vmax.f32 %v6364, 0.0
        %v6517 = vmax.f32 %v6367, 0.0
        %v6518 = vmax.f32 %v6369, 0.0
        %v6519 = vmax.f32 %v6372, 0.0
        %v6520 = vmax.f32 %v6374, 0.0
        %v6521 = vmax.f32 %v6377, 0.0
        %v6522 = vmax.f32 %v6379, 0.0
        %v6523 = vmax.f32 %v6382, 0.0
        %v6524 = vmax.f32 %v6384, 0.0
        %v6525 = vmax.f32 %v6387, 0.0
        %v6526 = vmax.f32 %v6389, 0.0
        %v6527 = vmax.f32 %v6392, 0.0
        %v6528 = vmax.f32 %v6394, 0.0
        %v6529 = vmax.f32 %v6397, 0.0
        %v6530 = vmax.f32 %v6399, 0.0
        %v6531 = vmax.f32 %v6402, 0.0
        %v6532 = vmax.f32 %v6404, 0.0
        %v6533 = vmax.f32 %v6407, 0.0
        %v6534 = vmax.f32 %v6409, 0.0
        %v6535 = vmax.f32 %v6412, 0.0
        %v6536 = vmax.f32 %v6414, 0.0
        %v6537 = vmax.f32 %v6417, 0.0
        %v6538 = vmax.f32 %v6419, 0.0
        %v6539 = vmax.f32 %v6422, 0.0
        %v6540 = vmax.f32 %v6424, 0.0
        %v6541 = vmax.f32 %v6427, 0.0
        %v6542 = vmax.f32 %v6429, 0.0
        %v6543 = vmax.f32 %v6432, 0.0
        %v6544 = vmax.f32 %v6434, 0.0
        %v6545 = vmax.f32 %v6437, 0.0
        %v6546 = vmax.f32 %v6439, 0.0
        %v6547 = vmax.f32 %v6442, 0.0
        %v6548 = vmax.f32 %v6444, 0.0
        %v6549 = vmax.f32 %v6447, 0.0
        %v6550 = vmax.f32 %v6449, 0.0
        %v6551 = vmax.f32 %v6452, 0.0
        %v6552 = vmax.f32 %v6454, 0.0
        %v6553 = vmax.f32 %v6457, 0.0
        %v6554 = vmax.f32 %v6459, 0.0
        %v6555 = vmax.f32 %v6462, 0.0
        %v6556 = vmax.f32 %v6464, 0.0
        %v6557 = vmax.f32 %v6467, 0.0
        %v6558 = vmax.f32 %v6469, 0.0
        %v6559 = vmax.f32 %v6472, 0.0
        %v6560 = vmax.f32 %v6474, 0.0
        %v6561 = vmax.f32 %v6477, 0.0
        %v6562 = vmax.f32 %v6479, 0.0
        %v6563 = vmax.f32 %v6482, 0.0
        %v6564 = vmax.f32 %v6484, 0.0
        %v6565 = vmax.f32 %v6487, 0.0
        %v6566 = vmax.f32 %v6489, 0.0
        %v6567 = vmax.f32 %v6492, 0.0
        %v6568 = vmax.f32 %v6494, 0.0
        %v6569 = vmax.f32 %v6497, 0.0
        %v6570 = vmax.f32 %v6499, 0.0
        %v6571 = vmax.f32 %v6502, 0.0
        %v6572 = vmax.f32 %v6504, 0.0
        %v6573 = vmax.f32 %v6507, 0.0
        %v6574 = vmax.f32 %v6509, 0.0
        %v6575 = vpack.c.bf16 %v6512, %v6511
        %v6576 = vpack.c.bf16 %v6514, %v6513
        %v6577 = vpack.c.bf16 %v6516, %v6515
        %v6578 = vpack.c.bf16 %v6518, %v6517
        %v6579 = vpack.c.bf16 %v6520, %v6519
        %v6580 = vpack.c.bf16 %v6522, %v6521
        %v6581 = vpack.c.bf16 %v6524, %v6523
        %v6582 = vpack.c.bf16 %v6526, %v6525
        %v6583 = vpack.c.bf16 %v6528, %v6527
        %v6584 = vpack.c.bf16 %v6530, %v6529
        %v6585 = vpack.c.bf16 %v6532, %v6531
        %v6586 = vpack.c.bf16 %v6534, %v6533
        %v6587 = vpack.c.bf16 %v6536, %v6535
        %v6588 = vpack.c.bf16 %v6538, %v6537
        %v6589 = vpack.c.bf16 %v6540, %v6539
        %v6590 = vpack.c.bf16 %v6542, %v6541
        %v6591 = vpack.c.bf16 %v6544, %v6543
        %v6592 = vpack.c.bf16 %v6546, %v6545
        %v6593 = vpack.c.bf16 %v6548, %v6547
        %v6594 = vpack.c.bf16 %v6550, %v6549
        %v6595 = vpack.c.bf16 %v6552, %v6551
        %v6596 = vpack.c.bf16 %v6554, %v6553
        %v6597 = vpack.c.bf16 %v6556, %v6555
        %v6598 = vpack.c.bf16 %v6558, %v6557
        %v6599 = vpack.c.bf16 %v6560, %v6559
        %v6600 = vpack.c.bf16 %v6562, %v6561
        %v6601 = vpack.c.bf16 %v6564, %v6563
        %v6602 = vpack.c.bf16 %v6566, %v6565
        %v6603 = vpack.c.bf16 %v6568, %v6567
        %v6604 = vpack.c.bf16 %v6570, %v6569
        %v6605 = vpack.c.bf16 %v6572, %v6571
        %v6606 = vpack.c.bf16 %v6574, %v6573
        %v6607 = vld [vmem:[%s5] sm:$0xf]
        %v6608 = vld [vmem:[%s5 + $0x4] sm:$0xf]
        %v6609 = vld [vmem:[%s5 + $0x8] sm:$0xf]
        %v6610 = vld [vmem:[%s5 + $0xc] sm:$0xf]
        %v6611 = vld [vmem:[%s6] sm:$0x1]
        %v6613 = vperm.slane %v6611, 0
        %v6619 = vunpack.c.l.b16 %v6607
        %v6620 = vunpack.c.l.b16 %v6608
        %v6621 = vunpack.c.l.b16 %v6609
        %v6622 = vunpack.c.l.b16 %v6610
        %v6623 = vpack.c.b16 %v6620, %v6619
        %v6624 = vpack.c.b16 %v6622, %v6621
        %v6628 = vsel %vm5277, %v6575, 0
        %v6631 = vsel %vm5277, %v6576, 0
        %v6634 = vsel %vm5277, %v6577, 0
        %v6637 = vsel %vm5277, %v6578, 0
        %v6640 = vsel %vm5277, %v6579, 0
        %v6643 = vsel %vm5277, %v6580, 0
        %v6646 = vsel %vm5277, %v6581, 0
        %v6649 = vsel %vm5277, %v6582, 0
        %v6652 = vsel %vm5277, %v6583, 0
        %v6655 = vsel %vm5277, %v6584, 0
        %v6658 = vsel %vm5277, %v6585, 0
        %v6661 = vsel %vm5277, %v6586, 0
        %v6664 = vsel %vm5277, %v6587, 0
        %v6667 = vsel %vm5277, %v6588, 0
        %v6670 = vsel %vm5277, %v6589, 0
        %v6673 = vsel %vm5277, %v6590, 0
        %v6676 = vsel %vm5277, %v6591, 0
        %v6679 = vsel %vm5277, %v6592, 0
        %v6682 = vsel %vm5277, %v6593, 0
        %v6685 = vsel %vm5277, %v6594, 0
        %v6688 = vsel %vm5277, %v6595, 0
        %v6691 = vsel %vm5277, %v6596, 0
        %v6694 = vsel %vm5277, %v6597, 0
        %v6697 = vsel %vm5277, %v6598, 0
        %v6700 = vsel %vm5277, %v6599, 0
        %v6703 = vsel %vm5277, %v6600, 0
        %v6706 = vsel %vm5277, %v6601, 0
        %v6709 = vsel %vm5277, %v6602, 0
        %v6712 = vsel %vm5277, %v6603, 0
        %v6715 = vsel %vm5277, %v6604, 0
        %v6718 = vsel %vm5277, %v6605, 0
        %v6721 = vsel %vm5277, %v6606, 0
        %6723 = vmatpush.bf16.msra.mxu0 0
        %6724 = vmatpush.bf16.msra.mxu0 0
        %6725 = vmatpush.bf16.msra.mxu0 0
        %6726 = vmatpush.bf16.msra.mxu0 0
        %6727 = vmatpush.bf16.msra.mxu0 0
        %6728 = vmatpush.bf16.msra.mxu0 0
        %6729 = vmatpush.bf16.msra.mxu0 %v6624
        %6730 = vmatpush.bf16.msra.mxu0 %v6623
        %6731 = vmatmul.bf16.gmra.mxu0 %v6628
        %v6732 = vpop.f32.mrf.mxu0
        %v6733 = vadd.f32 %v6613, %v6732
        %v6734 = vpop.f32.mrf.mxu0
        %v6735 = vadd.f32 %v6613, %v6734
        %6736 = vmatmul.bf16.gmra.mxu0 %v6631
        %v6737 = vpop.f32.mrf.mxu0
        %v6738 = vadd.f32 %v6613, %v6737
        %v6739 = vpop.f32.mrf.mxu0
        %v6740 = vadd.f32 %v6613, %v6739
        %6741 = vmatmul.bf16.gmra.mxu0 %v6634
        %v6742 = vpop.f32.mrf.mxu0
        %v6743 = vadd.f32 %v6613, %v6742
        %v6744 = vpop.f32.mrf.mxu0
        %v6745 = vadd.f32 %v6613, %v6744
        %6746 = vmatmul.bf16.gmra.mxu0 %v6637
        %v6747 = vpop.f32.mrf.mxu0
        %v6748 = vadd.f32 %v6613, %v6747
        %v6749 = vpop.f32.mrf.mxu0
        %v6750 = vadd.f32 %v6613, %v6749
        %6751 = vmatmul.bf16.gmra.mxu0 %v6640
        %v6752 = vpop.f32.mrf.mxu0
        %v6753 = vadd.f32 %v6613, %v6752
        %v6754 = vpop.f32.mrf.mxu0
        %v6755 = vadd.f32 %v6613, %v6754
        %6756 = vmatmul.bf16.gmra.mxu0 %v6643
        %v6757 = vpop.f32.mrf.mxu0
        %v6758 = vadd.f32 %v6613, %v6757
        %v6759 = vpop.f32.mrf.mxu0
        %v6760 = vadd.f32 %v6613, %v6759
        %6761 = vmatmul.bf16.gmra.mxu0 %v6646
        %v6762 = vpop.f32.mrf.mxu0
        %v6763 = vadd.f32 %v6613, %v6762
        %v6764 = vpop.f32.mrf.mxu0
        %v6765 = vadd.f32 %v6613, %v6764
        %6766 = vmatmul.bf16.gmra.mxu0 %v6649
        %v6767 = vpop.f32.mrf.mxu0
        %v6768 = vadd.f32 %v6613, %v6767
        %v6769 = vpop.f32.mrf.mxu0
        %v6770 = vadd.f32 %v6613, %v6769
        %6771 = vmatmul.bf16.gmra.mxu0 %v6652
        %v6772 = vpop.f32.mrf.mxu0
        %v6773 = vadd.f32 %v6613, %v6772
        %v6774 = vpop.f32.mrf.mxu0
        %v6775 = vadd.f32 %v6613, %v6774
        %6776 = vmatmul.bf16.gmra.mxu0 %v6655
        %v6777 = vpop.f32.mrf.mxu0
        %v6778 = vadd.f32 %v6613, %v6777
        %v6779 = vpop.f32.mrf.mxu0
        %v6780 = vadd.f32 %v6613, %v6779
        %6781 = vmatmul.bf16.gmra.mxu0 %v6658
        %v6782 = vpop.f32.mrf.mxu0
        %v6783 = vadd.f32 %v6613, %v6782
        %v6784 = vpop.f32.mrf.mxu0
        %v6785 = vadd.f32 %v6613, %v6784
        %6786 = vmatmul.bf16.gmra.mxu0 %v6661
        %v6787 = vpop.f32.mrf.mxu0
        %v6788 = vadd.f32 %v6613, %v6787
        %v6789 = vpop.f32.mrf.mxu0
        %v6790 = vadd.f32 %v6613, %v6789
        %6791 = vmatmul.bf16.gmra.mxu0 %v6664
        %v6792 = vpop.f32.mrf.mxu0
        %v6793 = vadd.f32 %v6613, %v6792
        %v6794 = vpop.f32.mrf.mxu0
        %v6795 = vadd.f32 %v6613, %v6794
        %6796 = vmatmul.bf16.gmra.mxu0 %v6667
        %v6797 = vpop.f32.mrf.mxu0
        %v6798 = vadd.f32 %v6613, %v6797
        %v6799 = vpop.f32.mrf.mxu0
        %v6800 = vadd.f32 %v6613, %v6799
        %6801 = vmatmul.bf16.gmra.mxu0 %v6670
        %v6802 = vpop.f32.mrf.mxu0
        %v6803 = vadd.f32 %v6613, %v6802
        %v6804 = vpop.f32.mrf.mxu0
        %v6805 = vadd.f32 %v6613, %v6804
        %6806 = vmatmul.bf16.gmra.mxu0 %v6673
        %v6807 = vpop.f32.mrf.mxu0
        %v6808 = vadd.f32 %v6613, %v6807
        %v6809 = vpop.f32.mrf.mxu0
        %v6810 = vadd.f32 %v6613, %v6809
        %6811 = vmatmul.bf16.gmra.mxu0 %v6676
        %v6812 = vpop.f32.mrf.mxu0
        %v6813 = vadd.f32 %v6613, %v6812
        %v6814 = vpop.f32.mrf.mxu0
        %v6815 = vadd.f32 %v6613, %v6814
        %6816 = vmatmul.bf16.gmra.mxu0 %v6679
        %v6817 = vpop.f32.mrf.mxu0
        %v6818 = vadd.f32 %v6613, %v6817
        %v6819 = vpop.f32.mrf.mxu0
        %v6820 = vadd.f32 %v6613, %v6819
        %6821 = vmatmul.bf16.gmra.mxu0 %v6682
        %v6822 = vpop.f32.mrf.mxu0
        %v6823 = vadd.f32 %v6613, %v6822
        %v6824 = vpop.f32.mrf.mxu0
        %v6825 = vadd.f32 %v6613, %v6824
        %6826 = vmatmul.bf16.gmra.mxu0 %v6685
        %v6827 = vpop.f32.mrf.mxu0
        %v6828 = vadd.f32 %v6613, %v6827
        %v6829 = vpop.f32.mrf.mxu0
        %v6830 = vadd.f32 %v6613, %v6829
        %6831 = vmatmul.bf16.gmra.mxu0 %v6688
        %v6832 = vpop.f32.mrf.mxu0
        %v6833 = vadd.f32 %v6613, %v6832
        %v6834 = vpop.f32.mrf.mxu0
        %v6835 = vadd.f32 %v6613, %v6834
        %6836 = vmatmul.bf16.gmra.mxu0 %v6691
        %v6837 = vpop.f32.mrf.mxu0
        %v6838 = vadd.f32 %v6613, %v6837
        %v6839 = vpop.f32.mrf.mxu0
        %v6840 = vadd.f32 %v6613, %v6839
        %6841 = vmatmul.bf16.gmra.mxu0 %v6694
        %v6842 = vpop.f32.mrf.mxu0
        %v6843 = vadd.f32 %v6613, %v6842
        %v6844 = vpop.f32.mrf.mxu0
        %v6845 = vadd.f32 %v6613, %v6844
        %6846 = vmatmul.bf16.gmra.mxu0 %v6697
        %v6847 = vpop.f32.mrf.mxu0
        %v6848 = vadd.f32 %v6613, %v6847
        %v6849 = vpop.f32.mrf.mxu0
        %v6850 = vadd.f32 %v6613, %v6849
        %6851 = vmatmul.bf16.gmra.mxu0 %v6700
        %v6852 = vpop.f32.mrf.mxu0
        %v6853 = vadd.f32 %v6613, %v6852
        %v6854 = vpop.f32.mrf.mxu0
        %v6855 = vadd.f32 %v6613, %v6854
        %6856 = vmatmul.bf16.gmra.mxu0 %v6703
        %v6857 = vpop.f32.mrf.mxu0
        %v6858 = vadd.f32 %v6613, %v6857
        %v6859 = vpop.f32.mrf.mxu0
        %v6860 = vadd.f32 %v6613, %v6859
        %6861 = vmatmul.bf16.gmra.mxu0 %v6706
        %v6862 = vpop.f32.mrf.mxu0
        %v6863 = vadd.f32 %v6613, %v6862
        %v6864 = vpop.f32.mrf.mxu0
        %v6865 = vadd.f32 %v6613, %v6864
        %6866 = vmatmul.bf16.gmra.mxu0 %v6709
        %v6867 = vpop.f32.mrf.mxu0
        %v6868 = vadd.f32 %v6613, %v6867
        %v6869 = vpop.f32.mrf.mxu0
        %v6870 = vadd.f32 %v6613, %v6869
        %6871 = vmatmul.bf16.gmra.mxu0 %v6712
        %v6872 = vpop.f32.mrf.mxu0
        %v6873 = vadd.f32 %v6613, %v6872
        %v6874 = vpop.f32.mrf.mxu0
        %v6875 = vadd.f32 %v6613, %v6874
        %6876 = vmatmul.bf16.gmra.mxu0 %v6715
        %v6877 = vpop.f32.mrf.mxu0
        %v6878 = vadd.f32 %v6613, %v6877
        %v6879 = vpop.f32.mrf.mxu0
        %v6880 = vadd.f32 %v6613, %v6879
        %6881 = vmatmul.bf16.gmra.mxu0 %v6718
        %v6882 = vpop.f32.mrf.mxu0
        %v6883 = vadd.f32 %v6613, %v6882
        %v6884 = vpop.f32.mrf.mxu0
        %v6885 = vadd.f32 %v6613, %v6884
        %6886 = vmatmul.bf16.gmra.mxu0 %v6721
        %v6887 = vpop.f32.mrf.mxu0
        %v6888 = vadd.f32 %v6613, %v6887
        %v6889 = vpop.f32.mrf.mxu0
        %v6890 = vadd.f32 %v6613, %v6889
        %6891 = vdwg.mxu0
        %v6892 = vunpack.c.l.bf16 %v284
        %v6893 = vunpack.c.l.bf16 %v285
        %v6894 = vunpack.c.l.bf16 %v286
        %v6895 = vunpack.c.l.bf16 %v287
        %v6896 = vunpack.c.l.bf16 %v288
        %v6897 = vunpack.c.l.bf16 %v289
        %v6898 = vunpack.c.l.bf16 %v290
        %v6899 = vunpack.c.l.bf16 %v291
        %v6900 = vunpack.c.l.bf16 %v292
        %v6901 = vunpack.c.l.bf16 %v293
        %v6902 = vunpack.c.l.bf16 %v294
        %v6903 = vunpack.c.l.bf16 %v295
        %v6904 = vunpack.c.l.bf16 %v296
        %v6905 = vunpack.c.l.bf16 %v297
        %v6906 = vunpack.c.l.bf16 %v298
        %v6907 = vunpack.c.l.bf16 %v299
        %v6908 = vunpack.c.l.bf16 %v300
        %v6909 = vunpack.c.l.bf16 %v301
        %v6910 = vunpack.c.l.bf16 %v302
        %v6911 = vunpack.c.l.bf16 %v303
        %v6912 = vunpack.c.l.bf16 %v304
        %v6913 = vunpack.c.l.bf16 %v305
        %v6914 = vunpack.c.l.bf16 %v306
        %v6915 = vunpack.c.l.bf16 %v307
        %v6916 = vunpack.c.l.bf16 %v308
        %v6917 = vunpack.c.l.bf16 %v309
        %v6918 = vunpack.c.l.bf16 %v310
        %v6919 = vunpack.c.l.bf16 %v311
        %v6920 = vunpack.c.l.bf16 %v312
        %v6921 = vunpack.c.l.bf16 %v313
        %v6922 = vunpack.c.l.bf16 %v314
        %v6923 = vunpack.c.l.bf16 %v315
        %v6924 = vunpack.c.l.bf16 %v316
        %v6925 = vunpack.c.l.bf16 %v317
        %v6926 = vunpack.c.l.bf16 %v318
        %v6927 = vunpack.c.l.bf16 %v319
        %v6928 = vunpack.c.l.bf16 %v320
        %v6929 = vunpack.c.l.bf16 %v321
        %v6930 = vunpack.c.l.bf16 %v322
        %v6931 = vunpack.c.l.bf16 %v323
        %v6932 = vunpack.c.l.bf16 %v324
        %v6933 = vunpack.c.l.bf16 %v325
        %v6934 = vunpack.c.l.bf16 %v326
        %v6935 = vunpack.c.l.bf16 %v327
        %v6936 = vunpack.c.l.bf16 %v328
        %v6937 = vunpack.c.l.bf16 %v329
        %v6938 = vunpack.c.l.bf16 %v330
        %v6939 = vunpack.c.l.bf16 %v331
        %v6940 = vunpack.c.l.bf16 %v332
        %v6941 = vunpack.c.l.bf16 %v333
        %v6942 = vunpack.c.l.bf16 %v334
        %v6943 = vunpack.c.l.bf16 %v335
        %v6944 = vunpack.c.l.bf16 %v336
        %v6945 = vunpack.c.l.bf16 %v337
        %v6946 = vunpack.c.l.bf16 %v338
        %v6947 = vunpack.c.l.bf16 %v339
        %v6948 = vunpack.c.l.bf16 %v340
        %v6949 = vunpack.c.l.bf16 %v341
        %v6950 = vunpack.c.l.bf16 %v342
        %v6951 = vunpack.c.l.bf16 %v343
        %v6952 = vunpack.c.l.bf16 %v344
        %v6953 = vunpack.c.l.bf16 %v345
        %v6954 = vunpack.c.l.bf16 %v346
        %v6955 = vunpack.c.l.bf16 %v347
        %v6956 = vadd.f32 %v6733, %v6892
        %v6957 = vadd.f32 %v6735, %v6893
        %v6958 = vadd.f32 %v6738, %v6894
        %v6959 = vadd.f32 %v6740, %v6895
        %v6960 = vadd.f32 %v6743, %v6896
        %v6961 = vadd.f32 %v6745, %v6897
        %v6962 = vadd.f32 %v6748, %v6898
        %v6963 = vadd.f32 %v6750, %v6899
        %v6964 = vadd.f32 %v6753, %v6900
        %v6965 = vadd.f32 %v6755, %v6901
        %v6966 = vadd.f32 %v6758, %v6902
        %v6967 = vadd.f32 %v6760, %v6903
        %v6968 = vadd.f32 %v6763, %v6904
        %v6969 = vadd.f32 %v6765, %v6905
        %v6970 = vadd.f32 %v6768, %v6906
        %v6971 = vadd.f32 %v6770, %v6907
        %v6972 = vadd.f32 %v6773, %v6908
        %v6973 = vadd.f32 %v6775, %v6909
        %v6974 = vadd.f32 %v6778, %v6910
        %v6975 = vadd.f32 %v6780, %v6911
        %v6976 = vadd.f32 %v6783, %v6912
        %v6977 = vadd.f32 %v6785, %v6913
        %v6978 = vadd.f32 %v6788, %v6914
        %v6979 = vadd.f32 %v6790, %v6915
        %v6980 = vadd.f32 %v6793, %v6916
        %v6981 = vadd.f32 %v6795, %v6917
        %v6982 = vadd.f32 %v6798, %v6918
        %v6983 = vadd.f32 %v6800, %v6919
        %v6984 = vadd.f32 %v6803, %v6920
        %v6985 = vadd.f32 %v6805, %v6921
        %v6986 = vadd.f32 %v6808, %v6922
        %v6987 = vadd.f32 %v6810, %v6923
        %v6988 = vadd.f32 %v6813, %v6924
        %v6989 = vadd.f32 %v6815, %v6925
        %v6990 = vadd.f32 %v6818, %v6926
        %v6991 = vadd.f32 %v6820, %v6927
        %v6992 = vadd.f32 %v6823, %v6928
        %v6993 = vadd.f32 %v6825, %v6929
        %v6994 = vadd.f32 %v6828, %v6930
        %v6995 = vadd.f32 %v6830, %v6931
        %v6996 = vadd.f32 %v6833, %v6932
        %v6997 = vadd.f32 %v6835, %v6933
        %v6998 = vadd.f32 %v6838, %v6934
        %v6999 = vadd.f32 %v6840, %v6935
        %v7000 = vadd.f32 %v6843, %v6936
        %v7001 = vadd.f32 %v6845, %v6937
        %v7002 = vadd.f32 %v6848, %v6938
        %v7003 = vadd.f32 %v6850, %v6939
        %v7004 = vadd.f32 %v6853, %v6940
        %v7005 = vadd.f32 %v6855, %v6941
        %v7006 = vadd.f32 %v6858, %v6942
        %v7007 = vadd.f32 %v6860, %v6943
        %v7008 = vadd.f32 %v6863, %v6944
        %v7009 = vadd.f32 %v6865, %v6945
        %v7010 = vadd.f32 %v6868, %v6946
        %v7011 = vadd.f32 %v6870, %v6947
        %v7012 = vadd.f32 %v6873, %v6948
        %v7013 = vadd.f32 %v6875, %v6949
        %v7014 = vadd.f32 %v6878, %v6950
        %v7015 = vadd.f32 %v6880, %v6951
        %v7016 = vadd.f32 %v6883, %v6952
        %v7017 = vadd.f32 %v6885, %v6953
        %v7018 = vadd.f32 %v6888, %v6954
        %v7019 = vadd.f32 %v6890, %v6955
        %v7020 = vmax.f32 %v6956, 0.0
        %v7021 = vmax.f32 %v6957, 0.0
        %v7022 = vmax.f32 %v6958, 0.0
        %v7023 = vmax.f32 %v6959, 0.0
        %v7024 = vmax.f32 %v6960, 0.0
        %v7025 = vmax.f32 %v6961, 0.0
        %v7026 = vmax.f32 %v6962, 0.0
        %v7027 = vmax.f32 %v6963, 0.0
        %v7028 = vmax.f32 %v6964, 0.0
        %v7029 = vmax.f32 %v6965, 0.0
        %v7030 = vmax.f32 %v6966, 0.0
        %v7031 = vmax.f32 %v6967, 0.0
        %v7032 = vmax.f32 %v6968, 0.0
        %v7033 = vmax.f32 %v6969, 0.0
        %v7034 = vmax.f32 %v6970, 0.0
        %v7035 = vmax.f32 %v6971, 0.0
        %v7036 = vmax.f32 %v6972, 0.0
        %v7037 = vmax.f32 %v6973, 0.0
        %v7038 = vmax.f32 %v6974, 0.0
        %v7039 = vmax.f32 %v6975, 0.0
        %v7040 = vmax.f32 %v6976, 0.0
        %v7041 = vmax.f32 %v6977, 0.0
        %v7042 = vmax.f32 %v6978, 0.0
        %v7043 = vmax.f32 %v6979, 0.0
        %v7044 = vmax.f32 %v6980, 0.0
        %v7045 = vmax.f32 %v6981, 0.0
        %v7046 = vmax.f32 %v6982, 0.0
        %v7047 = vmax.f32 %v6983, 0.0
        %v7048 = vmax.f32 %v6984, 0.0
        %v7049 = vmax.f32 %v6985, 0.0
        %v7050 = vmax.f32 %v6986, 0.0
        %v7051 = vmax.f32 %v6987, 0.0
        %v7052 = vmax.f32 %v6988, 0.0
        %v7053 = vmax.f32 %v6989, 0.0
        %v7054 = vmax.f32 %v6990, 0.0
        %v7055 = vmax.f32 %v6991, 0.0
        %v7056 = vmax.f32 %v6992, 0.0
        %v7057 = vmax.f32 %v6993, 0.0
        %v7058 = vmax.f32 %v6994, 0.0
        %v7059 = vmax.f32 %v6995, 0.0
        %v7060 = vmax.f32 %v6996, 0.0
        %v7061 = vmax.f32 %v6997, 0.0
        %v7062 = vmax.f32 %v6998, 0.0
        %v7063 = vmax.f32 %v6999, 0.0
        %v7064 = vmax.f32 %v7000, 0.0
        %v7065 = vmax.f32 %v7001, 0.0
        %v7066 = vmax.f32 %v7002, 0.0
        %v7067 = vmax.f32 %v7003, 0.0
        %v7068 = vmax.f32 %v7004, 0.0
        %v7069 = vmax.f32 %v7005, 0.0
        %v7070 = vmax.f32 %v7006, 0.0
        %v7071 = vmax.f32 %v7007, 0.0
        %v7072 = vmax.f32 %v7008, 0.0
        %v7073 = vmax.f32 %v7009, 0.0
        %v7074 = vmax.f32 %v7010, 0.0
        %v7075 = vmax.f32 %v7011, 0.0
        %v7076 = vmax.f32 %v7012, 0.0
        %v7077 = vmax.f32 %v7013, 0.0
        %v7078 = vmax.f32 %v7014, 0.0
        %v7079 = vmax.f32 %v7015, 0.0
        %v7080 = vmax.f32 %v7016, 0.0
        %v7081 = vmax.f32 %v7017, 0.0
        %v7082 = vmax.f32 %v7018, 0.0
        %v7083 = vmax.f32 %v7019, 0.0
        %v7084 = vpack.c.bf16 %v7020, %v7020
        %v7085 = vpack.c.bf16 %v7021, %v7021
        %v7086 = vpack.c.bf16 %v7022, %v7022
        %v7087 = vpack.c.bf16 %v7023, %v7023
        %v7088 = vpack.c.bf16 %v7024, %v7024
        %v7089 = vpack.c.bf16 %v7025, %v7025
        %v7090 = vpack.c.bf16 %v7026, %v7026
        %v7091 = vpack.c.bf16 %v7027, %v7027
        %v7092 = vpack.c.bf16 %v7028, %v7028
        %v7093 = vpack.c.bf16 %v7029, %v7029
        %v7094 = vpack.c.bf16 %v7030, %v7030
        %v7095 = vpack.c.bf16 %v7031, %v7031
        %v7096 = vpack.c.bf16 %v7032, %v7032
        %v7097 = vpack.c.bf16 %v7033, %v7033
        %v7098 = vpack.c.bf16 %v7034, %v7034
        %v7099 = vpack.c.bf16 %v7035, %v7035
        %v7100 = vpack.c.bf16 %v7036, %v7036
        %v7101 = vpack.c.bf16 %v7037, %v7037
        %v7102 = vpack.c.bf16 %v7038, %v7038
        %v7103 = vpack.c.bf16 %v7039, %v7039
        %v7104 = vpack.c.bf16 %v7040, %v7040
        %v7105 = vpack.c.bf16 %v7041, %v7041
        %v7106 = vpack.c.bf16 %v7042, %v7042
        %v7107 = vpack.c.bf16 %v7043, %v7043
        %v7108 = vpack.c.bf16 %v7044, %v7044
        %v7109 = vpack.c.bf16 %v7045, %v7045
        %v7110 = vpack.c.bf16 %v7046, %v7046
        %v7111 = vpack.c.bf16 %v7047, %v7047
        %v7112 = vpack.c.bf16 %v7048, %v7048
        %v7113 = vpack.c.bf16 %v7049, %v7049
        %v7114 = vpack.c.bf16 %v7050, %v7050
        %v7115 = vpack.c.bf16 %v7051, %v7051
        %v7116 = vpack.c.bf16 %v7052, %v7052
        %v7117 = vpack.c.bf16 %v7053, %v7053
        %v7118 = vpack.c.bf16 %v7054, %v7054
        %v7119 = vpack.c.bf16 %v7055, %v7055
        %v7120 = vpack.c.bf16 %v7056, %v7056
        %v7121 = vpack.c.bf16 %v7057, %v7057
        %v7122 = vpack.c.bf16 %v7058, %v7058
        %v7123 = vpack.c.bf16 %v7059, %v7059
        %v7124 = vpack.c.bf16 %v7060, %v7060
        %v7125 = vpack.c.bf16 %v7061, %v7061
        %v7126 = vpack.c.bf16 %v7062, %v7062
        %v7127 = vpack.c.bf16 %v7063, %v7063
        %v7128 = vpack.c.bf16 %v7064, %v7064
        %v7129 = vpack.c.bf16 %v7065, %v7065
        %v7130 = vpack.c.bf16 %v7066, %v7066
        %v7131 = vpack.c.bf16 %v7067, %v7067
        %v7132 = vpack.c.bf16 %v7068, %v7068
        %v7133 = vpack.c.bf16 %v7069, %v7069
        %v7134 = vpack.c.bf16 %v7070, %v7070
        %v7135 = vpack.c.bf16 %v7071, %v7071
        %v7136 = vpack.c.bf16 %v7072, %v7072
        %v7137 = vpack.c.bf16 %v7073, %v7073
        %v7138 = vpack.c.bf16 %v7074, %v7074
        %v7139 = vpack.c.bf16 %v7075, %v7075
        %v7140 = vpack.c.bf16 %v7076, %v7076
        %v7141 = vpack.c.bf16 %v7077, %v7077
        %v7142 = vpack.c.bf16 %v7078, %v7078
        %v7143 = vpack.c.bf16 %v7079, %v7079
        %v7144 = vpack.c.bf16 %v7080, %v7080
        %v7145 = vpack.c.bf16 %v7081, %v7081
        %v7146 = vpack.c.bf16 %v7082, %v7082
        %v7147 = vpack.c.bf16 %v7083, %v7083
        %7148 = vst [vmem:[%s274] sm:$0xf] %v7084
        %7149 = vst [vmem:[%s274 + $0x4] sm:$0xf] %v7085
        %7150 = vst [vmem:[%s274 + $0x8] sm:$0xf] %v7086
        %7151 = vst [vmem:[%s274 + $0xc] sm:$0xf] %v7087
        %7152 = vst [vmem:[%s274 + $0x10] sm:$0xf] %v7088
        %7153 = vst [vmem:[%s274 + $0x14] sm:$0xf] %v7089
        %7154 = vst [vmem:[%s274 + $0x18] sm:$0xf] %v7090
        %7155 = vst [vmem:[%s274 + $0x1c] sm:$0xf] %v7091
        %7156 = vst [vmem:[%s274 + $0x20] sm:$0xf] %v7092
        %7157 = vst [vmem:[%s274 + $0x24] sm:$0xf] %v7093
        %7158 = vst [vmem:[%s274 + $0x28] sm:$0xf] %v7094
        %7159 = vst [vmem:[%s274 + $0x2c] sm:$0xf] %v7095
        %7160 = vst [vmem:[%s274 + $0x30] sm:$0xf] %v7096
        %7161 = vst [vmem:[%s274 + $0x34] sm:$0xf] %v7097
        %7162 = vst [vmem:[%s274 + $0x38] sm:$0xf] %v7098
        %7163 = vst [vmem:[%s274 + $0x3c] sm:$0xf] %v7099
        %7164 = vst [vmem:[%s274 + $0x40] sm:$0xf] %v7100
        %7165 = vst [vmem:[%s274 + $0x44] sm:$0xf] %v7101
        %7166 = vst [vmem:[%s274 + $0x48] sm:$0xf] %v7102
        %7167 = vst [vmem:[%s274 + $0x4c] sm:$0xf] %v7103
        %7168 = vst [vmem:[%s274 + $0x50] sm:$0xf] %v7104
        %7169 = vst [vmem:[%s274 + $0x54] sm:$0xf] %v7105
        %7170 = vst [vmem:[%s274 + $0x58] sm:$0xf] %v7106
        %7171 = vst [vmem:[%s274 + $0x5c] sm:$0xf] %v7107
        %7172 = vst [vmem:[%s274 + $0x60] sm:$0xf] %v7108
        %7173 = vst [vmem:[%s274 + $0x64] sm:$0xf] %v7109
        %7174 = vst [vmem:[%s274 + $0x68] sm:$0xf] %v7110
        %7175 = vst [vmem:[%s274 + $0x6c] sm:$0xf] %v7111
        %7176 = vst [vmem:[%s274 + $0x70] sm:$0xf] %v7112
        %7177 = vst [vmem:[%s274 + $0x74] sm:$0xf] %v7113
        %7178 = vst [vmem:[%s274 + $0x78] sm:$0xf] %v7114
        %7179 = vst [vmem:[%s274 + $0x7c] sm:$0xf] %v7115
        %7180 = vst [vmem:[%s274 + $0x80] sm:$0xf] %v7116
        %7181 = vst [vmem:[%s274 + $0x84] sm:$0xf] %v7117
        %7182 = vst [vmem:[%s274 + $0x88] sm:$0xf] %v7118
        %7183 = vst [vmem:[%s274 + $0x8c] sm:$0xf] %v7119
        %7184 = vst [vmem:[%s274 + $0x90] sm:$0xf] %v7120
        %7185 = vst [vmem:[%s274 + $0x94] sm:$0xf] %v7121
        %7186 = vst [vmem:[%s274 + $0x98] sm:$0xf] %v7122
        %7187 = vst [vmem:[%s274 + $0x9c] sm:$0xf] %v7123
        %7188 = vst [vmem:[%s274 + $0xa0] sm:$0xf] %v7124
        %7189 = vst [vmem:[%s274 + $0xa4] sm:$0xf] %v7125
        %7190 = vst [vmem:[%s274 + $0xa8] sm:$0xf] %v7126
        %7191 = vst [vmem:[%s274 + $0xac] sm:$0xf] %v7127
        %7192 = vst [vmem:[%s274 + $0xb0] sm:$0xf] %v7128
        %7193 = vst [vmem:[%s274 + $0xb4] sm:$0xf] %v7129
        %7194 = vst [vmem:[%s274 + $0xb8] sm:$0xf] %v7130
        %7195 = vst [vmem:[%s274 + $0xbc] sm:$0xf] %v7131
        %7196 = vst [vmem:[%s274 + $0xc0] sm:$0xf] %v7132
        %7197 = vst [vmem:[%s274 + $0xc4] sm:$0xf] %v7133
        %7198 = vst [vmem:[%s274 + $0xc8] sm:$0xf] %v7134
        %7199 = vst [vmem:[%s274 + $0xcc] sm:$0xf] %v7135
        %7200 = vst [vmem:[%s274 + $0xd0] sm:$0xf] %v7136
        %7201 = vst [vmem:[%s274 + $0xd4] sm:$0xf] %v7137
        %7202 = vst [vmem:[%s274 + $0xd8] sm:$0xf] %v7138
        %7203 = vst [vmem:[%s274 + $0xdc] sm:$0xf] %v7139
        %7204 = vst [vmem:[%s274 + $0xe0] sm:$0xf] %v7140
        %7205 = vst [vmem:[%s274 + $0xe4] sm:$0xf] %v7141
        %7206 = vst [vmem:[%s274 + $0xe8] sm:$0xf] %v7142
        %7207 = vst [vmem:[%s274 + $0xec] sm:$0xf] %v7143
        %7208 = vst [vmem:[%s274 + $0xf0] sm:$0xf] %v7144
        %7209 = vst [vmem:[%s274 + $0xf4] sm:$0xf] %v7145
        %7210 = vst [vmem:[%s274 + $0xf8] sm:$0xf] %v7146
        %7211 = vst [vmem:[%s274 + $0xfc] sm:$0xf] %v7147
        %s7212 = sand.u32 %s181, 1
        %s7213 = scalar_lea.sflag [#allocation4], %s7212
        %s7214 = sand.u32 %s181, 1
        %s7215 = smul.addr %s7214, 256
        %s7216 = scalar_lea.vmem [#allocation3], %s7215
        // Predicated region
        $region49: #{bottleneck_forward.1} parent=47 // pred_check
          %p7217 = pneg %p191
        $region50: #{bottleneck_forward.1} parent=47 // pred_check_branch
          %7219 = sbr.rel (%p7217) target = $region52
        $region51: #{bottleneck_forward.1} parent=47 // pred_region
          %s7220 = smul.u32 2, %s21
          %7222 = vsyncadd %s7213, 0
          %s7223 = smul.addr %s7220, 32
          %s7224 = smul.addr %s7223, 4
          %s7225 = scalar_lea.hbm %s7, %s7224
          %s7226 = sshll.u32 %s7216, 4
          %s7227 = int_to_ptr.vmem [resolvable:$true] %s7226
          %s7228 = sshll.u32 %s7225, 4
          %s7229 = int_to_ptr.hbm [resolvable:$true] %s7228
          %7234 = dma.vmem_to_hbm [thread:$0]  %s7227, 4096, %s7229, %s7213, 64, 64, 4
        $region52: #{bottleneck_forward.1} parent=47 // pred_fallthru
          _
      $region48: #{bottleneck_forward.1} parent=5 // pred_fallthru
        _
      %p7235 = scmp.le.s32.totalorder 2, %s16
      // Predicated region
      $region53: #{bottleneck_forward.1} parent=5 // pred_check
        %p7236 = pneg %p7235
      $region54: #{bottleneck_forward.1} parent=5 // pred_check_branch
        %7238 = sbr.rel (%p7236) target = $region56
      $region55: #{bottleneck_forward.1} parent=5 // pred_region
        %s7239 = ssub.s32 %s16, 2
        // Predicated region
        $region57: #{bottleneck_forward.1} parent=55 // pred_check
          %p7240 = pneg %p197
        $region58: #{bottleneck_forward.1} parent=55 // pred_check_branch
          %7242 = sbr.rel (%p7240) target = $region60
        $region59: #{bottleneck_forward.1} parent=55 // pred_region
          %s7243 = sand.u32 %s182, 1
          %s7244 = scalar_lea.sflag [#allocation4], %s7243
          %s7245 = sand.u32 %s182, 1
          %s7246 = smul.addr %s7245, 256
          %s7247 = scalar_lea.vmem [#allocation3], %s7246
          %7249 = dma.done %s7244, 4096
        $region60: #{bottleneck_forward.1} parent=55 // pred_fallthru
          _
      $region56: #{bottleneck_forward.1} parent=5 // pred_fallthru
        _
    $region6: #{bottleneck_forward.1} parent=1 // loop_footer
      %s20 = sadd.s32 1, %s16
    $region7: #{bottleneck_forward.1} parent=1 // loop_footer_branch
      %15 = sbr.rel target = $region3
    $region8: #{bottleneck_forward.1} parent=1 // loop_exit
      _
    %7250 = vsyncpa [#allocation4], 1
    %s7251 = scalar_lea.sflag [#allocation4], 1
    %7252 = vsyncpa %s7251, 1

</llo_original>
